<compile_context>
chip_gen: v6e
topology: v6e:2x2x1
jax: 0.10.0
libtpu: 0.0.40
codegen_flags: <defaults>
</compile_context>

<pallas_src>
import functools

import jax
import jax.numpy as jnp
from jax.experimental import pallas as pl
from jax.experimental.pallas import tpu as pltpu


def _round_up(x, m):
    return ((x + m - 1) // m) * m


def _pick_seq_tile(n, cap):
    """Largest tile <= cap that evenly divides n and is a multiple of 8 (f32
    sublane); falls back to the full extent (always a legal block)."""
    if n <= cap:
        return n
    t = (cap // 8) * 8
    while t >= 8:
        if n % t == 0:
            return t
        t -= 8
    return n


@functools.lru_cache(maxsize=None)
def _hw_caps():
    """Generation-aware tile / VMEM knobs (v5e/v6e: 128 MiB VMEM, v7x: 64 MiB)."""
    vmem = 64 * 1024 * 1024  # conservative default if the query fails
    try:
        info = pltpu.get_tpu_info()
        cap = getattr(info, "vmem_capacity_bytes", None)
        if cap:
            vmem = int(cap)
    except Exception:
        pass
    if vmem >= 100 * 1024 * 1024:        # v5e / v6e (128 MiB physical)
        return dict(token_tile=512, seq_tile=512, vmem_budget=96 * 1024 * 1024)
    return dict(token_tile=256, seq_tile=256, vmem_budget=48 * 1024 * 1024)


# ----------------------------------------------------------------------------
# Projections: (bs, R, D) @ (D, n_groups*H*dh) -> n_groups head-major outputs
# of shape (bs, H, R, dh).  The head split is done in VMEM, so downstream
# kernels can select (batch, head) on leading dims with no XLA transpose.
# ----------------------------------------------------------------------------
def _proj_heads_kernel(x_ref, w_ref, *o_refs, n_heads, d_head):
    y = jnp.dot(x_ref[...], w_ref[...], preferred_element_type=jnp.float32)
    for g, o_ref in enumerate(o_refs):
        base = g * n_heads * d_head
        for h in range(n_heads):
            c0 = base + h * d_head
            o_ref[h] = y[:, c0:c0 + d_head].astype(o_ref.dtype)


def project_heads(x, w, n_groups, n_heads, d_head, *, caps):
    bs, R, D = x.shape
    assert w.shape == (D, n_groups * n_heads * d_head)
    tile_r = _pick_seq_tile(R, caps["seq_tile"])
    out_shape = tuple(
        jax.ShapeDtypeStruct((bs, n_heads, R, d_head), x.dtype)
        for _ in range(n_groups))
    out_specs = tuple(
        pl.BlockSpec((None, n_heads, tile_r, d_head), lambda b, t: (b, 0, t, 0))
        for _ in range(n_groups))
    return pl.pallas_call(
        functools.partial(_proj_heads_kernel, n_heads=n_heads, d_head=d_head),
        out_shape=out_shape,
        grid_spec=pltpu.PrefetchScalarGridSpec(
            num_scalar_prefetch=0,
            grid=(bs, R // tile_r),
            in_specs=[
                pl.BlockSpec((None, tile_r, D), lambda b, t: (b, t, 0)),
                # Grid-invariant weight (copy elided on repeat indices).
                # TODO(synk): pipeline_mode=pl.Buffered(1) to halve its VMEM.
                pl.BlockSpec((D, w.shape[1]), lambda b, t: (0, 0)),
            ],
            out_specs=out_specs),
        compiler_params=pltpu.CompilerParams(
            dimension_semantics=("parallel", "parallel"),
            vmem_limit_bytes=caps["vmem_budget"]),
    )(x, w)


# ----------------------------------------------------------------------------
# Fused relative attention: content + position scores, in-VMEM relative shift,
# mask, softmax, attn @ V.  One grid step per (batch, head).
# ----------------------------------------------------------------------------
def _rel_attn_kernel(mask_ref, q_ref, k_ref, v_ref, p_ref, u_ref, vb_ref, o_ref,
                     *, scale):
    q = q_ref[...]                                   # (S, dh)
    u = u_ref[...]                                   # (1, dh)
    vb = vb_ref[...]                                 # (1, dh)
    dn = (((1,), (1,)), ((), ()))                    # contract dh of both operands
    content = jax.lax.dot_general(q + u, k_ref[...], dn,
                                  preferred_element_type=jnp.float32)   # (S, T)
    pos = jax.lax.dot_general(q + vb, p_ref[...], dn,
                              preferred_element_type=jnp.float32)       # (S, T)

    s, t = content.shape
    # Transformer-XL relative shift, entirely in VMEM: row i is left-rotated by
    # (S - 1 - i), built as a log2(S)-stage barrel rotation from static lane
    # slices + selects (no gather, no HBM round trip).
    # NOTE: lanes that wrap (key index j > mem_len + i) differ from the exact
    # reference rel-shift garbage; Transformer-XL always masks those positions.
    row = jax.lax.broadcasted_iota(jnp.int32, (s, 1), 0)
    shift = (s - 1) - row                            # (S, 1) int32
    for b in range(max(0, (s - 1).bit_length())):
        amt = 1 << b
        rot = jnp.concatenate([pos[:, amt:], pos[:, :amt]], axis=-1)
        pos = jnp.where(((shift >> b) & 1) > 0, rot, pos)

    logits = (content + pos) * scale
    # Finite mask value: fully-masked rows yield a uniform distribution, not NaN.
    logits = jnp.where(mask_ref[...] != 0, -1e30, logits)
    m = jnp.max(logits, axis=-1, keepdims=True)
    e = jnp.exp(logits - m)
    denom = jnp.sum(e, axis=-1, keepdims=True)
    attn = e * pl.reciprocal(denom, approx=True)     # EUP, off the VALU slots
    awv = jnp.dot(attn.astype(v_ref.dtype), v_ref[...],
                  preferred_element_type=jnp.float32)
    o_ref[...] = awv.astype(o_ref.dtype)


def rel_attention(q4, k4, v4, p4, u3, vb3, mask2, *, scale, caps):
    bs, H, S, dh = q4.shape
    T = k4.shape[2]
    return pl.pallas_call(
        functools.partial(_rel_attn_kernel, scale=scale),
        out_shape=jax.ShapeDtypeStruct((bs, H, S, dh), q4.dtype),
        grid_spec=pltpu.PrefetchScalarGridSpec(
            num_scalar_prefetch=0,
            grid=(bs, H),
            in_specs=[
                pl.BlockSpec((S, T), lambda b, h: (0, 0)),                     # int8 mask
                pl.BlockSpec((None, None, S, dh), lambda b, h: (b, h, 0, 0)),  # q
                pl.BlockSpec((None, None, T, dh), lambda b, h: (b, h, 0, 0)),  # k
                pl.BlockSpec((None, None, T, dh), lambda b, h: (b, h, 0, 0)),  # v
                pl.BlockSpec((None, None, T, dh), lambda b, h: (0, h, 0, 0)),  # pos proj
                pl.BlockSpec((None, 1, dh), lambda b, h: (h, 0, 0)),           # u bias
                pl.BlockSpec((None, 1, dh), lambda b, h: (h, 0, 0)),           # v bias
            ],
            out_specs=pl.BlockSpec((None, None, S, dh), lambda b, h: (b, h, 0, 0))),
        compiler_params=pltpu.CompilerParams(
            dimension_semantics=("parallel", "parallel"),
            vmem_limit_bytes=caps["vmem_budget"]),
    )(mask2, q4, k4, v4, p4, u3, vb3)


# ----------------------------------------------------------------------------
# Shared masked LayerNorm (statistics over the true feature width only;
# padded lanes must be exactly zero, which the wrappers guarantee).
# ----------------------------------------------------------------------------
def _masked_layer_norm(z, gamma, beta, d_true, eps=1e-5):
    dp = z.shape[-1]
    inv_d = 1.0 / d_true
    mean = jnp.sum(z, axis=-1, keepdims=True) * inv_d
    zm = z - mean
    if dp != d_true:
        lane = jax.lax.broadcasted_iota(jnp.int32, (1, dp), 1)
        zm = jnp.where(lane < d_true, zm, 0.0)
    var = jnp.sum(zm * zm, axis=-1, keepdims=True) * inv_d
    zn = zm * jax.lax.rsqrt(var + eps)
    return zn * gamma.astype(jnp.float32) + beta.astype(jnp.float32)


# ----------------------------------------------------------------------------
# Output projection (single fat matmul, K = H*dh) + residual + LayerNorm.
# ----------------------------------------------------------------------------
def _outproj_ln_kernel(awv_ref, w_ref, res_ref, g_ref, b_ref, o_ref, *, d_true):
    n_heads = awv_ref.shape[0]
    # Concatenate heads in VMEM so the projection is one matmul with K=H*dh.
    xcat = jnp.concatenate([awv_ref[h] for h in range(n_heads)], axis=-1)
    y = jnp.dot(xcat, w_ref[...], preferred_element_type=jnp.float32)
    z = res_ref[...].astype(jnp.float32) + y
    o_ref[...] = _masked_layer_norm(z, g_ref[...], b_ref[...], d_true).astype(o_ref.dtype)


def outproj_layernorm(awv, w_out, resid, gamma, beta, *, d_true, caps):
    bs, H, S, dh = awv.shape
    Dp = resid.shape[-1]
    tile_s = _pick_seq_tile(S, caps["seq_tile"])
    return pl.pallas_call(
        functools.partial(_outproj_ln_kernel, d_true=d_true),
        out_shape=jax.ShapeDtypeStruct((bs, S, Dp), resid.dtype),
        grid_spec=pltpu.PrefetchScalarGridSpec(
            num_scalar_prefetch=0,
            grid=(bs, S // tile_s),
            in_specs=[
                pl.BlockSpec((None, H, tile_s, dh), lambda b, t: (b, 0, t, 0)),
                pl.BlockSpec((H * dh, Dp), lambda b, t: (0, 0)),   # out-proj W
                pl.BlockSpec((None, tile_s, Dp), lambda b, t: (b, t, 0)),
                pl.BlockSpec((1, Dp), lambda b, t: (0, 0)),
                pl.BlockSpec((1, Dp), lambda b, t: (0, 0)),
            ],
            out_specs=pl.BlockSpec((None, tile_s, Dp), lambda b, t: (b, t, 0))),
        compiler_params=pltpu.CompilerParams(
            dimension_semantics=("parallel", "parallel"),
            vmem_limit_bytes=caps["vmem_budget"]),
    )(awv, w_out, resid, gamma, beta)


# ----------------------------------------------------------------------------
# PositionwiseFF: relu(x@W1+b1)@W2+b2, residual, LayerNorm.  Token-tiled with
# lane-padded feature dims; native-dtype operands go straight to the MXU.
# ----------------------------------------------------------------------------
def _ff_kernel(x_ref, w1_ref, b1_ref, w2_ref, b2_ref, g_ref, bta_ref, o_ref, *,
               d_true):
    x = x_ref[...]
    h = jnp.dot(x, w1_ref[...], preferred_element_type=jnp.float32) + b1_ref[...]
    h = jnp.maximum(h, 0.0)
    y = jnp.dot(h, w2_ref[...], preferred_element_type=jnp.float32) + b2_ref[...]
    z = x.astype(jnp.float32) + y
    o_ref[...] = _masked_layer_norm(z, g_ref[...], bta_ref[...], d_true).astype(o_ref.dtype)


def positionwise_ff(x_bp, w1p, b1p, w2p, b2p, gamma, beta, *, d_true, caps):
    bs, S, Dp = x_bp.shape
    Fp = w1p.shape[1]
    x2 = x_bp.reshape(bs * S, Dp)
    n = x2.shape[0]
    sub = {4: 8, 2: 16, 1: 32}[x2.dtype.itemsize]
    tile = max(sub, min(caps["token_tile"], _round_up(n, sub)))
    n_pad = _round_up(n, tile)
    if n_pad != n:
        x2 = jnp.pad(x2, ((0, n_pad - n), (0, 0)))
    itm = x2.dtype.itemsize
    cost = pl.CostEstimate(
        flops=4 * n_pad * Dp * Fp,
        transcendentals=0,
        bytes_accessed=(2 * n_pad * Dp + 2 * Dp * Fp + Fp + 3 * Dp) * itm)
    out = pl.pallas_call(
        functools.partial(_ff_kernel, d_true=d_true),
        out_shape=jax.ShapeDtypeStruct((n_pad, Dp), x_bp.dtype),
        grid_spec=pltpu.PrefetchScalarGridSpec(
            num_scalar_prefetch=0,
            grid=(n_pad // tile,),
            in_specs=[
                pl.BlockSpec((tile, Dp), lambda i: (i, 0)),
                # Grid-invariant weights/biases (copy elided on repeat indices).
                # TODO(synk): pipeline_mode=pl.Buffered(1) + K-tiling of Fp for
                # production-size weights on v7x's 64 MiB VMEM.
                pl.BlockSpec((Dp, Fp), lambda i: (0, 0)),
                pl.BlockSpec((1, Fp), lambda i: (0, 0)),
                pl.BlockSpec((Fp, Dp), lambda i: (0, 0)),
                pl.BlockSpec((1, Dp), lambda i: (0, 0)),
                pl.BlockSpec((1, Dp), lambda i: (0, 0)),
                pl.BlockSpec((1, Dp), lambda i: (0, 0)),
            ],
            out_specs=pl.BlockSpec((tile, Dp), lambda i: (i, 0))),
        compiler_params=pltpu.CompilerParams(
            dimension_semantics=("parallel",),
            vmem_limit_bytes=caps["vmem_budget"]),
        cost_estimate=cost,
    )(x2, w1p, b1p, w2p, b2p, gamma, beta)
    return out[:n].reshape(bs, S, Dp)


# ----------------------------------------------------------------------------
# DecoderBlock forward = MultiHeadAttention (rel. pos.) + PositionwiseFF.
# ----------------------------------------------------------------------------
@jax.jit
def decoder_block(input_, pos_embs, mems, mask, params):
    S, bs, D = input_.shape
    M = mems.shape[0]
    T = M + S
    H, dh = params["u"].shape
    F = params["w1"].shape[1]
    scale = 1.0 / (dh ** 0.5)
    dtype = input_.dtype
    caps = _hw_caps()

    # Batch-major activations (the only HBM transposes left in the block).
    x_b = jnp.transpose(input_, (1, 0, 2))                            # (bs, S, D)
    xm_b = jnp.concatenate([jnp.transpose(mems, (1, 0, 2)), x_b], axis=1)  # (bs, T, D)

    # Projections: fused K/V, separate Q and positional P.  All outputs are
    # head-major (bs, H, seq, dh) straight from the kernels.
    k4, v4 = project_heads(xm_b, params["w_kv"], 2, H, dh, caps=caps)
    (q4,) = project_heads(x_b, params["w_q"], 1, H, dh, caps=caps)
    (p4,) = project_heads(pos_embs.reshape(1, T, D), params["w_p"], 1, H, dh,
                          caps=caps)

    # Mask as int8 (S, T), unreplicated over batch and heads.
    if mask is None:
        mask2 = jnp.zeros((S, T), jnp.int8)
    else:
        m = mask
        if m.ndim == 3:
            # TODO(synk): per-batch masks would need a (bs, S, T) mask input.
            m = m[:, :, 0]
        mask2 = m.astype(jnp.int8)

    # Fused relative attention (scores + rel-shift + mask + softmax + attn@V).
    awv = rel_attention(q4, k4, v4, p4,
                        params["u"].reshape(H, 1, dh),
                        params["v"].reshape(H, 1, dh),
                        mask2, scale=scale, caps=caps)                # (bs, H, S, dh)

    # Lane-dense feature padding for the out-proj / FF path.
    Dp = _round_up(D, 128)
    Fp = _round_up(F, 128)
    pad_d, pad_f = Dp - D, Fp - F
    x_bp = jnp.pad(x_b, ((0, 0), (0, 0), (0, pad_d)))
    woutp = jnp.pad(params["w_out"], ((0, 0), (0, pad_d)))
    g1 = jnp.pad(params["ln1_g"], (0, pad_d)).reshape(1, Dp)
    bt1 = jnp.pad(params["ln1_b"], (0, pad_d)).reshape(1, Dp)

    # Out-projection (single matmul with K = H*dh) + residual + LayerNorm.
    mha_bp = outproj_layernorm(awv, woutp, x_bp, g1, bt1, d_true=D, caps=caps)

    # Position-wise FF + residual + LayerNorm.
    w1p = jnp.pad(params["w1"], ((0, pad_d), (0, pad_f)))
    b1p = jnp.pad(params["b1"], (0, pad_f)).reshape(1, Fp)
    w2p = jnp.pad(params["w2"], ((0, pad_f), (0, pad_d)))
    b2p = jnp.pad(params["b2"], (0, pad_d)).reshape(1, Dp)
    g2 = jnp.pad(params["ln2_g"], (0, pad_d)).reshape(1, Dp)
    bt2 = jnp.pad(params["ln2_b"], (0, pad_d)).reshape(1, Dp)
    out_bp = positionwise_ff(mha_bp, w1p, b1p, w2p, b2p, g2, bt2,
                             d_true=D, caps=caps)                     # (bs, S, Dp)

    return jnp.transpose(out_bp[:, :, :D], (1, 0, 2)).astype(dtype)   # (S, bs, D)


# ----------------------------------------------------------------------------
# Pure-JAX reference (mirrors the PyTorch module, eval mode).
# ----------------------------------------------------------------------------
def _layer_norm_ref(x, gamma, beta, eps=1e-5):
    mean = jnp.mean(x, axis=-1, keepdims=True)
    var = jnp.mean((x - mean) ** 2, axis=-1, keepdims=True)
    return (x - mean) * jax.lax.rsqrt(var + eps) * gamma + beta


def _reference(input_, pos_embs, mems, mask, params):
    S, bs, _ = input_.shape
    H, dh = params["u"].shape
    T = mems.shape[0] + S
    x_mem = jnp.concatenate([mems, input_], axis=0)
    k, v = jnp.split(x_mem @ params["w_kv"], 2, axis=-1)
    q = input_ @ params["w_q"]
    qh = q.reshape(S, bs, H, dh)
    kh = k.reshape(T, bs, H, dh)
    vh = v.reshape(T, bs, H, dh)
    content = jnp.einsum("ibhd,jbhd->ijbh", qh + params["u"], kh)
    ph = (pos_embs @ params["w_p"]).reshape(T, H, dh)
    position = jnp.einsum("ibhd,jhd->ijbh", qh + params["v"], ph)
    zero_pad = jnp.zeros((S, 1, bs, H), position.dtype)
    position = jnp.concatenate([zero_pad, position], axis=1)
    position = position.reshape(T + 1, S, bs, H)[1:].reshape(S, T, bs, H)
    attn = content + position
    if mask is not None:
        attn = jnp.where(mask[..., None], -jnp.inf, attn)
    attn = jax.nn.softmax(attn * (1.0 / dh ** 0.5), axis=1)
    awv = jnp.einsum("ijbh,jbhd->ibhd", attn, vh).reshape(S, bs, H * dh)
    mha = _layer_norm_ref(input_ + awv @ params["w_out"],
                          params["ln1_g"], params["ln1_b"])
    ff = jnp.maximum(mha @ params["w1"] + params["b1"], 0.0) @ params["w2"] + params["b2"]
    out = _layer_norm_ref(mha + ff, params["ln2_g"], params["ln2_b"])
    return out.astype(input_.dtype)


if __name__ == "__main__":
    # Small shapes consistent with a Transformer-XL decoder block.
    S, bs, D = 8, 2, 32          # seq, batch, d_input
    H, dh = 4, 16                # n_heads, d_head_inner
    F = 64                       # d_ff_inner
    M = 8                        # memory length
    T = M + S

    key = jax.random.PRNGKey(0)
    ks = jax.random.split(key, 16)

    def uinit(k, shape, fan_in):
        b = 1.0 / (fan_in ** 0.5)
        return jax.random.uniform(k, shape, jnp.float32, -b, b)

    params = dict(
        w_kv=uinit(ks[0], (D, 2 * H * dh), D),
        w_q=uinit(ks[1], (D, H * dh), D),
        w_p=uinit(ks[2], (D, H * dh), D),
        w_out=uinit(ks[3], (H * dh, D), H * dh),
        u=0.1 * jax.random.normal(ks[4], (H, dh), jnp.float32),
        v=0.1 * jax.random.normal(ks[5], (H, dh), jnp.float32),
        ln1_g=1.0 + 0.1 * jax.random.normal(ks[6], (D,), jnp.float32),
        ln1_b=0.1 * jax.random.normal(ks[7], (D,), jnp.float32),
        w1=uinit(ks[8], (D, F), D),
        b1=uinit(ks[9], (F,), D),
        w2=uinit(ks[10], (F, D), F),
        b2=uinit(ks[11], (D,), F),
        ln2_g=1.0 + 0.1 * jax.random.normal(ks[12], (D,), jnp.float32),
        ln2_b=0.1 * jax.random.normal(ks[13], (D,), jnp.float32),
    )

    input_ = jax.random.normal(ks[14], (S, bs, D), jnp.float32)
    mems = jax.random.normal(ks[15], (M, bs, D), jnp.float32)
    pos_embs = jax.random.normal(jax.random.PRNGKey(1), (T, 1, D), jnp.float32)
    # Causal mask w.r.t. absolute positions (query i attends to keys <= M + i).
    mask = jnp.broadcast_to(
        (jnp.arange(T)[None, :] > (jnp.arange(S)[:, None] + M))[:, :, None],
        (S, T, bs))

    out = decoder_block(input_, pos_embs, mems, mask, params)
    out = jax.block_until_ready(out)

    ref = _reference(input_, pos_embs, mems, mask, params)
    assert out.shape == input_.shape and out.dtype == input_.dtype
    assert bool(jnp.allclose(out, ref, atol=2e-3, rtol=2e-3)), "mismatch vs reference"

    print("KERNEL_OK")
</pallas_src>

<mosaic_0001>
module attributes {stable_mosaic.version = 11 : i64} {
  func.func @_proj_heads_kernel(%arg0: i32, %arg1: i32, %arg2: memref<1x16x32xf32, #tpu.memory_space<vmem>>, %arg3: memref<32x64xf32, #tpu.memory_space<vmem>>, %arg4: memref<1x4x16x16xf32, #tpu.memory_space<vmem>>) attributes {dimension_semantics = [#tpu.dimension_semantics<parallel>, #tpu.dimension_semantics<parallel>], iteration_bounds = array<i64: 1, 1>, scalar_prefetch = 0 : i64, scratch_operands = 0 : i64, tpu.core_type = #tpu.core_type<tc>, window_params = [{transform_indices = @transform_0, window_bounds = array<i64: 1, 16, 32>}, {pipeline_mode = #tpu.pipeline_mode<synchronous>, transform_indices = @transform_1, window_bounds = array<i64: 32, 64>}, {transform_indices = @transform_2, window_bounds = array<i64: 1, 4, 16, 16>}]} {
    %c0 = arith.constant 0 : index
    %c0_0 = arith.constant 0 : index
    %c0_1 = arith.constant 0 : index
    %0 = vector.load %arg2[%c0, %c0_0, %c0_1] : memref<1x16x32xf32, #tpu.memory_space<vmem>>, vector<1x16x32xf32>
    %1 = vector.shape_cast %0 : vector<1x16x32xf32> to vector<16x32xf32>
    %c0_2 = arith.constant 0 : index
    %c0_3 = arith.constant 0 : index
    %2 = vector.load %arg3[%c0_2, %c0_3] : memref<32x64xf32, #tpu.memory_space<vmem>>, vector<32x64xf32>
    %cst = arith.constant dense<0.000000e+00> : vector<16x64xf32>
    %3 = tpu.matmul %1, %2, %cst {dimension_numbers = #tpu.dot_dimension_numbers<[1], [0], [0], [1], [0, 0, 1, 1], [], []>} : vector<16x32xf32>, vector<32x64xf32>, vector<16x64xf32> -> vector<16x64xf32>
    %4 = vector.extract_strided_slice %3 {offsets = [0, 0], sizes = [16, 16], strides = [1, 1]} : vector<16x64xf32> to vector<16x16xf32>
    %c0_4 = arith.constant 0 : index
    %c0_5 = arith.constant 0 : index
    %c0_6 = arith.constant 0 : index
    %c0_7 = arith.constant 0 : index
    %5 = vector.load %arg4[%c0_4, %c0_5, %c0_6, %c0_7] : memref<1x4x16x16xf32, #tpu.memory_space<vmem>>, vector<1x1x16x16xf32>
    %6 = vector.shape_cast %5 : vector<1x1x16x16xf32> to vector<16x16xf32>
    %7 = vector.shape_cast %4 : vector<16x16xf32> to vector<1x1x16x16xf32>
    tpu.vector_store %arg4[%c0_4, %c0_5, %c0_6, %c0_7], %7 {strides = array<i32>} : memref<1x4x16x16xf32, #tpu.memory_space<vmem>>, vector<1x1x16x16xf32>,
    %8 = vector.extract_strided_slice %3 {offsets = [0, 16], sizes = [16, 16], strides = [1, 1]} : vector<16x64xf32> to vector<16x16xf32>
    %c0_8 = arith.constant 0 : index
    %c1 = arith.constant 1 : index
    %c0_9 = arith.constant 0 : index
    %c0_10 = arith.constant 0 : index
    %9 = vector.load %arg4[%c0_8, %c1, %c0_9, %c0_10] : memref<1x4x16x16xf32, #tpu.memory_space<vmem>>, vector<1x1x16x16xf32>
    %10 = vector.shape_cast %9 : vector<1x1x16x16xf32> to vector<16x16xf32>
    %11 = vector.shape_cast %8 : vector<16x16xf32> to vector<1x1x16x16xf32>
    tpu.vector_store %arg4[%c0_8, %c1, %c0_9, %c0_10], %11 {strides = array<i32>} : memref<1x4x16x16xf32, #tpu.memory_space<vmem>>, vector<1x1x16x16xf32>,
    %12 = vector.extract_strided_slice %3 {offsets = [0, 32], sizes = [16, 16], strides = [1, 1]} : vector<16x64xf32> to vector<16x16xf32>
    %c0_11 = arith.constant 0 : index
    %c2 = arith.constant 2 : index
    %c0_12 = arith.constant 0 : index
    %c0_13 = arith.constant 0 : index
    %13 = vector.load %arg4[%c0_11, %c2, %c0_12, %c0_13] : memref<1x4x16x16xf32, #tpu.memory_space<vmem>>, vector<1x1x16x16xf32>
    %14 = vector.shape_cast %13 : vector<1x1x16x16xf32> to vector<16x16xf32>
    %15 = vector.shape_cast %12 : vector<16x16xf32> to vector<1x1x16x16xf32>
    tpu.vector_store %arg4[%c0_11, %c2, %c0_12, %c0_13], %15 {strides = array<i32>} : memref<1x4x16x16xf32, #tpu.memory_space<vmem>>, vector<1x1x16x16xf32>,
    %16 = vector.extract_strided_slice %3 {offsets = [0, 48], sizes = [16, 16], strides = [1, 1]} : vector<16x64xf32> to vector<16x16xf32>
    %c0_14 = arith.constant 0 : index
    %c3 = arith.constant 3 : index
    %c0_15 = arith.constant 0 : index
    %c0_16 = arith.constant 0 : index
    %17 = vector.load %arg4[%c0_14, %c3, %c0_15, %c0_16] : memref<1x4x16x16xf32, #tpu.memory_space<vmem>>, vector<1x1x16x16xf32>
    %18 = vector.shape_cast %17 : vector<1x1x16x16xf32> to vector<16x16xf32>
    %19 = vector.shape_cast %16 : vector<16x16xf32> to vector<1x1x16x16xf32>
    tpu.vector_store %arg4[%c0_14, %c3, %c0_15, %c0_16], %19 {strides = array<i32>} : memref<1x4x16x16xf32, #tpu.memory_space<vmem>>, vector<1x1x16x16xf32>,
    return
  }
  func.func @transform_0(%arg0: i32, %arg1: i32) -> (i32, i32, i32) {
    %c0_i32 = arith.constant 0 : i32
    %c0_i32_0 = arith.constant 0 : i32
    return %arg0, %arg1, %c0_i32 : i32, i32, i32
  }
  func.func @transform_1(%arg0: i32, %arg1: i32) -> (i32, i32) {
    %c0_i32 = arith.constant 0 : i32
    %c0_i32_0 = arith.constant 0 : i32
    %c0_i32_1 = arith.constant 0 : i32
    return %c0_i32, %c0_i32_0 : i32, i32
  }
  func.func @transform_2(%arg0: i32, %arg1: i32) -> (i32, i32, i32, i32) {
    %c0_i32 = arith.constant 0 : i32
    %c0_i32_0 = arith.constant 0 : i32
    %c0_i32_1 = arith.constant 0 : i32
    return %arg0, %c0_i32, %arg1, %c0_i32_0 : i32, i32, i32, i32
  }
}

module attributes {stable_mosaic.version = 11 : i64} {
  func.func @_proj_heads_kernel(%arg0: i32, %arg1: i32, %arg2: memref<1x16x32xf32, #tpu.memory_space<vmem>>, %arg3: memref<32x128xf32, #tpu.memory_space<vmem>>, %arg4: memref<1x4x16x16xf32, #tpu.memory_space<vmem>>, %arg5: memref<1x4x16x16xf32, #tpu.memory_space<vmem>>) attributes {dimension_semantics = [#tpu.dimension_semantics<parallel>, #tpu.dimension_semantics<parallel>], iteration_bounds = array<i64: 2, 1>, scalar_prefetch = 0 : i64, scratch_operands = 0 : i64, tpu.core_type = #tpu.core_type<tc>, window_params = [{transform_indices = @transform_0, window_bounds = array<i64: 1, 16, 32>}, {pipeline_mode = #tpu.pipeline_mode<synchronous>, transform_indices = @transform_1, window_bounds = array<i64: 32, 128>}, {transform_indices = @transform_2, window_bounds = array<i64: 1, 4, 16, 16>}, {transform_indices = @transform_3, window_bounds = array<i64: 1, 4, 16, 16>}]} {
    %c0 = arith.constant 0 : index
    %c0_0 = arith.constant 0 : index
    %c0_1 = arith.constant 0 : index
    %0 = vector.load %arg2[%c0, %c0_0, %c0_1] : memref<1x16x32xf32, #tpu.memory_space<vmem>>, vector<1x16x32xf32>
    %1 = vector.shape_cast %0 : vector<1x16x32xf32> to vector<16x32xf32>
    %c0_2 = arith.constant 0 : index
    %c0_3 = arith.constant 0 : index
    %2 = vector.load %arg3[%c0_2, %c0_3] : memref<32x128xf32, #tpu.memory_space<vmem>>, vector<32x128xf32>
    %cst = arith.constant dense<0.000000e+00> : vector<16x128xf32>
    %3 = tpu.matmul %1, %2, %cst {dimension_numbers = #tpu.dot_dimension_numbers<[1], [0], [0], [1], [0, 0, 1, 1], [], []>} : vector<16x32xf32>, vector<32x128xf32>, vector<16x128xf32> -> vector<16x128xf32>
    %4 = vector.extract_strided_slice %3 {offsets = [0, 0], sizes = [16, 16], strides = [1, 1]} : vector<16x128xf32> to vector<16x16xf32>
    %c0_4 = arith.constant 0 : index
    %c0_5 = arith.constant 0 : index
    %c0_6 = arith.constant 0 : index
    %c0_7 = arith.constant 0 : index
    %5 = vector.load %arg4[%c0_4, %c0_5, %c0_6, %c0_7] : memref<1x4x16x16xf32, #tpu.memory_space<vmem>>, vector<1x1x16x16xf32>
    %6 = vector.shape_cast %5 : vector<1x1x16x16xf32> to vector<16x16xf32>
    %7 = vector.shape_cast %4 : vector<16x16xf32> to vector<1x1x16x16xf32>
    tpu.vector_store %arg4[%c0_4, %c0_5, %c0_6, %c0_7], %7 {strides = array<i32>} : memref<1x4x16x16xf32, #tpu.memory_space<vmem>>, vector<1x1x16x16xf32>,
    %8 = vector.extract_strided_slice %3 {offsets = [0, 16], sizes = [16, 16], strides = [1, 1]} : vector<16x128xf32> to vector<16x16xf32>
    %c0_8 = arith.constant 0 : index
    %c1 = arith.constant 1 : index
    %c0_9 = arith.constant 0 : index
    %c0_10 = arith.constant 0 : index
    %9 = vector.load %arg4[%c0_8, %c1, %c0_9, %c0_10] : memref<1x4x16x16xf32, #tpu.memory_space<vmem>>, vector<1x1x16x16xf32>
    %10 = vector.shape_cast %9 : vector<1x1x16x16xf32> to vector<16x16xf32>
    %11 = vector.shape_cast %8 : vector<16x16xf32> to vector<1x1x16x16xf32>
    tpu.vector_store %arg4[%c0_8, %c1, %c0_9, %c0_10], %11 {strides = array<i32>} : memref<1x4x16x16xf32, #tpu.memory_space<vmem>>, vector<1x1x16x16xf32>,
    %12 = vector.extract_strided_slice %3 {offsets = [0, 32], sizes = [16, 16], strides = [1, 1]} : vector<16x128xf32> to vector<16x16xf32>
    %c0_11 = arith.constant 0 : index
    %c2 = arith.constant 2 : index
    %c0_12 = arith.constant 0 : index
    %c0_13 = arith.constant 0 : index
    %13 = vector.load %arg4[%c0_11, %c2, %c0_12, %c0_13] : memref<1x4x16x16xf32, #tpu.memory_space<vmem>>, vector<1x1x16x16xf32>
    %14 = vector.shape_cast %13 : vector<1x1x16x16xf32> to vector<16x16xf32>
    %15 = vector.shape_cast %12 : vector<16x16xf32> to vector<1x1x16x16xf32>
    tpu.vector_store %arg4[%c0_11, %c2, %c0_12, %c0_13], %15 {strides = array<i32>} : memref<1x4x16x16xf32, #tpu.memory_space<vmem>>, vector<1x1x16x16xf32>,
    %16 = vector.extract_strided_slice %3 {offsets = [0, 48], sizes = [16, 16], strides = [1, 1]} : vector<16x128xf32> to vector<16x16xf32>
    %c0_14 = arith.constant 0 : index
    %c3 = arith.constant 3 : index
    %c0_15 = arith.constant 0 : index
    %c0_16 = arith.constant 0 : index
    %17 = vector.load %arg4[%c0_14, %c3, %c0_15, %c0_16] : memref<1x4x16x16xf32, #tpu.memory_space<vmem>>, vector<1x1x16x16xf32>
    %18 = vector.shape_cast %17 : vector<1x1x16x16xf32> to vector<16x16xf32>
    %19 = vector.shape_cast %16 : vector<16x16xf32> to vector<1x1x16x16xf32>
    tpu.vector_store %arg4[%c0_14, %c3, %c0_15, %c0_16], %19 {strides = array<i32>} : memref<1x4x16x16xf32, #tpu.memory_space<vmem>>, vector<1x1x16x16xf32>,
    %20 = vector.extract_strided_slice %3 {offsets = [0, 64], sizes = [16, 16], strides = [1, 1]} : vector<16x128xf32> to vector<16x16xf32>
    %c0_17 = arith.constant 0 : index
    %c0_18 = arith.constant 0 : index
    %c0_19 = arith.constant 0 : index
    %c0_20 = arith.constant 0 : index
    %21 = vector.load %arg5[%c0_17, %c0_18, %c0_19, %c0_20] : memref<1x4x16x16xf32, #tpu.memory_space<vmem>>, vector<1x1x16x16xf32>
    %22 = vector.shape_cast %21 : vector<1x1x16x16xf32> to vector<16x16xf32>
    %23 = vector.shape_cast %20 : vector<16x16xf32> to vector<1x1x16x16xf32>
    tpu.vector_store %arg5[%c0_17, %c0_18, %c0_19, %c0_20], %23 {strides = array<i32>} : memref<1x4x16x16xf32, #tpu.memory_space<vmem>>, vector<1x1x16x16xf32>,
    %24 = vector.extract_strided_slice %3 {offsets = [0, 80], sizes = [16, 16], strides = [1, 1]} : vector<16x128xf32> to vector<16x16xf32>
    %c0_21 = arith.constant 0 : index
    %c1_22 = arith.constant 1 : index
    %c0_23 = arith.constant 0 : index
    %c0_24 = arith.constant 0 : index
    %25 = vector.load %arg5[%c0_21, %c1_22, %c0_23, %c0_24] : memref<1x4x16x16xf32, #tpu.memory_space<vmem>>, vector<1x1x16x16xf32>
    %26 = vector.shape_cast %25 : vector<1x1x16x16xf32> to vector<16x16xf32>
    %27 = vector.shape_cast %24 : vector<16x16xf32> to vector<1x1x16x16xf32>
    tpu.vector_store %arg5[%c0_21, %c1_22, %c0_23, %c0_24], %27 {strides = array<i32>} : memref<1x4x16x16xf32, #tpu.memory_space<vmem>>, vector<1x1x16x16xf32>,
    %28 = vector.extract_strided_slice %3 {offsets = [0, 96], sizes = [16, 16], strides = [1, 1]} : vector<16x128xf32> to vector<16x16xf32>
    %c0_25 = arith.constant 0 : index
    %c2_26 = arith.constant 2 : index
    %c0_27 = arith.constant 0 : index
    %c0_28 = arith.constant 0 : index
    %29 = vector.load %arg5[%c0_25, %c2_26, %c0_27, %c0_28] : memref<1x4x16x16xf32, #tpu.memory_space<vmem>>, vector<1x1x16x16xf32>
    %30 = vector.shape_cast %29 : vector<1x1x16x16xf32> to vector<16x16xf32>
    %31 = vector.shape_cast %28 : vector<16x16xf32> to vector<1x1x16x16xf32>
    tpu.vector_store %arg5[%c0_25, %c2_26, %c0_27, %c0_28], %31 {strides = array<i32>} : memref<1x4x16x16xf32, #tpu.memory_space<vmem>>, vector<1x1x16x16xf32>,
    %32 = vector.extract_strided_slice %3 {offsets = [0, 112], sizes = [16, 16], strides = [1, 1]} : vector<16x128xf32> to vector<16x16xf32>
    %c0_29 = arith.constant 0 : index
    %c3_30 = arith.constant 3 : index
    %c0_31 = arith.constant 0 : index
    %c0_32 = arith.constant 0 : index
    %33 = vector.load %arg5[%c0_29, %c3_30, %c0_31, %c0_32] : memref<1x4x16x16xf32, #tpu.memory_space<vmem>>, vector<1x1x16x16xf32>
    %34 = vector.shape_cast %33 : vector<1x1x16x16xf32> to vector<16x16xf32>
    %35 = vector.shape_cast %32 : vector<16x16xf32> to vector<1x1x16x16xf32>
    tpu.vector_store %arg5[%c0_29, %c3_30, %c0_31, %c0_32], %35 {strides = array<i32>} : memref<1x4x16x16xf32, #tpu.memory_space<vmem>>, vector<1x1x16x16xf32>,
    return
  }
  func.func @transform_0(%arg0: i32, %arg1: i32) -> (i32, i32, i32) {
    %c0_i32 = arith.constant 0 : i32
    %c0_i32_0 = arith.constant 0 : i32
    return %arg0, %arg1, %c0_i32 : i32, i32, i32
  }
  func.func @transform_1(%arg0: i32, %arg1: i32) -> (i32, i32) {
    %c0_i32 = arith.constant 0 : i32
    %c0_i32_0 = arith.constant 0 : i32
    %c0_i32_1 = arith.constant 0 : i32
    return %c0_i32, %c0_i32_0 : i32, i32
  }
  func.func @transform_2(%arg0: i32, %arg1: i32) -> (i32, i32, i32, i32) {
    %c0_i32 = arith.constant 0 : i32
    %c0_i32_0 = arith.constant 0 : i32
    %c0_i32_1 = arith.constant 0 : i32
    return %arg0, %c0_i32, %arg1, %c0_i32_0 : i32, i32, i32, i32
  }
  func.func @transform_3(%arg0: i32, %arg1: i32) -> (i32, i32, i32, i32) {
    %c0_i32 = arith.constant 0 : i32
    %c0_i32_0 = arith.constant 0 : i32
    %c0_i32_1 = arith.constant 0 : i32
    return %arg0, %c0_i32, %arg1, %c0_i32_0 : i32, i32, i32, i32
  }
}

module attributes {stable_mosaic.version = 11 : i64} {
  func.func @_rel_attn_kernel(%arg0: i32, %arg1: i32, %arg2: memref<8x16xi8, #tpu.memory_space<vmem>>, %arg3: memref<1x1x8x16xf32, #tpu.memory_space<vmem>>, %arg4: memref<1x1x16x16xf32, #tpu.memory_space<vmem>>, %arg5: memref<1x1x16x16xf32, #tpu.memory_space<vmem>>, %arg6: memref<1x1x16x16xf32, #tpu.memory_space<vmem>>, %arg7: memref<1x1x16xf32, #tpu.memory_space<vmem>>, %arg8: memref<1x1x16xf32, #tpu.memory_space<vmem>>, %arg9: memref<1x1x8x16xf32, #tpu.memory_space<vmem>>) attributes {dimension_semantics = [#tpu.dimension_semantics<parallel>, #tpu.dimension_semantics<parallel>], iteration_bounds = array<i64: 2, 4>, scalar_prefetch = 0 : i64, scratch_operands = 0 : i64, tpu.core_type = #tpu.core_type<tc>, window_params = [{pipeline_mode = #tpu.pipeline_mode<synchronous>, transform_indices = @transform_0, window_bounds = array<i64: 8, 16>}, {transform_indices = @transform_1, window_bounds = array<i64: 1, 1, 8, 16>}, {transform_indices = @transform_2, window_bounds = array<i64: 1, 1, 16, 16>}, {transform_indices = @transform_3, window_bounds = array<i64: 1, 1, 16, 16>}, {transform_indices = @transform_4, window_bounds = array<i64: 1, 1, 16, 16>}, {transform_indices = @transform_5, window_bounds = array<i64: 1, 1, 16>}, {transform_indices = @transform_6, window_bounds = array<i64: 1, 1, 16>}, {transform_indices = @transform_7, window_bounds = array<i64: 1, 1, 8, 16>}]} {
    %c0 = arith.constant 0 : index
    %c0_0 = arith.constant 0 : index
    %c0_1 = arith.constant 0 : index
    %c0_2 = arith.constant 0 : index
    %0 = vector.load %arg3[%c0, %c0_0, %c0_1, %c0_2] : memref<1x1x8x16xf32, #tpu.memory_space<vmem>>, vector<1x1x8x16xf32>
    %1 = vector.shape_cast %0 : vector<1x1x8x16xf32> to vector<8x16xf32>
    %c0_3 = arith.constant 0 : index
    %c0_4 = arith.constant 0 : index
    %c0_5 = arith.constant 0 : index
    %2 = vector.load %arg7[%c0_3, %c0_4, %c0_5] : memref<1x1x16xf32, #tpu.memory_space<vmem>>, vector<1x1x16xf32>
    %3 = vector.shape_cast %2 : vector<1x1x16xf32> to vector<1x16xf32>
    %c0_6 = arith.constant 0 : index
    %c0_7 = arith.constant 0 : index
    %c0_8 = arith.constant 0 : index
    %4 = vector.load %arg8[%c0_6, %c0_7, %c0_8] : memref<1x1x16xf32, #tpu.memory_space<vmem>>, vector<1x1x16xf32>
    %5 = vector.shape_cast %4 : vector<1x1x16xf32> to vector<1x16xf32>
    %6 = vector.broadcast %3 : vector<1x16xf32> to vector<8x16xf32>
    %7 = arith.addf %1, %6 : vector<8x16xf32>
    %c0_9 = arith.constant 0 : index
    %c0_10 = arith.constant 0 : index
    %c0_11 = arith.constant 0 : index
    %c0_12 = arith.constant 0 : index
    %8 = vector.load %arg4[%c0_9, %c0_10, %c0_11, %c0_12] : memref<1x1x16x16xf32, #tpu.memory_space<vmem>>, vector<1x1x16x16xf32>
    %9 = vector.shape_cast %8 : vector<1x1x16x16xf32> to vector<16x16xf32>
    %cst = arith.constant dense<0.000000e+00> : vector<8x16xf32>
    %10 = tpu.matmul %7, %9, %cst {dimension_numbers = #tpu.dot_dimension_numbers<[1], [1], [0], [0], [0, 0, 1, 0], [], []>} : vector<8x16xf32>, vector<16x16xf32>, vector<8x16xf32> -> vector<8x16xf32>
    %11 = vector.broadcast %5 : vector<1x16xf32> to vector<8x16xf32>
    %12 = arith.addf %1, %11 : vector<8x16xf32>
    %c0_13 = arith.constant 0 : index
    %c0_14 = arith.constant 0 : index
    %c0_15 = arith.constant 0 : index
    %c0_16 = arith.constant 0 : index
    %13 = vector.load %arg6[%c0_13, %c0_14, %c0_15, %c0_16] : memref<1x1x16x16xf32, #tpu.memory_space<vmem>>, vector<1x1x16x16xf32>
    %14 = vector.shape_cast %13 : vector<1x1x16x16xf32> to vector<16x16xf32>
    %cst_17 = arith.constant dense<0.000000e+00> : vector<8x16xf32>
    %15 = tpu.matmul %12, %14, %cst_17 {dimension_numbers = #tpu.dot_dimension_numbers<[1], [1], [0], [0], [0, 0, 1, 0], [], []>} : vector<8x16xf32>, vector<16x16xf32>, vector<8x16xf32> -> vector<8x16xf32>
    %16 = tpu.iota {dimensions = array<i32: 0>} : vector<8x1xi32>
    %c7_i32 = arith.constant 7 : i32
    %17 = vector.broadcast %c7_i32 : i32 to vector<8x1xi32>
    %18 = arith.subi %17, %16 : vector<8x1xi32>
    %19 = vector.extract_strided_slice %15 {offsets = [0, 1], sizes = [8, 15], strides = [1, 1]} : vector<8x16xf32> to vector<8x15xf32>
    %20 = vector.extract_strided_slice %15 {offsets = [0, 0], sizes = [8, 1], strides = [1, 1]} : vector<8x16xf32> to vector<8x1xf32>
    %21 = tpu.concatenate %19, %20 in 1 : vector<8x15xf32>, vector<8x1xf32> -> vector<8x16xf32>
    %c0_i32 = arith.constant 0 : i32
    %22 = vector.broadcast %c0_i32 : i32 to vector<8x1xi32>
    %23 = arith.shrsi %18, %22 : vector<8x1xi32>
    %c1_i32 = arith.constant 1 : i32
    %24 = vector.broadcast %c1_i32 : i32 to vector<8x1xi32>
    %25 = arith.andi %23, %24 : vector<8x1xi32>
    %c0_i32_18 = arith.constant 0 : i32
    %26 = vector.broadcast %c0_i32_18 : i32 to vector<8x1xi32>
    %27 = arith.cmpi sgt, %25, %26 : vector<8x1xi32>
    %28 = vector.shape_cast %27 : vector<8x1xi1> to vector<8x1xi1>
    %29 = vector.broadcast %28 : vector<8x1xi1> to vector<8x16xi1>
    %30 = arith.select %29, %21, %15 : vector<8x16xi1>, vector<8x16xf32>
    %31 = vector.extract_strided_slice %30 {offsets = [0, 2], sizes = [8, 14], strides = [1, 1]} : vector<8x16xf32> to vector<8x14xf32>
    %32 = vector.extract_strided_slice %30 {offsets = [0, 0], sizes = [8, 2], strides = [1, 1]} : vector<8x16xf32> to vector<8x2xf32>
    %33 = tpu.concatenate %31, %32 in 1 : vector<8x14xf32>, vector<8x2xf32> -> vector<8x16xf32>
    %c1_i32_19 = arith.constant 1 : i32
    %34 = vector.broadcast %c1_i32_19 : i32 to vector<8x1xi32>
    %35 = arith.shrsi %18, %34 : vector<8x1xi32>
    %c1_i32_20 = arith.constant 1 : i32
    %36 = vector.broadcast %c1_i32_20 : i32 to vector<8x1xi32>
    %37 = arith.andi %35, %36 : vector<8x1xi32>
    %c0_i32_21 = arith.constant 0 : i32
    %38 = vector.broadcast %c0_i32_21 : i32 to vector<8x1xi32>
    %39 = arith.cmpi sgt, %37, %38 : vector<8x1xi32>
    %40 = vector.shape_cast %39 : vector<8x1xi1> to vector<8x1xi1>
    %41 = vector.broadcast %40 : vector<8x1xi1> to vector<8x16xi1>
    %42 = arith.select %41, %33, %30 : vector<8x16xi1>, vector<8x16xf32>
    %43 = vector.extract_strided_slice %42 {offsets = [0, 4], sizes = [8, 12], strides = [1, 1]} : vector<8x16xf32> to vector<8x12xf32>
    %44 = vector.extract_strided_slice %42 {offsets = [0, 0], sizes = [8, 4], strides = [1, 1]} : vector<8x16xf32> to vector<8x4xf32>
    %45 = tpu.concatenate %43, %44 in 1 : vector<8x12xf32>, vector<8x4xf32> -> vector<8x16xf32>
    %c2_i32 = arith.constant 2 : i32
    %46 = vector.broadcast %c2_i32 : i32 to vector<8x1xi32>
    %47 = arith.shrsi %18, %46 : vector<8x1xi32>
    %c1_i32_22 = arith.constant 1 : i32
    %48 = vector.broadcast %c1_i32_22 : i32 to vector<8x1xi32>
    %49 = arith.andi %47, %48 : vector<8x1xi32>
    %c0_i32_23 = arith.constant 0 : i32
    %50 = vector.broadcast %c0_i32_23 : i32 to vector<8x1xi32>
    %51 = arith.cmpi sgt, %49, %50 : vector<8x1xi32>
    %52 = vector.shape_cast %51 : vector<8x1xi1> to vector<8x1xi1>
    %53 = vector.broadcast %52 : vector<8x1xi1> to vector<8x16xi1>
    %54 = arith.select %53, %45, %42 : vector<8x16xi1>, vector<8x16xf32>
    %55 = arith.addf %10, %54 : vector<8x16xf32>
    %cst_24 = arith.constant 2.500000e-01 : f32
    %56 = vector.broadcast %cst_24 : f32 to vector<8x16xf32>
    %57 = arith.mulf %55, %56 : vector<8x16xf32>
    %c0_25 = arith.constant 0 : index
    %c0_26 = arith.constant 0 : index
    %58 = vector.load %arg2[%c0_25, %c0_26] : memref<8x16xi8, #tpu.memory_space<vmem>>, vector<8x16xi8>
    %c0_i8 = arith.constant 0 : i8
    %59 = vector.broadcast %c0_i8 : i8 to vector<8x16xi8>
    %60 = arith.cmpi ne, %58, %59 : vector<8x16xi8>
    %cst_27 = arith.constant -1.000000e+30 : f32
    %61 = vector.broadcast %cst_27 : f32 to vector<8x16xf32>
    %62 = arith.select %60, %61, %57 : vector<8x16xi1>, vector<8x16xf32>
    %cst_28 = arith.constant dense<0xFF800000> : vector<8xf32>
    %63 = vector.multi_reduction <maximumf>, %62, %cst_28 [1] : vector<8x16xf32> to vector<8xf32>
    %64 = vector.shape_cast %63 : vector<8xf32> to vector<8x1xf32>
    %65 = vector.broadcast %64 : vector<8x1xf32> to vector<8x16xf32>
    %66 = arith.subf %62, %65 : vector<8x16xf32>
    %67 = math.exp %66 : vector<8x16xf32>
    %cst_29 = arith.constant dense<0.000000e+00> : vector<8xf32>
    %68 = vector.multi_reduction <add>, %67, %cst_29 [1] : vector<8x16xf32> to vector<8xf32>
    %69 = vector.shape_cast %68 : vector<8xf32> to vector<8x1xf32>
    %70 = tpu.reciprocal %69 {approx = true} : vector<8x1xf32> -> vector<8x1xf32>
    %71 = vector.broadcast %70 : vector<8x1xf32> to vector<8x16xf32>
    %72 = arith.mulf %67, %71 : vector<8x16xf32>
    %c0_30 = arith.constant 0 : index
    %c0_31 = arith.constant 0 : index
    %c0_32 = arith.constant 0 : index
    %c0_33 = arith.constant 0 : index
    %73 = vector.load %arg5[%c0_30, %c0_31, %c0_32, %c0_33] : memref<1x1x16x16xf32, #tpu.memory_space<vmem>>, vector<1x1x16x16xf32>
    %74 = vector.shape_cast %73 : vector<1x1x16x16xf32> to vector<16x16xf32>
    %cst_34 = arith.constant dense<0.000000e+00> : vector<8x16xf32>
    %75 = tpu.matmul %72, %74, %cst_34 {dimension_numbers = #tpu.dot_dimension_numbers<[1], [0], [0], [1], [0, 0, 1, 1], [], []>} : vector<8x16xf32>, vector<16x16xf32>, vector<8x16xf32> -> vector<8x16xf32>
    %c0_35 = arith.constant 0 : index
    %c0_36 = arith.constant 0 : index
    %c0_37 = arith.constant 0 : index
    %c0_38 = arith.constant 0 : index
    %76 = vector.load %arg9[%c0_35, %c0_36, %c0_37, %c0_38] : memref<1x1x8x16xf32, #tpu.memory_space<vmem>>, vector<1x1x8x16xf32>
    %77 = vector.shape_cast %76 : vector<1x1x8x16xf32> to vector<8x16xf32>
    %78 = vector.shape_cast %75 : vector<8x16xf32> to vector<1x1x8x16xf32>
    tpu.vector_store %arg9[%c0_35, %c0_36, %c0_37, %c0_38], %78 {strides = array<i32>} : memref<1x1x8x16xf32, #tpu.memory_space<vmem>>, vector<1x1x8x16xf32>,
    return
  }
  func.func @transform_0(%arg0: i32, %arg1: i32) -> (i32, i32) {
    %c0_i32 = arith.constant 0 : i32
    %c0_i32_0 = arith.constant 0 : i32
    %c0_i32_1 = arith.constant 0 : i32
    return %c0_i32, %c0_i32_0 : i32, i32
  }
  func.func @transform_1(%arg0: i32, %arg1: i32) -> (i32, i32, i32, i32) {
    %c0_i32 = arith.constant 0 : i32
    %c0_i32_0 = arith.constant 0 : i32
    %c0_i32_1 = arith.constant 0 : i32
    return %arg0, %arg1, %c0_i32, %c0_i32_0 : i32, i32, i32, i32
  }
  func.func @transform_2(%arg0: i32, %arg1: i32) -> (i32, i32, i32, i32) {
    %c0_i32 = arith.constant 0 : i32
    %c0_i32_0 = arith.constant 0 : i32
    %c0_i32_1 = arith.constant 0 : i32
    return %arg0, %arg1, %c0_i32, %c0_i32_0 : i32, i32, i32, i32
  }
  func.func @transform_3(%arg0: i32, %arg1: i32) -> (i32, i32, i32, i32) {
    %c0_i32 = arith.constant 0 : i32
    %c0_i32_0 = arith.constant 0 : i32
    %c0_i32_1 = arith.constant 0 : i32
    return %arg0, %arg1, %c0_i32, %c0_i32_0 : i32, i32, i32, i32
  }
  func.func @transform_4(%arg0: i32, %arg1: i32) -> (i32, i32, i32, i32) {
    %c0_i32 = arith.constant 0 : i32
    %c0_i32_0 = arith.constant 0 : i32
    %c0_i32_1 = arith.constant 0 : i32
    %c0_i32_2 = arith.constant 0 : i32
    return %c0_i32, %arg1, %c0_i32_0, %c0_i32_1 : i32, i32, i32, i32
  }
  func.func @transform_5(%arg0: i32, %arg1: i32) -> (i32, i32, i32) {
    %c0_i32 = arith.constant 0 : i32
    %c0_i32_0 = arith.constant 0 : i32
    %c0_i32_1 = arith.constant 0 : i32
    return %arg1, %c0_i32, %c0_i32_0 : i32, i32, i32
  }
  func.func @transform_6(%arg0: i32, %arg1: i32) -> (i32, i32, i32) {
    %c0_i32 = arith.constant 0 : i32
    %c0_i32_0 = arith.constant 0 : i32
    %c0_i32_1 = arith.constant 0 : i32
    return %arg1, %c0_i32, %c0_i32_0 : i32, i32, i32
  }
  func.func @transform_7(%arg0: i32, %arg1: i32) -> (i32, i32, i32, i32) {
    %c0_i32 = arith.constant 0 : i32
    %c0_i32_0 = arith.constant 0 : i32
    %c0_i32_1 = arith.constant 0 : i32
    return %arg0, %arg1, %c0_i32, %c0_i32_0 : i32, i32, i32, i32
  }
}

module attributes {stable_mosaic.version = 11 : i64} {
  func.func @_proj_heads_kernel(%arg0: i32, %arg1: i32, %arg2: memref<1x8x32xf32, #tpu.memory_space<vmem>>, %arg3: memref<32x64xf32, #tpu.memory_space<vmem>>, %arg4: memref<1x4x8x16xf32, #tpu.memory_space<vmem>>) attributes {dimension_semantics = [#tpu.dimension_semantics<parallel>, #tpu.dimension_semantics<parallel>], iteration_bounds = array<i64: 2, 1>, scalar_prefetch = 0 : i64, scratch_operands = 0 : i64, tpu.core_type = #tpu.core_type<tc>, window_params = [{transform_indices = @transform_0, window_bounds = array<i64: 1, 8, 32>}, {pipeline_mode = #tpu.pipeline_mode<synchronous>, transform_indices = @transform_1, window_bounds = array<i64: 32, 64>}, {transform_indices = @transform_2, window_bounds = array<i64: 1, 4, 8, 16>}]} {
    %c0 = arith.constant 0 : index
    %c0_0 = arith.constant 0 : index
    %c0_1 = arith.constant 0 : index
    %0 = vector.load %arg2[%c0, %c0_0, %c0_1] : memref<1x8x32xf32, #tpu.memory_space<vmem>>, vector<1x8x32xf32>
    %1 = vector.shape_cast %0 : vector<1x8x32xf32> to vector<8x32xf32>
    %c0_2 = arith.constant 0 : index
    %c0_3 = arith.constant 0 : index
    %2 = vector.load %arg3[%c0_2, %c0_3] : memref<32x64xf32, #tpu.memory_space<vmem>>, vector<32x64xf32>
    %cst = arith.constant dense<0.000000e+00> : vector<8x64xf32>
    %3 = tpu.matmul %1, %2, %cst {dimension_numbers = #tpu.dot_dimension_numbers<[1], [0], [0], [1], [0, 0, 1, 1], [], []>} : vector<8x32xf32>, vector<32x64xf32>, vector<8x64xf32> -> vector<8x64xf32>
    %4 = vector.extract_strided_slice %3 {offsets = [0, 0], sizes = [8, 16], strides = [1, 1]} : vector<8x64xf32> to vector<8x16xf32>
    %c0_4 = arith.constant 0 : index
    %c0_5 = arith.constant 0 : index
    %c0_6 = arith.constant 0 : index
    %c0_7 = arith.constant 0 : index
    %5 = vector.load %arg4[%c0_4, %c0_5, %c0_6, %c0_7] : memref<1x4x8x16xf32, #tpu.memory_space<vmem>>, vector<1x1x8x16xf32>
    %6 = vector.shape_cast %5 : vector<1x1x8x16xf32> to vector<8x16xf32>
    %7 = vector.shape_cast %4 : vector<8x16xf32> to vector<1x1x8x16xf32>
    tpu.vector_store %arg4[%c0_4, %c0_5, %c0_6, %c0_7], %7 {strides = array<i32>} : memref<1x4x8x16xf32, #tpu.memory_space<vmem>>, vector<1x1x8x16xf32>,
    %8 = vector.extract_strided_slice %3 {offsets = [0, 16], sizes = [8, 16], strides = [1, 1]} : vector<8x64xf32> to vector<8x16xf32>
    %c0_8 = arith.constant 0 : index
    %c1 = arith.constant 1 : index
    %c0_9 = arith.constant 0 : index
    %c0_10 = arith.constant 0 : index
    %9 = vector.load %arg4[%c0_8, %c1, %c0_9, %c0_10] : memref<1x4x8x16xf32, #tpu.memory_space<vmem>>, vector<1x1x8x16xf32>
    %10 = vector.shape_cast %9 : vector<1x1x8x16xf32> to vector<8x16xf32>
    %11 = vector.shape_cast %8 : vector<8x16xf32> to vector<1x1x8x16xf32>
    tpu.vector_store %arg4[%c0_8, %c1, %c0_9, %c0_10], %11 {strides = array<i32>} : memref<1x4x8x16xf32, #tpu.memory_space<vmem>>, vector<1x1x8x16xf32>,
    %12 = vector.extract_strided_slice %3 {offsets = [0, 32], sizes = [8, 16], strides = [1, 1]} : vector<8x64xf32> to vector<8x16xf32>
    %c0_11 = arith.constant 0 : index
    %c2 = arith.constant 2 : index
    %c0_12 = arith.constant 0 : index
    %c0_13 = arith.constant 0 : index
    %13 = vector.load %arg4[%c0_11, %c2, %c0_12, %c0_13] : memref<1x4x8x16xf32, #tpu.memory_space<vmem>>, vector<1x1x8x16xf32>
    %14 = vector.shape_cast %13 : vector<1x1x8x16xf32> to vector<8x16xf32>
    %15 = vector.shape_cast %12 : vector<8x16xf32> to vector<1x1x8x16xf32>
    tpu.vector_store %arg4[%c0_11, %c2, %c0_12, %c0_13], %15 {strides = array<i32>} : memref<1x4x8x16xf32, #tpu.memory_space<vmem>>, vector<1x1x8x16xf32>,
    %16 = vector.extract_strided_slice %3 {offsets = [0, 48], sizes = [8, 16], strides = [1, 1]} : vector<8x64xf32> to vector<8x16xf32>
    %c0_14 = arith.constant 0 : index
    %c3 = arith.constant 3 : index
    %c0_15 = arith.constant 0 : index
    %c0_16 = arith.constant 0 : index
    %17 = vector.load %arg4[%c0_14, %c3, %c0_15, %c0_16] : memref<1x4x8x16xf32, #tpu.memory_space<vmem>>, vector<1x1x8x16xf32>
    %18 = vector.shape_cast %17 : vector<1x1x8x16xf32> to vector<8x16xf32>
    %19 = vector.shape_cast %16 : vector<8x16xf32> to vector<1x1x8x16xf32>
    tpu.vector_store %arg4[%c0_14, %c3, %c0_15, %c0_16], %19 {strides = array<i32>} : memref<1x4x8x16xf32, #tpu.memory_space<vmem>>, vector<1x1x8x16xf32>,
    return
  }
  func.func @transform_0(%arg0: i32, %arg1: i32) -> (i32, i32, i32) {
    %c0_i32 = arith.constant 0 : i32
    %c0_i32_0 = arith.constant 0 : i32
    return %arg0, %arg1, %c0_i32 : i32, i32, i32
  }
  func.func @transform_1(%arg0: i32, %arg1: i32) -> (i32, i32) {
    %c0_i32 = arith.constant 0 : i32
    %c0_i32_0 = arith.constant 0 : i32
    %c0_i32_1 = arith.constant 0 : i32
    return %c0_i32, %c0_i32_0 : i32, i32
  }
  func.func @transform_2(%arg0: i32, %arg1: i32) -> (i32, i32, i32, i32) {
    %c0_i32 = arith.constant 0 : i32
    %c0_i32_0 = arith.constant 0 : i32
    %c0_i32_1 = arith.constant 0 : i32
    return %arg0, %c0_i32, %arg1, %c0_i32_0 : i32, i32, i32, i32
  }
}

module attributes {stable_mosaic.version = 11 : i64} {
  func.func @_outproj_ln_kernel(%arg0: i32, %arg1: i32, %arg2: memref<1x4x8x16xf32, #tpu.memory_space<vmem>>, %arg3: memref<64x128xf32, #tpu.memory_space<vmem>>, %arg4: memref<1x8x128xf32, #tpu.memory_space<vmem>>, %arg5: memref<1x128xf32, #tpu.memory_space<vmem>>, %arg6: memref<1x128xf32, #tpu.memory_space<vmem>>, %arg7: memref<1x8x128xf32, #tpu.memory_space<vmem>>) attributes {dimension_semantics = [#tpu.dimension_semantics<parallel>, #tpu.dimension_semantics<parallel>], iteration_bounds = array<i64: 2, 1>, scalar_prefetch = 0 : i64, scratch_operands = 0 : i64, tpu.core_type = #tpu.core_type<tc>, window_params = [{transform_indices = @transform_0, window_bounds = array<i64: 1, 4, 8, 16>}, {pipeline_mode = #tpu.pipeline_mode<synchronous>, transform_indices = @transform_1, window_bounds = array<i64: 64, 128>}, {transform_indices = @transform_2, window_bounds = array<i64: 1, 8, 128>}, {pipeline_mode = #tpu.pipeline_mode<synchronous>, transform_indices = @transform_3, window_bounds = array<i64: 1, 128>}, {pipeline_mode = #tpu.pipeline_mode<synchronous>, transform_indices = @transform_4, window_bounds = array<i64: 1, 128>}, {transform_indices = @transform_5, window_bounds = array<i64: 1, 8, 128>}]} {
    %c0 = arith.constant 0 : index
    %c0_0 = arith.constant 0 : index
    %c0_1 = arith.constant 0 : index
    %c0_2 = arith.constant 0 : index
    %0 = vector.load %arg2[%c0, %c0_0, %c0_1, %c0_2] : memref<1x4x8x16xf32, #tpu.memory_space<vmem>>, vector<1x1x8x16xf32>
    %1 = vector.shape_cast %0 : vector<1x1x8x16xf32> to vector<8x16xf32>
    %c0_3 = arith.constant 0 : index
    %c1 = arith.constant 1 : index
    %c0_4 = arith.constant 0 : index
    %c0_5 = arith.constant 0 : index
    %2 = vector.load %arg2[%c0_3, %c1, %c0_4, %c0_5] : memref<1x4x8x16xf32, #tpu.memory_space<vmem>>, vector<1x1x8x16xf32>
    %3 = vector.shape_cast %2 : vector<1x1x8x16xf32> to vector<8x16xf32>
    %c0_6 = arith.constant 0 : index
    %c2 = arith.constant 2 : index
    %c0_7 = arith.constant 0 : index
    %c0_8 = arith.constant 0 : index
    %4 = vector.load %arg2[%c0_6, %c2, %c0_7, %c0_8] : memref<1x4x8x16xf32, #tpu.memory_space<vmem>>, vector<1x1x8x16xf32>
    %5 = vector.shape_cast %4 : vector<1x1x8x16xf32> to vector<8x16xf32>
    %c0_9 = arith.constant 0 : index
    %c3 = arith.constant 3 : index
    %c0_10 = arith.constant 0 : index
    %c0_11 = arith.constant 0 : index
    %6 = vector.load %arg2[%c0_9, %c3, %c0_10, %c0_11] : memref<1x4x8x16xf32, #tpu.memory_space<vmem>>, vector<1x1x8x16xf32>
    %7 = vector.shape_cast %6 : vector<1x1x8x16xf32> to vector<8x16xf32>
    %8 = tpu.concatenate %1, %3, %5, %7 in 1 : vector<8x16xf32>, vector<8x16xf32>, vector<8x16xf32>, vector<8x16xf32> -> vector<8x64xf32>
    %c0_12 = arith.constant 0 : index
    %c0_13 = arith.constant 0 : index
    %9 = vector.load %arg3[%c0_12, %c0_13] : memref<64x128xf32, #tpu.memory_space<vmem>>, vector<64x128xf32>
    %cst = arith.constant dense<0.000000e+00> : vector<8x128xf32>
    %10 = tpu.matmul %8, %9, %cst {dimension_numbers = #tpu.dot_dimension_numbers<[1], [0], [0], [1], [0, 0, 1, 1], [], []>} : vector<8x64xf32>, vector<64x128xf32>, vector<8x128xf32> -> vector<8x128xf32>
    %c0_14 = arith.constant 0 : index
    %c0_15 = arith.constant 0 : index
    %c0_16 = arith.constant 0 : index
    %11 = vector.load %arg4[%c0_14, %c0_15, %c0_16] : memref<1x8x128xf32, #tpu.memory_space<vmem>>, vector<1x8x128xf32>
    %12 = vector.shape_cast %11 : vector<1x8x128xf32> to vector<8x128xf32>
    %13 = arith.addf %12, %10 : vector<8x128xf32>
    %c0_17 = arith.constant 0 : index
    %c0_18 = arith.constant 0 : index
    %14 = vector.load %arg5[%c0_17, %c0_18] : memref<1x128xf32, #tpu.memory_space<vmem>>, vector<1x128xf32>
    %c0_19 = arith.constant 0 : index
    %c0_20 = arith.constant 0 : index
    %15 = vector.load %arg6[%c0_19, %c0_20] : memref<1x128xf32, #tpu.memory_space<vmem>>, vector<1x128xf32>
    %cst_21 = arith.constant dense<0.000000e+00> : vector<8xf32>
    %16 = vector.multi_reduction <add>, %13, %cst_21 [1] : vector<8x128xf32> to vector<8xf32>
    %17 = vector.shape_cast %16 : vector<8xf32> to vector<8x1xf32>
    %cst_22 = arith.constant 3.125000e-02 : f32
    %18 = vector.broadcast %cst_22 : f32 to vector<8x1xf32>
    %19 = arith.mulf %17, %18 : vector<8x1xf32>
    %20 = vector.broadcast %19 : vector<8x1xf32> to vector<8x128xf32>
    %21 = arith.subf %13, %20 : vector<8x128xf32>
    %22 = tpu.iota {dimensions = array<i32: 1>} : vector<1x128xi32>
    %c32_i32 = arith.constant 32 : i32
    %23 = vector.broadcast %c32_i32 : i32 to vector<1x128xi32>
    %24 = arith.cmpi slt, %22, %23 : vector<1x128xi32>
    %cst_23 = arith.constant 0.000000e+00 : f32
    %25 = vector.shape_cast %24 : vector<1x128xi1> to vector<1x128xi1>
    %26 = vector.broadcast %25 : vector<1x128xi1> to vector<8x128xi1>
    %27 = vector.broadcast %cst_23 : f32 to vector<8x128xf32>
    %28 = arith.select %26, %21, %27 : vector<8x128xi1>, vector<8x128xf32>
    %29 = arith.mulf %28, %28 : vector<8x128xf32>
    %cst_24 = arith.constant dense<0.000000e+00> : vector<8xf32>
    %30 = vector.multi_reduction <add>, %29, %cst_24 [1] : vector<8x128xf32> to vector<8xf32>
    %31 = vector.shape_cast %30 : vector<8xf32> to vector<8x1xf32>
    %cst_25 = arith.constant 3.125000e-02 : f32
    %32 = vector.broadcast %cst_25 : f32 to vector<8x1xf32>
    %33 = arith.mulf %31, %32 : vector<8x1xf32>
    %cst_26 = arith.constant 9.99999974E-6 : f32
    %34 = vector.broadcast %cst_26 : f32 to vector<8x1xf32>
    %35 = arith.addf %33, %34 : vector<8x1xf32>
    %36 = math.rsqrt %35 : vector<8x1xf32>
    %37 = vector.broadcast %36 : vector<8x1xf32> to vector<8x128xf32>
    %38 = arith.mulf %28, %37 : vector<8x128xf32>
    %39 = vector.broadcast %14 : vector<1x128xf32> to vector<8x128xf32>
    %40 = arith.mulf %38, %39 : vector<8x128xf32>
    %41 = vector.broadcast %15 : vector<1x128xf32> to vector<8x128xf32>
    %42 = arith.addf %40, %41 : vector<8x128xf32>
    %c0_27 = arith.constant 0 : index
    %c0_28 = arith.constant 0 : index
    %c0_29 = arith.constant 0 : index
    %43 = vector.load %arg7[%c0_27, %c0_28, %c0_29] : memref<1x8x128xf32, #tpu.memory_space<vmem>>, vector<1x8x128xf32>
    %44 = vector.shape_cast %43 : vector<1x8x128xf32> to vector<8x128xf32>
    %45 = vector.shape_cast %42 : vector<8x128xf32> to vector<1x8x128xf32>
    tpu.vector_store %arg7[%c0_27, %c0_28, %c0_29], %45 {strides = array<i32>} : memref<1x8x128xf32, #tpu.memory_space<vmem>>, vector<1x8x128xf32>,
    return
  }
  func.func @transform_0(%arg0: i32, %arg1: i32) -> (i32, i32, i32, i32) {
    %c0_i32 = arith.constant 0 : i32
    %c0_i32_0 = arith.constant 0 : i32
    %c0_i32_1 = arith.constant 0 : i32
    return %arg0, %c0_i32, %arg1, %c0_i32_0 : i32, i32, i32, i32
  }
  func.func @transform_1(%arg0: i32, %arg1: i32) -> (i32, i32) {
    %c0_i32 = arith.constant 0 : i32
    %c0_i32_0 = arith.constant 0 : i32
    %c0_i32_1 = arith.constant 0 : i32
    return %c0_i32, %c0_i32_0 : i32, i32
  }
  func.func @transform_2(%arg0: i32, %arg1: i32) -> (i32, i32, i32) {
    %c0_i32 = arith.constant 0 : i32
    %c0_i32_0 = arith.constant 0 : i32
    return %arg0, %arg1, %c0_i32 : i32, i32, i32
  }
  func.func @transform_3(%arg0: i32, %arg1: i32) -> (i32, i32) {
    %c0_i32 = arith.constant 0 : i32
    %c0_i32_0 = arith.constant 0 : i32
    %c0_i32_1 = arith.constant 0 : i32
    return %c0_i32, %c0_i32_0 : i32, i32
  }
  func.func @transform_4(%arg0: i32, %arg1: i32) -> (i32, i32) {
    %c0_i32 = arith.constant 0 : i32
    %c0_i32_0 = arith.constant 0 : i32
    %c0_i32_1 = arith.constant 0 : i32
    return %c0_i32, %c0_i32_0 : i32, i32
  }
  func.func @transform_5(%arg0: i32, %arg1: i32) -> (i32, i32, i32) {
    %c0_i32 = arith.constant 0 : i32
    %c0_i32_0 = arith.constant 0 : i32
    return %arg0, %arg1, %c0_i32 : i32, i32, i32
  }
}

module attributes {stable_mosaic.version = 11 : i64} {
  func.func @_ff_kernel(%arg0: i32, %arg1: memref<16x128xf32, #tpu.memory_space<vmem>>, %arg2: memref<128x128xf32, #tpu.memory_space<vmem>>, %arg3: memref<1x128xf32, #tpu.memory_space<vmem>>, %arg4: memref<128x128xf32, #tpu.memory_space<vmem>>, %arg5: memref<1x128xf32, #tpu.memory_space<vmem>>, %arg6: memref<1x128xf32, #tpu.memory_space<vmem>>, %arg7: memref<1x128xf32, #tpu.memory_space<vmem>>, %arg8: memref<16x128xf32, #tpu.memory_space<vmem>>) attributes {dimension_semantics = [#tpu.dimension_semantics<parallel>], iteration_bounds = array<i64: 1>, scalar_prefetch = 0 : i64, scratch_operands = 0 : i64, tpu.core_type = #tpu.core_type<tc>, window_params = [{transform_indices = @transform_0, window_bounds = array<i64: 16, 128>}, {pipeline_mode = #tpu.pipeline_mode<synchronous>, transform_indices = @transform_1, window_bounds = array<i64: 128, 128>}, {pipeline_mode = #tpu.pipeline_mode<synchronous>, transform_indices = @transform_2, window_bounds = array<i64: 1, 128>}, {pipeline_mode = #tpu.pipeline_mode<synchronous>, transform_indices = @transform_3, window_bounds = array<i64: 128, 128>}, {pipeline_mode = #tpu.pipeline_mode<synchronous>, transform_indices = @transform_4, window_bounds = array<i64: 1, 128>}, {pipeline_mode = #tpu.pipeline_mode<synchronous>, transform_indices = @transform_5, window_bounds = array<i64: 1, 128>}, {pipeline_mode = #tpu.pipeline_mode<synchronous>, transform_indices = @transform_6, window_bounds = array<i64: 1, 128>}, {transform_indices = @transform_7, window_bounds = array<i64: 16, 128>}]} {
    %c0 = arith.constant 0 : index
    %c0_0 = arith.constant 0 : index
    %0 = vector.load %arg1[%c0, %c0_0] : memref<16x128xf32, #tpu.memory_space<vmem>>, vector<16x128xf32>
    %c0_1 = arith.constant 0 : index
    %c0_2 = arith.constant 0 : index
    %1 = vector.load %arg2[%c0_1, %c0_2] : memref<128x128xf32, #tpu.memory_space<vmem>>, vector<128x128xf32>
    %cst = arith.constant dense<0.000000e+00> : vector<16x128xf32>
    %2 = tpu.matmul %0, %1, %cst {dimension_numbers = #tpu.dot_dimension_numbers<[1], [0], [0], [1], [0, 0, 1, 1], [], []>} : vector<16x128xf32>, vector<128x128xf32>, vector<16x128xf32> -> vector<16x128xf32>
    %c0_3 = arith.constant 0 : index
    %c0_4 = arith.constant 0 : index
    %3 = vector.load %arg3[%c0_3, %c0_4] : memref<1x128xf32, #tpu.memory_space<vmem>>, vector<1x128xf32>
    %4 = vector.broadcast %3 : vector<1x128xf32> to vector<16x128xf32>
    %5 = arith.addf %2, %4 : vector<16x128xf32>
    %cst_5 = arith.constant 0.000000e+00 : f32
    %6 = vector.broadcast %cst_5 : f32 to vector<16x128xf32>
    %7 = arith.maximumf %5, %6 : vector<16x128xf32>
    %c0_6 = arith.constant 0 : index
    %c0_7 = arith.constant 0 : index
    %8 = vector.load %arg4[%c0_6, %c0_7] : memref<128x128xf32, #tpu.memory_space<vmem>>, vector<128x128xf32>
    %cst_8 = arith.constant dense<0.000000e+00> : vector<16x128xf32>
    %9 = tpu.matmul %7, %8, %cst_8 {dimension_numbers = #tpu.dot_dimension_numbers<[1], [0], [0], [1], [0, 0, 1, 1], [], []>} : vector<16x128xf32>, vector<128x128xf32>, vector<16x128xf32> -> vector<16x128xf32>
    %c0_9 = arith.constant 0 : index
    %c0_10 = arith.constant 0 : index
    %10 = vector.load %arg5[%c0_9, %c0_10] : memref<1x128xf32, #tpu.memory_space<vmem>>, vector<1x128xf32>
    %11 = vector.broadcast %10 : vector<1x128xf32> to vector<16x128xf32>
    %12 = arith.addf %9, %11 : vector<16x128xf32>
    %13 = arith.addf %0, %12 : vector<16x128xf32>
    %c0_11 = arith.constant 0 : index
    %c0_12 = arith.constant 0 : index
    %14 = vector.load %arg6[%c0_11, %c0_12] : memref<1x128xf32, #tpu.memory_space<vmem>>, vector<1x128xf32>
    %c0_13 = arith.constant 0 : index
    %c0_14 = arith.constant 0 : index
    %15 = vector.load %arg7[%c0_13, %c0_14] : memref<1x128xf32, #tpu.memory_space<vmem>>, vector<1x128xf32>
    %cst_15 = arith.constant dense<0.000000e+00> : vector<16xf32>
    %16 = vector.multi_reduction <add>, %13, %cst_15 [1] : vector<16x128xf32> to vector<16xf32>
    %17 = vector.shape_cast %16 : vector<16xf32> to vector<16x1xf32>
    %cst_16 = arith.constant 3.125000e-02 : f32
    %18 = vector.broadcast %cst_16 : f32 to vector<16x1xf32>
    %19 = arith.mulf %17, %18 : vector<16x1xf32>
    %20 = vector.broadcast %19 : vector<16x1xf32> to vector<16x128xf32>
    %21 = arith.subf %13, %20 : vector<16x128xf32>
    %22 = tpu.iota {dimensions = array<i32: 1>} : vector<1x128xi32>
    %c32_i32 = arith.constant 32 : i32
    %23 = vector.broadcast %c32_i32 : i32 to vector<1x128xi32>
    %24 = arith.cmpi slt, %22, %23 : vector<1x128xi32>
    %cst_17 = arith.constant 0.000000e+00 : f32
    %25 = vector.shape_cast %24 : vector<1x128xi1> to vector<1x128xi1>
    %26 = vector.broadcast %25 : vector<1x128xi1> to vector<16x128xi1>
    %27 = vector.broadcast %cst_17 : f32 to vector<16x128xf32>
    %28 = arith.select %26, %21, %27 : vector<16x128xi1>, vector<16x128xf32>
    %29 = arith.mulf %28, %28 : vector<16x128xf32>
    %cst_18 = arith.constant dense<0.000000e+00> : vector<16xf32>
    %30 = vector.multi_reduction <add>, %29, %cst_18 [1] : vector<16x128xf32> to vector<16xf32>
    %31 = vector.shape_cast %30 : vector<16xf32> to vector<16x1xf32>
    %cst_19 = arith.constant 3.125000e-02 : f32
    %32 = vector.broadcast %cst_19 : f32 to vector<16x1xf32>
    %33 = arith.mulf %31, %32 : vector<16x1xf32>
    %cst_20 = arith.constant 9.99999974E-6 : f32
    %34 = vector.broadcast %cst_20 : f32 to vector<16x1xf32>
    %35 = arith.addf %33, %34 : vector<16x1xf32>
    %36 = math.rsqrt %35 : vector<16x1xf32>
    %37 = vector.broadcast %36 : vector<16x1xf32> to vector<16x128xf32>
    %38 = arith.mulf %28, %37 : vector<16x128xf32>
    %39 = vector.broadcast %14 : vector<1x128xf32> to vector<16x128xf32>
    %40 = arith.mulf %38, %39 : vector<16x128xf32>
    %41 = vector.broadcast %15 : vector<1x128xf32> to vector<16x128xf32>
    %42 = arith.addf %40, %41 : vector<16x128xf32>
    %c0_21 = arith.constant 0 : index
    %c0_22 = arith.constant 0 : index
    %43 = vector.load %arg8[%c0_21, %c0_22] : memref<16x128xf32, #tpu.memory_space<vmem>>, vector<16x128xf32>
    tpu.vector_store %arg8[%c0_21, %c0_22], %42 {strides = array<i32>} : memref<16x128xf32, #tpu.memory_space<vmem>>, vector<16x128xf32>,
    return
  }
  func.func @transform_0(%arg0: i32) -> (i32, i32) {
    %c0_i32 = arith.constant 0 : i32
    %c0_i32_0 = arith.constant 0 : i32
    return %arg0, %c0_i32 : i32, i32
  }
  func.func @transform_1(%arg0: i32) -> (i32, i32) {
    %c0_i32 = arith.constant 0 : i32
    %c0_i32_0 = arith.constant 0 : i32
    %c0_i32_1 = arith.constant 0 : i32
    return %c0_i32, %c0_i32_0 : i32, i32
  }
  func.func @transform_2(%arg0: i32) -> (i32, i32) {
    %c0_i32 = arith.constant 0 : i32
    %c0_i32_0 = arith.constant 0 : i32
    %c0_i32_1 = arith.constant 0 : i32
    return %c0_i32, %c0_i32_0 : i32, i32
  }
  func.func @transform_3(%arg0: i32) -> (i32, i32) {
    %c0_i32 = arith.constant 0 : i32
    %c0_i32_0 = arith.constant 0 : i32
    %c0_i32_1 = arith.constant 0 : i32
    return %c0_i32, %c0_i32_0 : i32, i32
  }
  func.func @transform_4(%arg0: i32) -> (i32, i32) {
    %c0_i32 = arith.constant 0 : i32
    %c0_i32_0 = arith.constant 0 : i32
    %c0_i32_1 = arith.constant 0 : i32
    return %c0_i32, %c0_i32_0 : i32, i32
  }
  func.func @transform_5(%arg0: i32) -> (i32, i32) {
    %c0_i32 = arith.constant 0 : i32
    %c0_i32_0 = arith.constant 0 : i32
    %c0_i32_1 = arith.constant 0 : i32
    return %c0_i32, %c0_i32_0 : i32, i32
  }
  func.func @transform_6(%arg0: i32) -> (i32, i32) {
    %c0_i32 = arith.constant 0 : i32
    %c0_i32_0 = arith.constant 0 : i32
    %c0_i32_1 = arith.constant 0 : i32
    return %c0_i32, %c0_i32_0 : i32, i32
  }
  func.func @transform_7(%arg0: i32) -> (i32, i32) {
    %c0_i32 = arith.constant 0 : i32
    %c0_i32_0 = arith.constant 0 : i32
    return %arg0, %c0_i32 : i32, i32
  }
}

</mosaic_0001>

<llo_original>
// kernel: decoder_block.8
$region0: #{decoder_block.8}
  #allocation0 [shape = 'u32[]', space=smem, size = 0x4, offset = 0x4, fixed_abs, tag = 'smem constant byte address 0x4 - core index']
  #allocation1 [shape = 'u32[144,128]{1,0:T(1,128)}', space=vmem, size = 0x12000, scoped, tag = 'internal scratch']
  %s0 = inlined_call_operand.vmem [shape: f32[1,16,32], index: 0, kind: input, shape index: {}]
  %s1 = inlined_call_operand.vmem [shape: f32[32,64], index: 1, kind: input, shape index: {}]
  %s2 = inlined_call_operand.vmem [shape: f32[1,4,16,16], index: 2, kind: output, shape index: {}]
  %s3 = sld [smem:[#allocation0]]
  $region18: #{decoder_block.8} parent=0
    _
  %s5 = ssub.s32 1, %s3
  %s6 = scalar_select 0, %s5, %s3
  // Predicated region
  $region2: #{decoder_block.8} parent=0 // pred_check
    _
  $region3: #{decoder_block.8} parent=0 // pred_check_branch
    %8 = sbr.rel (0) target = $region5
  $region4: #{decoder_block.8} parent=0 // pred_region
    _
  $region5: #{decoder_block.8} parent=0 // pred_fallthru
    _
  // Predicated region
  $region6: #{decoder_block.8} parent=0 // pred_check
    _
  $region7: #{decoder_block.8} parent=0 // pred_check_branch
    %10 = sbr.rel (0) target = $region9
  $region8: #{decoder_block.8} parent=0 // pred_region
    _
  $region9: #{decoder_block.8} parent=0 // pred_fallthru
    _
  %v11 = vld [vmem:[%s0] sm:$0xff]
  %v12 = vld [vmem:[%s0 + $0x8] sm:$0xff]
  %v13 = vld [vmem:[%s1] sm:$0xff]
  %v14 = vld [vmem:[%s1 + $0x8] sm:$0xff]
  %v15 = vld [vmem:[%s1 + $0x10] sm:$0xff]
  %v16 = vld [vmem:[%s1 + $0x18] sm:$0xff]
  %vm17 = vcmask 261120
  %v19 = vsel %vm17, %v11, 0
  %v22 = vsel %vm17, %v12, 0
  %24 = vmatprep.subr.mxu0 0.0
  %25 = vmatpush1.msra.mxu0 0.0
  %26 = vmatprep.subr.mxu0 0.0
  %27 = vmatpush1.msra.mxu0 0.0
  %28 = vmatprep.subr.mxu0 0.0
  %29 = vmatpush1.msra.mxu0 0.0
  %30 = vmatprep.subr.mxu0 0.0
  %31 = vmatpush1.msra.mxu0 0.0
  %32 = vmatprep.subr.mxu0 0.0
  %33 = vmatpush1.msra.mxu0 0.0
  %34 = vmatprep.subr.mxu0 0.0
  %35 = vmatpush1.msra.mxu0 0.0
  %36 = vmatprep.subr.mxu0 0.0
  %37 = vmatpush1.msra.mxu0 0.0
  %38 = vmatprep.subr.mxu0 0.0
  %39 = vmatpush1.msra.mxu0 0.0
  %40 = vmatprep.subr.mxu0 0.0
  %41 = vmatpush1.msra.mxu0 0.0
  %42 = vmatprep.subr.mxu0 0.0
  %43 = vmatpush1.msra.mxu0 0.0
  %44 = vmatprep.subr.mxu0 0.0
  %45 = vmatpush1.msra.mxu0 0.0
  %46 = vmatprep.subr.mxu0 0.0
  %47 = vmatpush1.msra.mxu0 0.0
  %48 = vmatprep.subr.mxu0 0.0
  %49 = vmatpush1.msra.mxu0 %v16
  %50 = vmatprep.subr.mxu0 0.0
  %51 = vmatpush1.msra.mxu0 %v15
  %52 = vmatprep.subr.mxu0 0.0
  %53 = vmatpush1.msra.mxu0 %v14
  %54 = vmatprep.subr.mxu0 0.0
  %55 = vmatpush1.msra.mxu0 %v13
  %56 = vmatprep.subr.mxu0 0.0
  %57 = vmatpush2.msra.mxu0 0.0
  %58 = vmatprep.subr.mxu0 0.0
  %59 = vmatpush2.msra.mxu0 0.0
  %60 = vmatprep.subr.mxu0 0.0
  %61 = vmatpush2.msra.mxu0 0.0
  %62 = vmatprep.subr.mxu0 0.0
  %63 = vmatpush2.msra.mxu0 0.0
  %64 = vmatprep.subr.mxu0 0.0
  %65 = vmatpush2.msra.mxu0 0.0
  %66 = vmatprep.subr.mxu0 0.0
  %67 = vmatpush2.msra.mxu0 0.0
  %68 = vmatprep.subr.mxu0 0.0
  %69 = vmatpush2.msra.mxu0 0.0
  %70 = vmatprep.subr.mxu0 0.0
  %71 = vmatpush2.msra.mxu0 0.0
  %72 = vmatprep.subr.mxu0 0.0
  %73 = vmatpush2.msra.mxu0 0.0
  %74 = vmatprep.subr.mxu0 0.0
  %75 = vmatpush2.msra.mxu0 0.0
  %76 = vmatprep.subr.mxu0 0.0
  %77 = vmatpush2.msra.mxu0 0.0
  %78 = vmatprep.subr.mxu0 0.0
  %79 = vmatpush2.msra.mxu0 0.0
  %80 = vmatprep.subr.mxu0 0.0
  %81 = vmatpush2.msra.mxu0 0.0
  %82 = vmatprep.subr.mxu0 0.0
  %83 = vmatpush2.msra.mxu0 0.0
  %84 = vmatprep.subr.mxu0 0.0
  %85 = vmatpush2.msra.mxu0 0.0
  %86 = vmatprep.subr.mxu0 0.0
  %87 = vmatpush2.msra.mxu0 0.0
  %88 = vmatprep.mubr.f32.mxu0 0.0
  %89 = vmatmul.mubr.f32.gmra.mxu0 %v19
  %v90 = vpop.f32.mrf.mxu0
  %v91 = vadd.f32 0.0, %v90
  %v92 = vpop.f32.mrf.mxu0
  %93 = vmatprep.mubr.f32.mxu0 0.0
  %94 = vmatmul.mubr.f32.gmra.mxu0 %v22
  %v95 = vpop.f32.mrf.mxu0
  %v96 = vadd.f32 0.0, %v95
  %v97 = vpop.f32.mrf.mxu0
  %98 = vdwg.mxu0
  %vm99 = vcmask 130048
  %100 = vst.msk [vmem:[%s2] sm:$0xff] %vm99, %v91
  %101 = vst.msk [vmem:[%s2 + $0x8] sm:$0xff] %vm99, %v96
  %104 = vrot.lane.b32.xlu0 %v91, 112
  %v105 = vpop.permute.xlu0 %104
  %106 = vrot.lane.b32.xlu0 %v96, 112
  %v107 = vpop.permute.xlu0 %106
  %s110 = scalar_lea.vmem %s2, 16
  %111 = vst.msk [vmem:[%s110] sm:$0xff] %vm99, %v105
  %112 = vst.msk [vmem:[%s110 + $0x8] sm:$0xff] %vm99, %v107
  %113 = vrot.lane.b32.xlu0 %v91, 96
  %v114 = vpop.permute.xlu0 %113
  %115 = vrot.lane.b32.xlu0 %v96, 96
  %v116 = vpop.permute.xlu0 %115
  %s119 = scalar_lea.vmem %s2, 32
  %120 = vst.msk [vmem:[%s119] sm:$0xff] %vm99, %v114
  %121 = vst.msk [vmem:[%s119 + $0x8] sm:$0xff] %vm99, %v116
  %122 = vrot.lane.b32.xlu0 %v91, 80
  %v123 = vpop.permute.xlu0 %122
  %124 = vrot.lane.b32.xlu0 %v96, 80
  %v125 = vpop.permute.xlu0 %124
  %s128 = scalar_lea.vmem %s2, 48
  %129 = vst.msk [vmem:[%s128] sm:$0xff] %vm99, %v123
  %130 = vst.msk [vmem:[%s128 + $0x8] sm:$0xff] %vm99, %v125
  // Predicated region
  $region10: #{decoder_block.8} parent=0 // pred_check
    _
  $region11: #{decoder_block.8} parent=0 // pred_check_branch
    %132 = sbr.rel (0) target = $region13
  $region12: #{decoder_block.8} parent=0 // pred_region
    _
  $region13: #{decoder_block.8} parent=0 // pred_fallthru
    _
  // Predicated region
  $region14: #{decoder_block.8} parent=0 // pred_check
    _
  $region15: #{decoder_block.8} parent=0 // pred_check_branch
    %134 = sbr.rel (0) target = $region17
  $region16: #{decoder_block.8} parent=0 // pred_region
    _
  $region17: #{decoder_block.8} parent=0 // pred_fallthru
    _

// kernel: decoder_block.9
$region0: #{decoder_block.9}
  #allocation0 [shape = 'u32[]', space=smem, size = 0x4, offset = 0x4, fixed_abs, tag = 'smem constant byte address 0x4 - core index']
  #allocation1 [shape = 'u32[144,128]{1,0:T(1,128)}', space=vmem, size = 0x12000, scoped, tag = 'internal scratch']
  %s0 = inlined_call_operand.vmem [shape: s8[8,16], index: 0, kind: input, shape index: {}]
  %s1 = inlined_call_operand.vmem [shape: f32[2,4,8,16], index: 1, kind: input, shape index: {}]
  %s2 = inlined_call_operand.vmem [shape: f32[2,4,16,16], index: 2, kind: input, shape index: {}]
  %s3 = inlined_call_operand.vmem [shape: f32[2,4,16,16], index: 3, kind: input, shape index: {}]
  %s4 = inlined_call_operand.vmem [shape: f32[1,4,16,16], index: 4, kind: input, shape index: {}]
  %s5 = inlined_call_operand.vmem [shape: f32[4,1,16], index: 5, kind: input, shape index: {}]
  %s6 = inlined_call_operand.vmem [shape: f32[4,1,16], index: 6, kind: input, shape index: {}]
  %s7 = inlined_call_operand.vmem [shape: f32[2,4,8,16], index: 7, kind: output, shape index: {}]
  %s8 = sld [smem:[#allocation0]]
  $region61: #{decoder_block.9} parent=0
    _
  %s10 = ssub.s32 1, %s8
  %s11 = scalar_select 0, %s10, %s8
  loop: start=0, step=1, limit=10
  $region2: #{decoder_block.9} parent=0 // loop_pre_header
    _
  $region3: #{decoder_block.9} parent=0 // loop_header
    %s13 = sphi 0, %s17
    %p14 = scmp.ge.s32.totalorder %s13, 10
    %s20 = sphi 0, %s32
    %s21 = sphi 0, %s28
    %s22 = sphi 0, %s20
    %s23 = sphi 0, %s21
    %s24 = sphi 0, %s22
    %s25 = sphi 0, %s23
    %s33 = sphi 0, %s33
    %s35 = sphi 0, %s33
    %s36 = sphi 0, %s35
    %s50 = sphi 0, %s36
    %s58 = sphi 0, %s60
    %s61 = sphi 0, %s58
    %s62 = sphi 0, %s61
    %s78 = sphi 0, %s62
    %s86 = sphi 0, %s88
    %s89 = sphi 0, %s86
    %s90 = sphi 0, %s89
    %s106 = sphi 0, %s90
    %s114 = sphi 0, %s116
    %s117 = sphi 0, %s114
    %s118 = sphi 0, %s117
    %s134 = sphi 0, %s118
    %s140 = sphi 0, %s142
    %s143 = sphi 0, %s140
    %s144 = sphi 0, %s143
    %s160 = sphi 0, %s144
    %s166 = sphi 0, %s168
    %s169 = sphi 0, %s166
    %s170 = sphi 0, %s169
    %s186 = sphi 0, %s170
    %s192 = sphi 0, %s194
    %s195 = sphi 0, %s192
    %s196 = sphi 0, %s195
    %s212 = sphi 0, %s196
    %s220 = sphi 0, %s222
    %s223 = sphi 0, %s220
    %s224 = sphi 0, %s223
    %s240 = sphi 0, %s224
  $region4: #{decoder_block.9} parent=0 // loop_header_branch
    %16 = sbr.rel (%p14) target = $region8
  $region5: #{decoder_block.9} parent=0 // loop_body
    %s18 = ssub.s32 %s13, 1
    %s19 = ssub.s32 %s13, 2
    %s26 = sadd.s32 1, %s21
    %p27 = scmp.ge.s32.totalorder %s26, 4
    %s28 = scalar_select %p27, 0, %s26
    %s29 = sadd.s32 1, %s20
    %s30 = scalar_select %p27, %s29, %s20
    %p31 = scmp.ge.s32.totalorder %s30, 2
    %s32 = scalar_select %p31, 0, %s30
    %s34 = sadd.s32 %s33, 1
    %p37 = scmp.eq.s32.totalorder %s13, 7
    %p38 = scmp.ne.s32.totalorder %s33, %s35
    %p39 = scmp.eq.s32.totalorder %s13, 0
    %p40 = por %p38, %p39
    %p41 = scmp.ne.s32.totalorder %s33, %s35
    %p42 = scmp.eq.s32.totalorder %s18, 7
    %p43 = por %p41, %p42
    %p44 = scmp.ne.s32.totalorder %s35, %s36
    %p45 = scmp.eq.s32.totalorder %s18, 0
    %p46 = por %p44, %p45
    %p47 = scmp.ne.s32.totalorder %s35, %s36
    %p48 = scmp.eq.s32.totalorder %s19, 7
    %p49 = por %p47, %p48
    %p51 = scmp.ne.s32.totalorder %s36, %s50
    %p52 = scmp.eq.s32.totalorder %s19, 0
    %p53 = por %p51, %p52
    %s54 = ssub.s32 %s20, %s32
    %s55 = ssub.s32 %s21, %s28
    %s56 = sor.u32 %s54, %s55
    %p57 = scmp.eq.s32.totalorder %s56, 0
    %s59 = sadd.s32 %s58, 1
    %s60 = scalar_select %p57, %s58, %s59
    %p63 = pneg %p57
    %p64 = scmp.eq.s32.totalorder %s13, 7
    %p65 = por %p63, %p64
    %p66 = scmp.ne.s32.totalorder %s58, %s61
    %p67 = scmp.eq.s32.totalorder %s13, 0
    %p68 = por %p66, %p67
    %p69 = scmp.ne.s32.totalorder %s58, %s61
    %p70 = scmp.eq.s32.totalorder %s18, 7
    %p71 = por %p69, %p70
    %p72 = scmp.ne.s32.totalorder %s61, %s62
    %p73 = scmp.eq.s32.totalorder %s18, 0
    %p74 = por %p72, %p73
    %p75 = scmp.ne.s32.totalorder %s61, %s62
    %p76 = scmp.eq.s32.totalorder %s19, 7
    %p77 = por %p75, %p76
    %p79 = scmp.ne.s32.totalorder %s62, %s78
    %p80 = scmp.eq.s32.totalorder %s19, 0
    %p81 = por %p79, %p80
    %s82 = ssub.s32 %s20, %s32
    %s83 = ssub.s32 %s21, %s28
    %s84 = sor.u32 %s82, %s83
    %p85 = scmp.eq.s32.totalorder %s84, 0
    %s87 = sadd.s32 %s86, 1
    %s88 = scalar_select %p85, %s86, %s87
    %p91 = pneg %p85
    %p92 = scmp.eq.s32.totalorder %s13, 7
    %p93 = por %p91, %p92
    %p94 = scmp.ne.s32.totalorder %s86, %s89
    %p95 = scmp.eq.s32.totalorder %s13, 0
    %p96 = por %p94, %p95
    %p97 = scmp.ne.s32.totalorder %s86, %s89
    %p98 = scmp.eq.s32.totalorder %s18, 7
    %p99 = por %p97, %p98
    %p100 = scmp.ne.s32.totalorder %s89, %s90
    %p101 = scmp.eq.s32.totalorder %s18, 0
    %p102 = por %p100, %p101
    %p103 = scmp.ne.s32.totalorder %s89, %s90
    %p104 = scmp.eq.s32.totalorder %s19, 7
    %p105 = por %p103, %p104
    %p107 = scmp.ne.s32.totalorder %s90, %s106
    %p108 = scmp.eq.s32.totalorder %s19, 0
    %p109 = por %p107, %p108
    %s110 = ssub.s32 %s20, %s32
    %s111 = ssub.s32 %s21, %s28
    %s112 = sor.u32 %s110, %s111
    %p113 = scmp.eq.s32.totalorder %s112, 0
    %s115 = sadd.s32 %s114, 1
    %s116 = scalar_select %p113, %s114, %s115
    %p119 = pneg %p113
    %p120 = scmp.eq.s32.totalorder %s13, 7
    %p121 = por %p119, %p120
    %p122 = scmp.ne.s32.totalorder %s114, %s117
    %p123 = scmp.eq.s32.totalorder %s13, 0
    %p124 = por %p122, %p123
    %p125 = scmp.ne.s32.totalorder %s114, %s117
    %p126 = scmp.eq.s32.totalorder %s18, 7
    %p127 = por %p125, %p126
    %p128 = scmp.ne.s32.totalorder %s117, %s118
    %p129 = scmp.eq.s32.totalorder %s18, 0
    %p130 = por %p128, %p129
    %p131 = scmp.ne.s32.totalorder %s117, %s118
    %p132 = scmp.eq.s32.totalorder %s19, 7
    %p133 = por %p131, %p132
    %p135 = scmp.ne.s32.totalorder %s118, %s134
    %p136 = scmp.eq.s32.totalorder %s19, 0
    %p137 = por %p135, %p136
    %s138 = ssub.s32 %s21, %s28
    %p139 = scmp.eq.s32.totalorder %s138, 0
    %s141 = sadd.s32 %s140, 1
    %s142 = scalar_select %p139, %s140, %s141
    %p145 = pneg %p139
    %p146 = scmp.eq.s32.totalorder %s13, 7
    %p147 = por %p145, %p146
    %p148 = scmp.ne.s32.totalorder %s140, %s143
    %p149 = scmp.eq.s32.totalorder %s13, 0
    %p150 = por %p148, %p149
    %p151 = scmp.ne.s32.totalorder %s140, %s143
    %p152 = scmp.eq.s32.totalorder %s18, 7
    %p153 = por %p151, %p152
    %p154 = scmp.ne.s32.totalorder %s143, %s144
    %p155 = scmp.eq.s32.totalorder %s18, 0
    %p156 = por %p154, %p155
    %p157 = scmp.ne.s32.totalorder %s143, %s144
    %p158 = scmp.eq.s32.totalorder %s19, 7
    %p159 = por %p157, %p158
    %p161 = scmp.ne.s32.totalorder %s144, %s160
    %p162 = scmp.eq.s32.totalorder %s19, 0
    %p163 = por %p161, %p162
    %s164 = ssub.s32 %s21, %s28
    %p165 = scmp.eq.s32.totalorder %s164, 0
    %s167 = sadd.s32 %s166, 1
    %s168 = scalar_select %p165, %s166, %s167
    %p171 = pneg %p165
    %p172 = scmp.eq.s32.totalorder %s13, 7
    %p173 = por %p171, %p172
    %p174 = scmp.ne.s32.totalorder %s166, %s169
    %p175 = scmp.eq.s32.totalorder %s13, 0
    %p176 = por %p174, %p175
    %p177 = scmp.ne.s32.totalorder %s166, %s169
    %p178 = scmp.eq.s32.totalorder %s18, 7
    %p179 = por %p177, %p178
    %p180 = scmp.ne.s32.totalorder %s169, %s170
    %p181 = scmp.eq.s32.totalorder %s18, 0
    %p182 = por %p180, %p181
    %p183 = scmp.ne.s32.totalorder %s169, %s170
    %p184 = scmp.eq.s32.totalorder %s19, 7
    %p185 = por %p183, %p184
    %p187 = scmp.ne.s32.totalorder %s170, %s186
    %p188 = scmp.eq.s32.totalorder %s19, 0
    %p189 = por %p187, %p188
    %s190 = ssub.s32 %s21, %s28
    %p191 = scmp.eq.s32.totalorder %s190, 0
    %s193 = sadd.s32 %s192, 1
    %s194 = scalar_select %p191, %s192, %s193
    %p197 = pneg %p191
    %p198 = scmp.eq.s32.totalorder %s13, 7
    %p199 = por %p197, %p198
    %p200 = scmp.ne.s32.totalorder %s192, %s195
    %p201 = scmp.eq.s32.totalorder %s13, 0
    %p202 = por %p200, %p201
    %p203 = scmp.ne.s32.totalorder %s192, %s195
    %p204 = scmp.eq.s32.totalorder %s18, 7
    %p205 = por %p203, %p204
    %p206 = scmp.ne.s32.totalorder %s195, %s196
    %p207 = scmp.eq.s32.totalorder %s18, 0
    %p208 = por %p206, %p207
    %p209 = scmp.ne.s32.totalorder %s195, %s196
    %p210 = scmp.eq.s32.totalorder %s19, 7
    %p211 = por %p209, %p210
    %p213 = scmp.ne.s32.totalorder %s196, %s212
    %p214 = scmp.eq.s32.totalorder %s19, 0
    %p215 = por %p213, %p214
    %s216 = ssub.s32 %s20, %s32
    %s217 = ssub.s32 %s21, %s28
    %s218 = sor.u32 %s216, %s217
    %p219 = scmp.eq.s32.totalorder %s218, 0
    %s221 = sadd.s32 %s220, 1
    %s222 = scalar_select %p219, %s220, %s221
    %p225 = pneg %p219
    %p226 = scmp.eq.s32.totalorder %s13, 7
    %p227 = por %p225, %p226
    %p228 = scmp.ne.s32.totalorder %s220, %s223
    %p229 = scmp.eq.s32.totalorder %s13, 0
    %p230 = por %p228, %p229
    %p231 = scmp.ne.s32.totalorder %s220, %s223
    %p232 = scmp.eq.s32.totalorder %s18, 7
    %p233 = por %p231, %p232
    %p234 = scmp.ne.s32.totalorder %s223, %s224
    %p235 = scmp.eq.s32.totalorder %s18, 0
    %p236 = por %p234, %p235
    %p237 = scmp.ne.s32.totalorder %s223, %s224
    %p238 = scmp.eq.s32.totalorder %s19, 7
    %p239 = por %p237, %p238
    %p241 = scmp.ne.s32.totalorder %s224, %s240
    %p242 = scmp.eq.s32.totalorder %s19, 0
    %p243 = por %p241, %p242
    %p244 = scmp.le.s32.totalorder 1, %s13
    %p245 = scmp.lt.s32.totalorder %s13, 9
    %p246 = pnand %p244, %p245
    %p247 = pneg %p246
    // Predicated region
    $region9: #{decoder_block.9} parent=5 // pred_check
      _
    $region10: #{decoder_block.9} parent=5 // pred_check_branch
      %249 = sbr.rel (%p246) target = $region12
    $region11: #{decoder_block.9} parent=5 // pred_region
      %s250 = ssub.s32 %s13, 1
      // Predicated region
      $region13: #{decoder_block.9} parent=11 // pred_check
        %p251 = pneg %p46
      $region14: #{decoder_block.9} parent=11 // pred_check_branch
        %253 = sbr.rel (%p251) target = $region16
      $region15: #{decoder_block.9} parent=11 // pred_region
        _
      $region16: #{decoder_block.9} parent=11 // pred_fallthru
        _
    $region12: #{decoder_block.9} parent=5 // pred_fallthru
      _
    %p254 = scmp.lt.s32.totalorder %s13, 8
    // Predicated region
    $region17: #{decoder_block.9} parent=5 // pred_check
      %p255 = pneg %p254
    $region18: #{decoder_block.9} parent=5 // pred_check_branch
      %257 = sbr.rel (%p255) target = $region20
    $region19: #{decoder_block.9} parent=5 // pred_region
      // Predicated region
      $region21: #{decoder_block.9} parent=19 // pred_check
        %p258 = pneg %p68
      $region22: #{decoder_block.9} parent=19 // pred_check_branch
        %260 = sbr.rel (%p258) target = $region24
      $region23: #{decoder_block.9} parent=19 // pred_region
        %p261 = scmp.lt.s32.totalorder %s20, 1
        %s262 = scalar_select %p261, %s20, 1
        %p263 = scmp.lt.s32.totalorder %s21, 3
        %s264 = scalar_select %p263, %s21, 3
        %s265 = smul.addr %s262, 4
        %s266 = sadd.s32 %s264, %s265
        %s267 = smul.addr %s266, 8
        %s268 = scalar_lea.vmem %s1, %s267
      $region24: #{decoder_block.9} parent=19 // pred_fallthru
        _
      // Predicated region
      $region25: #{decoder_block.9} parent=19 // pred_check
        %p269 = pneg %p96
      $region26: #{decoder_block.9} parent=19 // pred_check_branch
        %271 = sbr.rel (%p269) target = $region28
      $region27: #{decoder_block.9} parent=19 // pred_region
        %p272 = scmp.lt.s32.totalorder %s20, 1
        %s273 = scalar_select %p272, %s20, 1
        %p274 = scmp.lt.s32.totalorder %s21, 3
        %s275 = scalar_select %p274, %s21, 3
        %s276 = smul.addr %s275, 2
        %s277 = smul.addr %s273, 8
        %s278 = sadd.s32 %s276, %s277
        %s279 = smul.addr %s278, 8
        %s280 = scalar_lea.vmem %s2, %s279
      $region28: #{decoder_block.9} parent=19 // pred_fallthru
        _
      // Predicated region
      $region29: #{decoder_block.9} parent=19 // pred_check
        %p281 = pneg %p124
      $region30: #{decoder_block.9} parent=19 // pred_check_branch
        %283 = sbr.rel (%p281) target = $region32
      $region31: #{decoder_block.9} parent=19 // pred_region
        %p284 = scmp.lt.s32.totalorder %s20, 1
        %s285 = scalar_select %p284, %s20, 1
        %p286 = scmp.lt.s32.totalorder %s21, 3
        %s287 = scalar_select %p286, %s21, 3
        %s288 = smul.addr %s287, 2
        %s289 = smul.addr %s285, 8
        %s290 = sadd.s32 %s288, %s289
        %s291 = smul.addr %s290, 8
        %s292 = scalar_lea.vmem %s3, %s291
      $region32: #{decoder_block.9} parent=19 // pred_fallthru
        _
      // Predicated region
      $region33: #{decoder_block.9} parent=19 // pred_check
        %p293 = pneg %p150
      $region34: #{decoder_block.9} parent=19 // pred_check_branch
        %295 = sbr.rel (%p293) target = $region36
      $region35: #{decoder_block.9} parent=19 // pred_region
        %p296 = scmp.lt.s32.totalorder %s21, 3
        %s297 = scalar_select %p296, %s21, 3
        %s298 = smul.addr %s297, 2
        %s299 = smul.addr %s298, 8
        %s300 = scalar_lea.vmem %s4, %s299
      $region36: #{decoder_block.9} parent=19 // pred_fallthru
        _
      // Predicated region
      $region37: #{decoder_block.9} parent=19 // pred_check
        %p301 = pneg %p176
      $region38: #{decoder_block.9} parent=19 // pred_check_branch
        %303 = sbr.rel (%p301) target = $region40
      $region39: #{decoder_block.9} parent=19 // pred_region
        %p304 = scmp.lt.s32.totalorder %s21, 3
        %s305 = scalar_select %p304, %s21, 3
        %s306 = scalar_lea.vmem %s5, %s305
      $region40: #{decoder_block.9} parent=19 // pred_fallthru
        _
      // Predicated region
      $region41: #{decoder_block.9} parent=19 // pred_check
        %p307 = pneg %p202
      $region42: #{decoder_block.9} parent=19 // pred_check_branch
        %309 = sbr.rel (%p307) target = $region44
      $region43: #{decoder_block.9} parent=19 // pred_region
        %p310 = scmp.lt.s32.totalorder %s21, 3
        %s311 = scalar_select %p310, %s21, 3
        %s312 = scalar_lea.vmem %s6, %s311
      $region44: #{decoder_block.9} parent=19 // pred_fallthru
        _
    $region20: #{decoder_block.9} parent=5 // pred_fallthru
      _
    %p313 = scmp.le.s32.totalorder 1, %s13
    %p314 = scmp.lt.s32.totalorder %s13, 9
    %p315 = pnand %p313, %p314
    %p316 = pneg %p315
    // Predicated region
    $region45: #{decoder_block.9} parent=5 // pred_check
      _
    $region46: #{decoder_block.9} parent=5 // pred_check_branch
      %318 = sbr.rel (%p315) target = $region48
    $region47: #{decoder_block.9} parent=5 // pred_region
      %s319 = ssub.s32 %s13, 1
      %p320 = pneg %p46
      %p321 = pneg %p43
      %p322 = scmp.lt.s32.totalorder %s22, 1
      %s323 = scalar_select %p322, %s22, 1
      %p324 = scmp.lt.s32.totalorder %s23, 3
      %s325 = scalar_select %p324, %s23, 3
      %s326 = smul.addr %s323, 4
      %s327 = sadd.s32 %s325, %s326
      %s328 = smul.addr %s327, 8
      %s329 = scalar_lea.vmem %s1, %s328
      %p330 = pneg %p74
      %p331 = pneg %p71
      %p332 = scmp.lt.s32.totalorder %s22, 1
      %s333 = scalar_select %p332, %s22, 1
      %p334 = scmp.lt.s32.totalorder %s23, 3
      %s335 = scalar_select %p334, %s23, 3
      %s336 = smul.addr %s335, 2
      %s337 = smul.addr %s333, 8
      %s338 = sadd.s32 %s336, %s337
      %s339 = smul.addr %s338, 8
      %s340 = scalar_lea.vmem %s2, %s339
      %p341 = pneg %p102
      %p342 = pneg %p99
      %p343 = scmp.lt.s32.totalorder %s22, 1
      %s344 = scalar_select %p343, %s22, 1
      %p345 = scmp.lt.s32.totalorder %s23, 3
      %s346 = scalar_select %p345, %s23, 3
      %s347 = smul.addr %s346, 2
      %s348 = smul.addr %s344, 8
      %s349 = sadd.s32 %s347, %s348
      %s350 = smul.addr %s349, 8
      %s351 = scalar_lea.vmem %s3, %s350
      %p352 = pneg %p130
      %p353 = pneg %p127
      %p354 = scmp.lt.s32.totalorder %s23, 3
      %s355 = scalar_select %p354, %s23, 3
      %s356 = smul.addr %s355, 2
      %s357 = smul.addr %s356, 8
      %s358 = scalar_lea.vmem %s4, %s357
      %p359 = pneg %p156
      %p360 = pneg %p153
      %p361 = scmp.lt.s32.totalorder %s23, 3
      %s362 = scalar_select %p361, %s23, 3
      %s363 = scalar_lea.vmem %s5, %s362
      %p364 = pneg %p182
      %p365 = pneg %p179
      %p366 = scmp.lt.s32.totalorder %s23, 3
      %s367 = scalar_select %p366, %s23, 3
      %s368 = scalar_lea.vmem %s6, %s367
      %p369 = pneg %p208
      %p370 = pneg %p205
      %p371 = pneg %p236
      %p372 = pneg %p233
      %p373 = scmp.lt.s32.totalorder %s22, 1
      %s374 = scalar_select %p373, %s22, 1
      %p375 = scmp.lt.s32.totalorder %s23, 3
      %s376 = scalar_select %p375, %s23, 3
      %s377 = smul.addr %s374, 4
      %s378 = sadd.s32 %s376, %s377
      %s379 = smul.addr %s378, 8
      %s380 = scalar_lea.vmem %s7, %s379
      %p381 = scmp.lt.s32.totalorder %s22, 1
      %s382 = scalar_select %p381, %s22, 1
      %p383 = scmp.lt.s32.totalorder %s23, 3
      %s384 = scalar_select %p383, %s23, 3
      %s385 = smul.addr %s382, 4
      %s386 = sadd.s32 %s384, %s385
      %s387 = smul.addr %s386, 8
      %s388 = scalar_lea.vmem %s1, %s387
      %p389 = scmp.lt.s32.totalorder %s22, 1
      %s390 = scalar_select %p389, %s22, 1
      %p391 = scmp.lt.s32.totalorder %s23, 3
      %s392 = scalar_select %p391, %s23, 3
      %s393 = smul.addr %s392, 2
      %s394 = smul.addr %s390, 8
      %s395 = sadd.s32 %s393, %s394
      %s396 = smul.addr %s395, 8
      %s397 = scalar_lea.vmem %s2, %s396
      %p398 = scmp.lt.s32.totalorder %s22, 1
      %s399 = scalar_select %p398, %s22, 1
      %p400 = scmp.lt.s32.totalorder %s23, 3
      %s401 = scalar_select %p400, %s23, 3
      %s402 = smul.addr %s401, 2
      %s403 = smul.addr %s399, 8
      %s404 = sadd.s32 %s402, %s403
      %s405 = smul.addr %s404, 8
      %s406 = scalar_lea.vmem %s3, %s405
      %p407 = scmp.lt.s32.totalorder %s23, 3
      %s408 = scalar_select %p407, %s23, 3
      %s409 = smul.addr %s408, 2
      %s410 = smul.addr %s409, 8
      %s411 = scalar_lea.vmem %s4, %s410
      %p412 = scmp.lt.s32.totalorder %s23, 3
      %s413 = scalar_select %p412, %s23, 3
      %s414 = scalar_lea.vmem %s5, %s413
      %p415 = scmp.lt.s32.totalorder %s23, 3
      %s416 = scalar_select %p415, %s23, 3
      %s417 = scalar_lea.vmem %s6, %s416
      %p418 = scmp.lt.s32.totalorder %s22, 1
      %s419 = scalar_select %p418, %s22, 1
      %p420 = scmp.lt.s32.totalorder %s23, 3
      %s421 = scalar_select %p420, %s23, 3
      %s422 = smul.addr %s419, 4
      %s423 = sadd.s32 %s421, %s422
      %s424 = smul.addr %s423, 8
      %s425 = scalar_lea.vmem %s7, %s424
      %v428 = vld [vmem:[%s388] sm:$0xff]
      %v429 = vld [vmem:[%s414] sm:$0x1]
      %v430 = vld [vmem:[%s417] sm:$0x1]
      %v432 = vlaneseq
      %v433 = vshrl.u32 %v432, 7
      %v434 = vsub.s32 0, %v433
      %v435 = vrot.slane %v429, %v434
      %v437 = vadd.f32 %v428, %v435
      %v438 = vld [vmem:[%s397] sm:$0xff]
      %v439 = vld [vmem:[%s397 + $0x8] sm:$0xff]
      %v441 = vlaneseq
      %v442 = vshrl.u32 %v441, 7
      %v443 = vsub.s32 0, %v442
      %v444 = vrot.slane %v430, %v443
      %v446 = vadd.f32 %v428, %v444
      %v447 = vld [vmem:[%s411] sm:$0xff]
      %v448 = vld [vmem:[%s411 + $0x8] sm:$0xff]
      %vm449 = vcmask 130048
      %v451 = vsel %vm449, %v446, 0
      %v454 = vsel %vm449, %v447, 0
      %v457 = vsel %vm449, %v448, 0
      %459 = vmatprep.subr.mxu0 0.0
      %460 = vmatpush1.xpose.msra.mxu0 0.0
      %461 = vmatprep.subr.mxu0 0.0
      %462 = vmatpush1.xpose.msra.mxu0 0.0
      %463 = vmatprep.subr.mxu0 0.0
      %464 = vmatpush1.xpose.msra.mxu0 0.0
      %465 = vmatprep.subr.mxu0 0.0
      %466 = vmatpush1.xpose.msra.mxu0 0.0
      %467 = vmatprep.subr.mxu0 0.0
      %468 = vmatpush1.xpose.msra.mxu0 0.0
      %469 = vmatprep.subr.mxu0 0.0
      %470 = vmatpush1.xpose.msra.mxu0 0.0
      %471 = vmatprep.subr.mxu0 0.0
      %472 = vmatpush1.xpose.msra.mxu0 0.0
      %473 = vmatprep.subr.mxu0 0.0
      %474 = vmatpush1.xpose.msra.mxu0 0.0
      %475 = vmatprep.subr.mxu0 0.0
      %476 = vmatpush1.xpose.msra.mxu0 0.0
      %477 = vmatprep.subr.mxu0 0.0
      %478 = vmatpush1.xpose.msra.mxu0 0.0
      %479 = vmatprep.subr.mxu0 0.0
      %480 = vmatpush1.xpose.msra.mxu0 0.0
      %481 = vmatprep.subr.mxu0 0.0
      %482 = vmatpush1.xpose.msra.mxu0 0.0
      %483 = vmatprep.subr.mxu0 0.0
      %484 = vmatpush1.xpose.msra.mxu0 0.0
      %485 = vmatprep.subr.mxu0 0.0
      %486 = vmatpush1.xpose.msra.mxu0 0.0
      %487 = vmatprep.subr.mxu0 0.0
      %488 = vmatpush1.xpose.msra.mxu0 %v457
      %489 = vmatprep.subr.mxu0 0.0
      %490 = vmatpush1.xpose.msra.mxu0 %v454
      %491 = vmatprep.subr.mxu0 0.0
      %492 = vmatpush2.xpose.msra.mxu0 0.0
      %493 = vmatprep.subr.mxu0 0.0
      %494 = vmatpush2.xpose.msra.mxu0 0.0
      %495 = vmatprep.subr.mxu0 0.0
      %496 = vmatpush2.xpose.msra.mxu0 0.0
      %497 = vmatprep.subr.mxu0 0.0
      %498 = vmatpush2.xpose.msra.mxu0 0.0
      %499 = vmatprep.subr.mxu0 0.0
      %500 = vmatpush2.xpose.msra.mxu0 0.0
      %501 = vmatprep.subr.mxu0 0.0
      %502 = vmatpush2.xpose.msra.mxu0 0.0
      %503 = vmatprep.subr.mxu0 0.0
      %504 = vmatpush2.xpose.msra.mxu0 0.0
      %505 = vmatprep.subr.mxu0 0.0
      %506 = vmatpush2.xpose.msra.mxu0 0.0
      %507 = vmatprep.subr.mxu0 0.0
      %508 = vmatpush2.xpose.msra.mxu0 0.0
      %509 = vmatprep.subr.mxu0 0.0
      %510 = vmatpush2.xpose.msra.mxu0 0.0
      %511 = vmatprep.subr.mxu0 0.0
      %512 = vmatpush2.xpose.msra.mxu0 0.0
      %513 = vmatprep.subr.mxu0 0.0
      %514 = vmatpush2.xpose.msra.mxu0 0.0
      %515 = vmatprep.subr.mxu0 0.0
      %516 = vmatpush2.xpose.msra.mxu0 0.0
      %517 = vmatprep.subr.mxu0 0.0
      %518 = vmatpush2.xpose.msra.mxu0 0.0
      %519 = vmatprep.subr.mxu0 0.0
      %520 = vmatpush2.xpose.msra.mxu0 0.0
      %521 = vmatprep.subr.mxu0 0.0
      %522 = vmatpush2.xpose.msra.mxu0 0.0
      %523 = vmatprep.mubr.f32.mxu0 0.0
      %524 = vmatmul.mubr.f32.gmra.mxu0 %v451
      %v525 = vpop.f32.mrf.mxu0
      %v526 = vadd.f32 0.0, %v525
      %v527 = vpop.f32.mrf.mxu0
      %528 = vdwg.mxu0
      %v529 = vlaneseq
      %v530 = vshrl.u32 %v529, 7
      %v531 = vsub.s32 7, %v530
      %533 = vrot.lane.b32.xlu0 %v526, 127
      %v534 = vpop.permute.xlu0 %533
      %536 = vrot.lane.b32.xlu0 %v526, 15
      %v537 = vpop.permute.xlu0 %536
      %vm539 = vcmask 121856
      %v540 = vsel %vm539, %v534, %v537
      %v541 = vand.u32 %v531, 1
      %vm542 = vcmp.gt.s32.totalorder %v541, 0
      %v543 = vsel %vm542, 1, 0
      %vm544 = vcmp.eq.s32.totalorder %v543, 1
      %v545 = vsel %vm544, %v540, %v526
      %547 = vrot.lane.b32.xlu0 %v545, 126
      %v548 = vpop.permute.xlu0 %547
      %550 = vrot.lane.b32.xlu0 %v545, 14
      %v551 = vpop.permute.xlu0 %550
      %vm553 = vcmask 113664
      %v554 = vsel %vm553, %v548, %v551
      %v555 = vshra.s32 %v531, 1
      %v556 = vand.u32 %v555, 1
      %vm557 = vcmp.gt.s32.totalorder %v556, 0
      %v558 = vsel %vm557, 1, 0
      %vm559 = vcmp.eq.s32.totalorder %v558, 1
      %v560 = vsel %vm559, %v554, %v545
      %562 = vrot.lane.b32.xlu0 %v560, 124
      %v563 = vpop.permute.xlu0 %562
      %565 = vrot.lane.b32.xlu0 %v560, 12
      %v566 = vpop.permute.xlu0 %565
      %vm568 = vcmask 97280
      %v569 = vsel %vm568, %v563, %v566
      %v570 = vshra.s32 %v531, 2
      %v571 = vand.u32 %v570, 1
      %vm572 = vcmp.gt.s32.totalorder %v571, 0
      %v573 = vsel %vm572, 1, 0
      %vm574 = vcmp.eq.s32.totalorder %v573, 1
      %v575 = vsel %vm574, %v569, %v560
      %v577 = vsel %vm449, %v437, 0
      %v580 = vsel %vm449, %v438, 0
      %v583 = vsel %vm449, %v439, 0
      %585 = vmatprep.subr.mxu0 0.0
      %586 = vmatpush1.xpose.msra.mxu0 0.0
      %587 = vmatprep.subr.mxu0 0.0
      %588 = vmatpush1.xpose.msra.mxu0 0.0
      %589 = vmatprep.subr.mxu0 0.0
      %590 = vmatpush1.xpose.msra.mxu0 0.0
      %591 = vmatprep.subr.mxu0 0.0
      %592 = vmatpush1.xpose.msra.mxu0 0.0
      %593 = vmatprep.subr.mxu0 0.0
      %594 = vmatpush1.xpose.msra.mxu0 0.0
      %595 = vmatprep.subr.mxu0 0.0
      %596 = vmatpush1.xpose.msra.mxu0 0.0
      %597 = vmatprep.subr.mxu0 0.0
      %598 = vmatpush1.xpose.msra.mxu0 0.0
      %599 = vmatprep.subr.mxu0 0.0
      %600 = vmatpush1.xpose.msra.mxu0 0.0
      %601 = vmatprep.subr.mxu0 0.0
      %602 = vmatpush1.xpose.msra.mxu0 0.0
      %603 = vmatprep.subr.mxu0 0.0
      %604 = vmatpush1.xpose.msra.mxu0 0.0
      %605 = vmatprep.subr.mxu0 0.0
      %606 = vmatpush1.xpose.msra.mxu0 0.0
      %607 = vmatprep.subr.mxu0 0.0
      %608 = vmatpush1.xpose.msra.mxu0 0.0
      %609 = vmatprep.subr.mxu0 0.0
      %610 = vmatpush1.xpose.msra.mxu0 0.0
      %611 = vmatprep.subr.mxu0 0.0
      %612 = vmatpush1.xpose.msra.mxu0 0.0
      %613 = vmatprep.subr.mxu0 0.0
      %614 = vmatpush1.xpose.msra.mxu0 %v583
      %615 = vmatprep.subr.mxu0 0.0
      %616 = vmatpush1.xpose.msra.mxu0 %v580
      %617 = vmatprep.subr.mxu0 0.0
      %618 = vmatpush2.xpose.msra.mxu0 0.0
      %619 = vmatprep.subr.mxu0 0.0
      %620 = vmatpush2.xpose.msra.mxu0 0.0
      %621 = vmatprep.subr.mxu0 0.0
      %622 = vmatpush2.xpose.msra.mxu0 0.0
      %623 = vmatprep.subr.mxu0 0.0
      %624 = vmatpush2.xpose.msra.mxu0 0.0
      %625 = vmatprep.subr.mxu0 0.0
      %626 = vmatpush2.xpose.msra.mxu0 0.0
      %627 = vmatprep.subr.mxu0 0.0
      %628 = vmatpush2.xpose.msra.mxu0 0.0
      %629 = vmatprep.subr.mxu0 0.0
      %630 = vmatpush2.xpose.msra.mxu0 0.0
      %631 = vmatprep.subr.mxu0 0.0
      %632 = vmatpush2.xpose.msra.mxu0 0.0
      %633 = vmatprep.subr.mxu0 0.0
      %634 = vmatpush2.xpose.msra.mxu0 0.0
      %635 = vmatprep.subr.mxu0 0.0
      %636 = vmatpush2.xpose.msra.mxu0 0.0
      %637 = vmatprep.subr.mxu0 0.0
      %638 = vmatpush2.xpose.msra.mxu0 0.0
      %639 = vmatprep.subr.mxu0 0.0
      %640 = vmatpush2.xpose.msra.mxu0 0.0
      %641 = vmatprep.subr.mxu0 0.0
      %642 = vmatpush2.xpose.msra.mxu0 0.0
      %643 = vmatprep.subr.mxu0 0.0
      %644 = vmatpush2.xpose.msra.mxu0 0.0
      %645 = vmatprep.subr.mxu0 0.0
      %646 = vmatpush2.xpose.msra.mxu0 0.0
      %647 = vmatprep.subr.mxu0 0.0
      %648 = vmatpush2.xpose.msra.mxu0 0.0
      %649 = vmatprep.mubr.f32.mxu0 0.0
      %650 = vmatmul.mubr.f32.gmra.mxu0 %v577
      %v651 = vpop.f32.mrf.mxu0
      %v652 = vadd.f32 %v575, %v651
      %v653 = vpop.f32.mrf.mxu0
      %654 = vdwg.mxu0
      %v655 = vmul.f32 %v652, 0.25
      %v656 = vld [vmem:[%s0] sm:$0x3]
      %vm657 = vnez %v656
      %v658 = vsel %vm657, 16843009, 0
      %v659 = vunpack.c.0.s8 %v658
      %vm660 = vcmp.ne.s32.totalorder %v659, 0
      %v661 = vsel %vm660, -1e+30, %v655
      %v662 = vsel %vm449, %v661, -inf
      %663 = vmax.xlane.f32.xlu0 %v662
      %v664 = vpop.xlane.xlu0 %663
      %v665 = vsub.f32 %v661, %v664
      %v666 = vmul.f32 %v665, 1.442695
      %v667 = vpow.pop %v666
      %v668 = vsel %vm449, %v667, 0.0
      %669 = vadd.xlane.f32.xlu0 %v668
      %v670 = vpop.xlane.xlu0 %669
      %v671 = vrcp.pop %v670
      %v672 = vmul.f32 %v667, %v671
      %v673 = vld [vmem:[%s406] sm:$0xff]
      %v674 = vld [vmem:[%s406 + $0x8] sm:$0xff]
      %v676 = vsel %vm449, %v672, 0
      %678 = vmatprep.subr.mxu0 0.0
      %679 = vmatpush1.msra.mxu0 0.0
      %680 = vmatprep.subr.mxu0 0.0
      %681 = vmatpush1.msra.mxu0 0.0
      %682 = vmatprep.subr.mxu0 0.0
      %683 = vmatpush1.msra.mxu0 0.0
      %684 = vmatprep.subr.mxu0 0.0
      %685 = vmatpush1.msra.mxu0 0.0
      %686 = vmatprep.subr.mxu0 0.0
      %687 = vmatpush1.msra.mxu0 0.0
      %688 = vmatprep.subr.mxu0 0.0
      %689 = vmatpush1.msra.mxu0 0.0
      %690 = vmatprep.subr.mxu0 0.0
      %691 = vmatpush1.msra.mxu0 0.0
      %692 = vmatprep.subr.mxu0 0.0
      %693 = vmatpush1.msra.mxu0 0.0
      %694 = vmatprep.subr.mxu0 0.0
      %695 = vmatpush1.msra.mxu0 0.0
      %696 = vmatprep.subr.mxu0 0.0
      %697 = vmatpush1.msra.mxu0 0.0
      %698 = vmatprep.subr.mxu0 0.0
      %699 = vmatpush1.msra.mxu0 0.0
      %700 = vmatprep.subr.mxu0 0.0
      %701 = vmatpush1.msra.mxu0 0.0
      %702 = vmatprep.subr.mxu0 0.0
      %703 = vmatpush1.msra.mxu0 0.0
      %704 = vmatprep.subr.mxu0 0.0
      %705 = vmatpush1.msra.mxu0 0.0
      %706 = vmatprep.subr.mxu0 0.0
      %707 = vmatpush1.msra.mxu0 %v674
      %708 = vmatprep.subr.mxu0 0.0
      %709 = vmatpush1.msra.mxu0 %v673
      %710 = vmatprep.subr.mxu0 0.0
      %711 = vmatpush2.msra.mxu0 0.0
      %712 = vmatprep.subr.mxu0 0.0
      %713 = vmatpush2.msra.mxu0 0.0
      %714 = vmatprep.subr.mxu0 0.0
      %715 = vmatpush2.msra.mxu0 0.0
      %716 = vmatprep.subr.mxu0 0.0
      %717 = vmatpush2.msra.mxu0 0.0
      %718 = vmatprep.subr.mxu0 0.0
      %719 = vmatpush2.msra.mxu0 0.0
      %720 = vmatprep.subr.mxu0 0.0
      %721 = vmatpush2.msra.mxu0 0.0
      %722 = vmatprep.subr.mxu0 0.0
      %723 = vmatpush2.msra.mxu0 0.0
      %724 = vmatprep.subr.mxu0 0.0
      %725 = vmatpush2.msra.mxu0 0.0
      %726 = vmatprep.subr.mxu0 0.0
      %727 = vmatpush2.msra.mxu0 0.0
      %728 = vmatprep.subr.mxu0 0.0
      %729 = vmatpush2.msra.mxu0 0.0
      %730 = vmatprep.subr.mxu0 0.0
      %731 = vmatpush2.msra.mxu0 0.0
      %732 = vmatprep.subr.mxu0 0.0
      %733 = vmatpush2.msra.mxu0 0.0
      %734 = vmatprep.subr.mxu0 0.0
      %735 = vmatpush2.msra.mxu0 0.0
      %736 = vmatprep.subr.mxu0 0.0
      %737 = vmatpush2.msra.mxu0 0.0
      %738 = vmatprep.subr.mxu0 0.0
      %739 = vmatpush2.msra.mxu0 0.0
      %740 = vmatprep.subr.mxu0 0.0
      %741 = vmatpush2.msra.mxu0 0.0
      %742 = vmatprep.mubr.f32.mxu0 0.0
      %743 = vmatmul.mubr.f32.gmra.mxu0 %v676
      %v744 = vpop.f32.mrf.mxu0
      %v745 = vadd.f32 0.0, %v744
      %v746 = vpop.f32.mrf.mxu0
      %747 = vdwg.mxu0
      %748 = vst.msk [vmem:[%s425] sm:$0xff] %vm449, %v745
      %p749 = scmp.lt.s32.totalorder %s22, 1
      %s750 = scalar_select %p749, %s22, 1
      %p751 = scmp.lt.s32.totalorder %s23, 3
      %s752 = scalar_select %p751, %s23, 3
      %s753 = smul.addr %s750, 4
      %s754 = sadd.s32 %s752, %s753
      %s755 = smul.addr %s754, 8
      %s756 = scalar_lea.vmem %s7, %s755
      // Predicated region
      $region49: #{decoder_block.9} parent=47 // pred_check
        %p757 = pneg %p233
      $region50: #{decoder_block.9} parent=47 // pred_check_branch
        %759 = sbr.rel (%p757) target = $region52
      $region51: #{decoder_block.9} parent=47 // pred_region
        _
      $region52: #{decoder_block.9} parent=47 // pred_fallthru
        _
    $region48: #{decoder_block.9} parent=5 // pred_fallthru
      _
    %p760 = scmp.le.s32.totalorder 2, %s13
    // Predicated region
    $region53: #{decoder_block.9} parent=5 // pred_check
      %p761 = pneg %p760
    $region54: #{decoder_block.9} parent=5 // pred_check_branch
      %763 = sbr.rel (%p761) target = $region56
    $region55: #{decoder_block.9} parent=5 // pred_region
      %s764 = ssub.s32 %s13, 2
      // Predicated region
      $region57: #{decoder_block.9} parent=55 // pred_check
        %p765 = pneg %p239
      $region58: #{decoder_block.9} parent=55 // pred_check_branch
        %767 = sbr.rel (%p765) target = $region60
      $region59: #{decoder_block.9} parent=55 // pred_region
        %p768 = scmp.lt.s32.totalorder %s24, 1
        %s769 = scalar_select %p768, %s24, 1
        %p770 = scmp.lt.s32.totalorder %s25, 3
        %s771 = scalar_select %p770, %s25, 3
        %s772 = smul.addr %s769, 4
        %s773 = sadd.s32 %s771, %s772
        %s774 = smul.addr %s773, 8
        %s775 = scalar_lea.vmem %s7, %s774
      $region60: #{decoder_block.9} parent=55 // pred_fallthru
        _
    $region56: #{decoder_block.9} parent=5 // pred_fallthru
      _
  $region6: #{decoder_block.9} parent=0 // loop_footer
    %s17 = sadd.s32 1, %s13
  $region7: #{decoder_block.9} parent=0 // loop_footer_branch
    %12 = sbr.rel target = $region3
  $region8: #{decoder_block.9} parent=0 // loop_exit
    _

// kernel: decoder_block.6
$region0: #{decoder_block.6}
  #allocation0 [shape = 'u32[]', space=smem, size = 0x4, offset = 0x4, fixed_abs, tag = 'smem constant byte address 0x4 - core index']
  #allocation1 [shape = 'u32[144,128]{1,0:T(1,128)}', space=vmem, size = 0x12000, scoped, tag = 'internal scratch']
  %s0 = inlined_call_operand.vmem [shape: f32[2,16,32], index: 0, kind: input, shape index: {}]
  %s1 = inlined_call_operand.vmem [shape: f32[32,128], index: 1, kind: input, shape index: {}]
  %s2 = inlined_call_operand.vmem [shape: f32[2,4,16,16], index: 2, kind: output, shape index: {0}]
  %s3 = inlined_call_operand.vmem [shape: f32[2,4,16,16], index: 3, kind: output, shape index: {1}]
  %4 = xla_tuple %s2, %s3
  %s5 = sld [smem:[#allocation0]]
  $region49: #{decoder_block.6} parent=0
    _
  %s7 = ssub.s32 1, %s5
  %s8 = scalar_select 0, %s7, %s5
  loop: start=0, step=1, limit=4
  $region2: #{decoder_block.6} parent=0 // loop_pre_header
    _
  $region3: #{decoder_block.6} parent=0 // loop_header
    %s10 = sphi 0, %s14
    %p11 = scmp.ge.s32.totalorder %s10, 4
    %s17 = sphi 0, %s29
    %s18 = sphi 0, %s25
    %s19 = sphi 0, %s17
    %s20 = sphi 0, %s18
    %s21 = sphi 0, %s19
    %s22 = sphi 0, %s20
    %s34 = sphi 0, %s36
    %s37 = sphi 0, %s34
    %s38 = sphi 0, %s37
    %s54 = sphi 0, %s38
    %s58 = sphi 0, %s58
    %s60 = sphi 0, %s58
    %s61 = sphi 0, %s60
    %s75 = sphi 0, %s61
    %s83 = sphi 0, %s85
    %s86 = sphi 0, %s83
    %s87 = sphi 0, %s86
    %s103 = sphi 0, %s87
    %s111 = sphi 0, %s113
    %s114 = sphi 0, %s111
    %s115 = sphi 0, %s114
    %s131 = sphi 0, %s115
  $region4: #{decoder_block.6} parent=0 // loop_header_branch
    %13 = sbr.rel (%p11) target = $region8
  $region5: #{decoder_block.6} parent=0 // loop_body
    %s15 = ssub.s32 %s10, 1
    %s16 = ssub.s32 %s10, 2
    %s23 = sadd.s32 1, %s18
    %p24 = scmp.ge.s32.totalorder %s23, 1
    %s25 = scalar_select %p24, 0, %s23
    %s26 = sadd.s32 1, %s17
    %s27 = scalar_select %p24, %s26, %s17
    %p28 = scmp.ge.s32.totalorder %s27, 2
    %s29 = scalar_select %p28, 0, %s27
    %s30 = ssub.s32 %s17, %s29
    %s31 = ssub.s32 %s18, %s25
    %s32 = sor.u32 %s30, %s31
    %p33 = scmp.eq.s32.totalorder %s32, 0
    %s35 = sadd.s32 %s34, 1
    %s36 = scalar_select %p33, %s34, %s35
    %p39 = pneg %p33
    %p40 = scmp.eq.s32.totalorder %s10, 1
    %p41 = por %p39, %p40
    %p42 = scmp.ne.s32.totalorder %s34, %s37
    %p43 = scmp.eq.s32.totalorder %s10, 0
    %p44 = por %p42, %p43
    %p45 = scmp.ne.s32.totalorder %s34, %s37
    %p46 = scmp.eq.s32.totalorder %s15, 1
    %p47 = por %p45, %p46
    %p48 = scmp.ne.s32.totalorder %s37, %s38
    %p49 = scmp.eq.s32.totalorder %s15, 0
    %p50 = por %p48, %p49
    %p51 = scmp.ne.s32.totalorder %s37, %s38
    %p52 = scmp.eq.s32.totalorder %s16, 1
    %p53 = por %p51, %p52
    %p55 = scmp.ne.s32.totalorder %s38, %s54
    %p56 = scmp.eq.s32.totalorder %s16, 0
    %p57 = por %p55, %p56
    %s59 = sadd.s32 %s58, 1
    %p62 = scmp.eq.s32.totalorder %s10, 1
    %p63 = scmp.ne.s32.totalorder %s58, %s60
    %p64 = scmp.eq.s32.totalorder %s10, 0
    %p65 = por %p63, %p64
    %p66 = scmp.ne.s32.totalorder %s58, %s60
    %p67 = scmp.eq.s32.totalorder %s15, 1
    %p68 = por %p66, %p67
    %p69 = scmp.ne.s32.totalorder %s60, %s61
    %p70 = scmp.eq.s32.totalorder %s15, 0
    %p71 = por %p69, %p70
    %p72 = scmp.ne.s32.totalorder %s60, %s61
    %p73 = scmp.eq.s32.totalorder %s16, 1
    %p74 = por %p72, %p73
    %p76 = scmp.ne.s32.totalorder %s61, %s75
    %p77 = scmp.eq.s32.totalorder %s16, 0
    %p78 = por %p76, %p77
    %s79 = ssub.s32 %s17, %s29
    %s80 = ssub.s32 %s18, %s25
    %s81 = sor.u32 %s79, %s80
    %p82 = scmp.eq.s32.totalorder %s81, 0
    %s84 = sadd.s32 %s83, 1
    %s85 = scalar_select %p82, %s83, %s84
    %p88 = pneg %p82
    %p89 = scmp.eq.s32.totalorder %s10, 1
    %p90 = por %p88, %p89
    %p91 = scmp.ne.s32.totalorder %s83, %s86
    %p92 = scmp.eq.s32.totalorder %s10, 0
    %p93 = por %p91, %p92
    %p94 = scmp.ne.s32.totalorder %s83, %s86
    %p95 = scmp.eq.s32.totalorder %s15, 1
    %p96 = por %p94, %p95
    %p97 = scmp.ne.s32.totalorder %s86, %s87
    %p98 = scmp.eq.s32.totalorder %s15, 0
    %p99 = por %p97, %p98
    %p100 = scmp.ne.s32.totalorder %s86, %s87
    %p101 = scmp.eq.s32.totalorder %s16, 1
    %p102 = por %p100, %p101
    %p104 = scmp.ne.s32.totalorder %s87, %s103
    %p105 = scmp.eq.s32.totalorder %s16, 0
    %p106 = por %p104, %p105
    %s107 = ssub.s32 %s17, %s29
    %s108 = ssub.s32 %s18, %s25
    %s109 = sor.u32 %s107, %s108
    %p110 = scmp.eq.s32.totalorder %s109, 0
    %s112 = sadd.s32 %s111, 1
    %s113 = scalar_select %p110, %s111, %s112
    %p116 = pneg %p110
    %p117 = scmp.eq.s32.totalorder %s10, 1
    %p118 = por %p116, %p117
    %p119 = scmp.ne.s32.totalorder %s111, %s114
    %p120 = scmp.eq.s32.totalorder %s10, 0
    %p121 = por %p119, %p120
    %p122 = scmp.ne.s32.totalorder %s111, %s114
    %p123 = scmp.eq.s32.totalorder %s15, 1
    %p124 = por %p122, %p123
    %p125 = scmp.ne.s32.totalorder %s114, %s115
    %p126 = scmp.eq.s32.totalorder %s15, 0
    %p127 = por %p125, %p126
    %p128 = scmp.ne.s32.totalorder %s114, %s115
    %p129 = scmp.eq.s32.totalorder %s16, 1
    %p130 = por %p128, %p129
    %p132 = scmp.ne.s32.totalorder %s115, %s131
    %p133 = scmp.eq.s32.totalorder %s16, 0
    %p134 = por %p132, %p133
    %p135 = scmp.le.s32.totalorder 1, %s10
    %p136 = scmp.lt.s32.totalorder %s10, 3
    %p137 = pnand %p135, %p136
    %p138 = pneg %p137
    // Predicated region
    $region9: #{decoder_block.6} parent=5 // pred_check
      _
    $region10: #{decoder_block.6} parent=5 // pred_check_branch
      %140 = sbr.rel (%p137) target = $region12
    $region11: #{decoder_block.6} parent=5 // pred_region
      %s141 = ssub.s32 %s10, 1
      // Predicated region
      $region13: #{decoder_block.6} parent=11 // pred_check
        %p142 = pneg %p71
      $region14: #{decoder_block.6} parent=11 // pred_check_branch
        %144 = sbr.rel (%p142) target = $region16
      $region15: #{decoder_block.6} parent=11 // pred_region
        _
      $region16: #{decoder_block.6} parent=11 // pred_fallthru
        _
    $region12: #{decoder_block.6} parent=5 // pred_fallthru
      _
    %p145 = scmp.lt.s32.totalorder %s10, 2
    // Predicated region
    $region17: #{decoder_block.6} parent=5 // pred_check
      %p146 = pneg %p145
    $region18: #{decoder_block.6} parent=5 // pred_check_branch
      %148 = sbr.rel (%p146) target = $region20
    $region19: #{decoder_block.6} parent=5 // pred_region
      // Predicated region
      $region21: #{decoder_block.6} parent=19 // pred_check
        %p149 = pneg %p44
      $region22: #{decoder_block.6} parent=19 // pred_check_branch
        %151 = sbr.rel (%p149) target = $region24
      $region23: #{decoder_block.6} parent=19 // pred_region
        %s152 = smul.u32 2, %s18
        %p153 = scmp.lt.s32.totalorder %s17, 1
        %s154 = scalar_select %p153, %s17, 1
        %p155 = scmp.lt.s32.totalorder %s152, 1
        %s156 = scalar_select %p155, %s152, 1
        %s157 = smul.addr %s154, 2
        %s158 = sadd.s32 %s156, %s157
        %s159 = smul.addr %s158, 8
        %s160 = scalar_lea.vmem %s0, %s159
        %s161 = smul.u32 2, %s18
      $region24: #{decoder_block.6} parent=19 // pred_fallthru
        _
    $region20: #{decoder_block.6} parent=5 // pred_fallthru
      _
    %p162 = scmp.le.s32.totalorder 1, %s10
    %p163 = scmp.lt.s32.totalorder %s10, 3
    %p164 = pnand %p162, %p163
    %p165 = pneg %p164
    // Predicated region
    $region25: #{decoder_block.6} parent=5 // pred_check
      _
    $region26: #{decoder_block.6} parent=5 // pred_check_branch
      %167 = sbr.rel (%p164) target = $region28
    $region27: #{decoder_block.6} parent=5 // pred_region
      %s168 = ssub.s32 %s10, 1
      %s169 = smul.u32 2, %s20
      %p170 = scmp.lt.s32.totalorder %s19, 1
      %s171 = scalar_select %p170, %s19, 1
      %p172 = scmp.lt.s32.totalorder %s169, 1
      %s173 = scalar_select %p172, %s169, 1
      %s174 = smul.addr %s171, 2
      %s175 = sadd.s32 %s173, %s174
      %s176 = smul.addr %s175, 8
      %s177 = scalar_lea.vmem %s0, %s176
      %p178 = pneg %p50
      %p179 = pneg %p47
      %p180 = pneg %p71
      %p181 = pneg %p68
      %p182 = pneg %p99
      %p183 = pneg %p96
      %s184 = smul.u32 2, %s20
      %p185 = scmp.lt.s32.totalorder %s19, 1
      %s186 = scalar_select %p185, %s19, 1
      %p187 = scmp.lt.s32.totalorder %s184, 1
      %s188 = scalar_select %p187, %s184, 1
      %s189 = smul.addr %s186, 8
      %s190 = sadd.s32 %s188, %s189
      %s191 = smul.addr %s190, 8
      %s192 = scalar_lea.vmem %s2, %s191
      %p193 = pneg %p127
      %p194 = pneg %p124
      %s195 = smul.u32 2, %s20
      %p196 = scmp.lt.s32.totalorder %s19, 1
      %s197 = scalar_select %p196, %s19, 1
      %p198 = scmp.lt.s32.totalorder %s195, 1
      %s199 = scalar_select %p198, %s195, 1
      %s200 = smul.addr %s197, 8
      %s201 = sadd.s32 %s199, %s200
      %s202 = smul.addr %s201, 8
      %s203 = scalar_lea.vmem %s3, %s202
      %s204 = smul.u32 2, %s20
      %p205 = scmp.lt.s32.totalorder %s19, 1
      %s206 = scalar_select %p205, %s19, 1
      %p207 = scmp.lt.s32.totalorder %s204, 1
      %s208 = scalar_select %p207, %s204, 1
      %s209 = smul.addr %s206, 2
      %s210 = sadd.s32 %s208, %s209
      %s211 = smul.addr %s210, 8
      %s212 = scalar_lea.vmem %s0, %s211
      %s213 = smul.u32 2, %s20
      %s214 = smul.u32 2, %s20
      %p215 = scmp.lt.s32.totalorder %s19, 1
      %s216 = scalar_select %p215, %s19, 1
      %p217 = scmp.lt.s32.totalorder %s214, 1
      %s218 = scalar_select %p217, %s214, 1
      %s219 = smul.addr %s216, 8
      %s220 = sadd.s32 %s218, %s219
      %s221 = smul.addr %s220, 8
      %s222 = scalar_lea.vmem %s2, %s221
      %s223 = smul.u32 2, %s20
      %s224 = smul.u32 2, %s20
      %p225 = scmp.lt.s32.totalorder %s19, 1
      %s226 = scalar_select %p225, %s19, 1
      %p227 = scmp.lt.s32.totalorder %s224, 1
      %s228 = scalar_select %p227, %s224, 1
      %s229 = smul.addr %s226, 8
      %s230 = sadd.s32 %s228, %s229
      %s231 = smul.addr %s230, 8
      %s232 = scalar_lea.vmem %s3, %s231
      %s233 = smul.u32 2, %s20
      %v234 = vld [vmem:[%s212] sm:$0xff]
      %v235 = vld [vmem:[%s212 + $0x8] sm:$0xff]
      %v236 = vld [vmem:[%s1] sm:$0xff]
      %v237 = vld [vmem:[%s1 + $0x8] sm:$0xff]
      %v238 = vld [vmem:[%s1 + $0x10] sm:$0xff]
      %v239 = vld [vmem:[%s1 + $0x18] sm:$0xff]
      %vm240 = vcmask 261120
      %v242 = vsel %vm240, %v234, 0
      %v245 = vsel %vm240, %v235, 0
      %247 = vmatprep.subr.mxu0 0.0
      %248 = vmatpush1.msra.mxu0 0.0
      %249 = vmatprep.subr.mxu0 0.0
      %250 = vmatpush1.msra.mxu0 0.0
      %251 = vmatprep.subr.mxu0 0.0
      %252 = vmatpush1.msra.mxu0 0.0
      %253 = vmatprep.subr.mxu0 0.0
      %254 = vmatpush1.msra.mxu0 0.0
      %255 = vmatprep.subr.mxu0 0.0
      %256 = vmatpush1.msra.mxu0 0.0
      %257 = vmatprep.subr.mxu0 0.0
      %258 = vmatpush1.msra.mxu0 0.0
      %259 = vmatprep.subr.mxu0 0.0
      %260 = vmatpush1.msra.mxu0 0.0
      %261 = vmatprep.subr.mxu0 0.0
      %262 = vmatpush1.msra.mxu0 0.0
      %263 = vmatprep.subr.mxu0 0.0
      %264 = vmatpush1.msra.mxu0 0.0
      %265 = vmatprep.subr.mxu0 0.0
      %266 = vmatpush1.msra.mxu0 0.0
      %267 = vmatprep.subr.mxu0 0.0
      %268 = vmatpush1.msra.mxu0 0.0
      %269 = vmatprep.subr.mxu0 0.0
      %270 = vmatpush1.msra.mxu0 0.0
      %271 = vmatprep.subr.mxu0 0.0
      %272 = vmatpush1.msra.mxu0 %v239
      %273 = vmatprep.subr.mxu0 0.0
      %274 = vmatpush1.msra.mxu0 %v238
      %275 = vmatprep.subr.mxu0 0.0
      %276 = vmatpush1.msra.mxu0 %v237
      %277 = vmatprep.subr.mxu0 0.0
      %278 = vmatpush1.msra.mxu0 %v236
      %279 = vmatprep.subr.mxu0 0.0
      %280 = vmatpush2.msra.mxu0 0.0
      %281 = vmatprep.subr.mxu0 0.0
      %282 = vmatpush2.msra.mxu0 0.0
      %283 = vmatprep.subr.mxu0 0.0
      %284 = vmatpush2.msra.mxu0 0.0
      %285 = vmatprep.subr.mxu0 0.0
      %286 = vmatpush2.msra.mxu0 0.0
      %287 = vmatprep.subr.mxu0 0.0
      %288 = vmatpush2.msra.mxu0 0.0
      %289 = vmatprep.subr.mxu0 0.0
      %290 = vmatpush2.msra.mxu0 0.0
      %291 = vmatprep.subr.mxu0 0.0
      %292 = vmatpush2.msra.mxu0 0.0
      %293 = vmatprep.subr.mxu0 0.0
      %294 = vmatpush2.msra.mxu0 0.0
      %295 = vmatprep.subr.mxu0 0.0
      %296 = vmatpush2.msra.mxu0 0.0
      %297 = vmatprep.subr.mxu0 0.0
      %298 = vmatpush2.msra.mxu0 0.0
      %299 = vmatprep.subr.mxu0 0.0
      %300 = vmatpush2.msra.mxu0 0.0
      %301 = vmatprep.subr.mxu0 0.0
      %302 = vmatpush2.msra.mxu0 0.0
      %303 = vmatprep.subr.mxu0 0.0
      %304 = vmatpush2.msra.mxu0 0.0
      %305 = vmatprep.subr.mxu0 0.0
      %306 = vmatpush2.msra.mxu0 0.0
      %307 = vmatprep.subr.mxu0 0.0
      %308 = vmatpush2.msra.mxu0 0.0
      %309 = vmatprep.subr.mxu0 0.0
      %310 = vmatpush2.msra.mxu0 0.0
      %311 = vmatprep.mubr.f32.mxu0 0.0
      %312 = vmatmul.mubr.f32.gmra.mxu0 %v242
      %v313 = vpop.f32.mrf.mxu0
      %v314 = vadd.f32 0.0, %v313
      %v315 = vpop.f32.mrf.mxu0
      %316 = vmatprep.mubr.f32.mxu0 0.0
      %317 = vmatmul.mubr.f32.gmra.mxu0 %v245
      %v318 = vpop.f32.mrf.mxu0
      %v319 = vadd.f32 0.0, %v318
      %v320 = vpop.f32.mrf.mxu0
      %321 = vdwg.mxu0
      %vm322 = vcmask 130048
      %323 = vst.msk [vmem:[%s222] sm:$0xff] %vm322, %v314
      %324 = vst.msk [vmem:[%s222 + $0x8] sm:$0xff] %vm322, %v319
      %327 = vrot.lane.b32.xlu0 %v314, 112
      %v328 = vpop.permute.xlu0 %327
      %329 = vrot.lane.b32.xlu0 %v319, 112
      %v330 = vpop.permute.xlu0 %329
      %s333 = scalar_lea.vmem %s222, 16
      %334 = vst.msk [vmem:[%s333] sm:$0xff] %vm322, %v328
      %335 = vst.msk [vmem:[%s333 + $0x8] sm:$0xff] %vm322, %v330
      %336 = vrot.lane.b32.xlu0 %v314, 96
      %v337 = vpop.permute.xlu0 %336
      %338 = vrot.lane.b32.xlu0 %v319, 96
      %v339 = vpop.permute.xlu0 %338
      %s342 = scalar_lea.vmem %s222, 32
      %343 = vst.msk [vmem:[%s342] sm:$0xff] %vm322, %v337
      %344 = vst.msk [vmem:[%s342 + $0x8] sm:$0xff] %vm322, %v339
      %345 = vrot.lane.b32.xlu0 %v314, 80
      %v346 = vpop.permute.xlu0 %345
      %347 = vrot.lane.b32.xlu0 %v319, 80
      %v348 = vpop.permute.xlu0 %347
      %s351 = scalar_lea.vmem %s222, 48
      %352 = vst.msk [vmem:[%s351] sm:$0xff] %vm322, %v346
      %353 = vst.msk [vmem:[%s351 + $0x8] sm:$0xff] %vm322, %v348
      %354 = vrot.lane.b32.xlu0 %v314, 64
      %v355 = vpop.permute.xlu0 %354
      %356 = vrot.lane.b32.xlu0 %v319, 64
      %v357 = vpop.permute.xlu0 %356
      %360 = vst.msk [vmem:[%s232] sm:$0xff] %vm322, %v355
      %361 = vst.msk [vmem:[%s232 + $0x8] sm:$0xff] %vm322, %v357
      %362 = vrot.lane.b32.xlu0 %v314, 48
      %v363 = vpop.permute.xlu0 %362
      %364 = vrot.lane.b32.xlu0 %v319, 48
      %v365 = vpop.permute.xlu0 %364
      %s368 = scalar_lea.vmem %s232, 16
      %369 = vst.msk [vmem:[%s368] sm:$0xff] %vm322, %v363
      %370 = vst.msk [vmem:[%s368 + $0x8] sm:$0xff] %vm322, %v365
      %371 = vrot.lane.b32.xlu0 %v314, 32
      %v372 = vpop.permute.xlu0 %371
      %373 = vrot.lane.b32.xlu0 %v319, 32
      %v374 = vpop.permute.xlu0 %373
      %s377 = scalar_lea.vmem %s232, 32
      %378 = vst.msk [vmem:[%s377] sm:$0xff] %vm322, %v372
      %379 = vst.msk [vmem:[%s377 + $0x8] sm:$0xff] %vm322, %v374
      %380 = vrot.lane.b32.xlu0 %v314, 16
      %v381 = vpop.permute.xlu0 %380
      %382 = vrot.lane.b32.xlu0 %v319, 16
      %v383 = vpop.permute.xlu0 %382
      %s386 = scalar_lea.vmem %s232, 48
      %387 = vst.msk [vmem:[%s386] sm:$0xff] %vm322, %v381
      %388 = vst.msk [vmem:[%s386 + $0x8] sm:$0xff] %vm322, %v383
      %s389 = smul.u32 2, %s20
      %p390 = scmp.lt.s32.totalorder %s19, 1
      %s391 = scalar_select %p390, %s19, 1
      %p392 = scmp.lt.s32.totalorder %s389, 1
      %s393 = scalar_select %p392, %s389, 1
      %s394 = smul.addr %s391, 8
      %s395 = sadd.s32 %s393, %s394
      %s396 = smul.addr %s395, 8
      %s397 = scalar_lea.vmem %s2, %s396
      %s398 = smul.u32 2, %s20
      %p399 = scmp.lt.s32.totalorder %s19, 1
      %s400 = scalar_select %p399, %s19, 1
      %p401 = scmp.lt.s32.totalorder %s398, 1
      %s402 = scalar_select %p401, %s398, 1
      %s403 = smul.addr %s400, 8
      %s404 = sadd.s32 %s402, %s403
      %s405 = smul.addr %s404, 8
      %s406 = scalar_lea.vmem %s3, %s405
      // Predicated region
      $region29: #{decoder_block.6} parent=27 // pred_check
        %p407 = pneg %p96
      $region30: #{decoder_block.6} parent=27 // pred_check_branch
        %409 = sbr.rel (%p407) target = $region32
      $region31: #{decoder_block.6} parent=27 // pred_region
        %s410 = smul.u32 2, %s20
      $region32: #{decoder_block.6} parent=27 // pred_fallthru
        _
      // Predicated region
      $region33: #{decoder_block.6} parent=27 // pred_check
        %p411 = pneg %p124
      $region34: #{decoder_block.6} parent=27 // pred_check_branch
        %413 = sbr.rel (%p411) target = $region36
      $region35: #{decoder_block.6} parent=27 // pred_region
        %s414 = smul.u32 2, %s20
      $region36: #{decoder_block.6} parent=27 // pred_fallthru
        _
    $region28: #{decoder_block.6} parent=5 // pred_fallthru
      _
    %p415 = scmp.le.s32.totalorder 2, %s10
    // Predicated region
    $region37: #{decoder_block.6} parent=5 // pred_check
      %p416 = pneg %p415
    $region38: #{decoder_block.6} parent=5 // pred_check_branch
      %418 = sbr.rel (%p416) target = $region40
    $region39: #{decoder_block.6} parent=5 // pred_region
      %s419 = ssub.s32 %s10, 2
      // Predicated region
      $region41: #{decoder_block.6} parent=39 // pred_check
        %p420 = pneg %p102
      $region42: #{decoder_block.6} parent=39 // pred_check_branch
        %422 = sbr.rel (%p420) target = $region44
      $region43: #{decoder_block.6} parent=39 // pred_region
        %s423 = smul.u32 2, %s22
        %p424 = scmp.lt.s32.totalorder %s21, 1
        %s425 = scalar_select %p424, %s21, 1
        %p426 = scmp.lt.s32.totalorder %s423, 1
        %s427 = scalar_select %p426, %s423, 1
        %s428 = smul.addr %s425, 8
        %s429 = sadd.s32 %s427, %s428
        %s430 = smul.addr %s429, 8
        %s431 = scalar_lea.vmem %s2, %s430
      $region44: #{decoder_block.6} parent=39 // pred_fallthru
        _
      // Predicated region
      $region45: #{decoder_block.6} parent=39 // pred_check
        %p432 = pneg %p130
      $region46: #{decoder_block.6} parent=39 // pred_check_branch
        %434 = sbr.rel (%p432) target = $region48
      $region47: #{decoder_block.6} parent=39 // pred_region
        %s435 = smul.u32 2, %s22
        %p436 = scmp.lt.s32.totalorder %s21, 1
        %s437 = scalar_select %p436, %s21, 1
        %p438 = scmp.lt.s32.totalorder %s435, 1
        %s439 = scalar_select %p438, %s435, 1
        %s440 = smul.addr %s437, 8
        %s441 = sadd.s32 %s439, %s440
        %s442 = smul.addr %s441, 8
        %s443 = scalar_lea.vmem %s3, %s442
      $region48: #{decoder_block.6} parent=39 // pred_fallthru
        _
    $region40: #{decoder_block.6} parent=5 // pred_fallthru
      _
  $region6: #{decoder_block.6} parent=0 // loop_footer
    %s14 = sadd.s32 1, %s10
  $region7: #{decoder_block.6} parent=0 // loop_footer_branch
    %9 = sbr.rel target = $region3
  $region8: #{decoder_block.6} parent=0 // loop_exit
    _

// kernel: decoder_block.7
$region0: #{decoder_block.7}
  #allocation0 [shape = 'u32[]', space=smem, size = 0x4, offset = 0x4, fixed_abs, tag = 'smem constant byte address 0x4 - core index']
  #allocation1 [shape = 'u32[144,128]{1,0:T(1,128)}', space=vmem, size = 0x12000, scoped, tag = 'internal scratch']
  %s0 = inlined_call_operand.vmem [shape: f32[2,8,32], index: 0, kind: input, shape index: {}]
  %s1 = inlined_call_operand.vmem [shape: f32[32,64], index: 1, kind: input, shape index: {}]
  %s2 = inlined_call_operand.vmem [shape: f32[2,4,8,16], index: 2, kind: output, shape index: {}]
  %s3 = sld [smem:[#allocation0]]
  $region41: #{decoder_block.7} parent=0
    _
  %s5 = ssub.s32 1, %s3
  %s6 = scalar_select 0, %s5, %s3
  loop: start=0, step=1, limit=4
  $region2: #{decoder_block.7} parent=0 // loop_pre_header
    _
  $region3: #{decoder_block.7} parent=0 // loop_header
    %s8 = sphi 0, %s12
    %p9 = scmp.ge.s32.totalorder %s8, 4
    %s15 = sphi 0, %s27
    %s16 = sphi 0, %s23
    %s17 = sphi 0, %s15
    %s18 = sphi 0, %s16
    %s19 = sphi 0, %s17
    %s20 = sphi 0, %s18
    %s32 = sphi 0, %s34
    %s35 = sphi 0, %s32
    %s36 = sphi 0, %s35
    %s52 = sphi 0, %s36
    %s56 = sphi 0, %s56
    %s58 = sphi 0, %s56
    %s59 = sphi 0, %s58
    %s73 = sphi 0, %s59
    %s81 = sphi 0, %s83
    %s84 = sphi 0, %s81
    %s85 = sphi 0, %s84
    %s101 = sphi 0, %s85
  $region4: #{decoder_block.7} parent=0 // loop_header_branch
    %11 = sbr.rel (%p9) target = $region8
  $region5: #{decoder_block.7} parent=0 // loop_body
    %s13 = ssub.s32 %s8, 1
    %s14 = ssub.s32 %s8, 2
    %s21 = sadd.s32 1, %s16
    %p22 = scmp.ge.s32.totalorder %s21, 1
    %s23 = scalar_select %p22, 0, %s21
    %s24 = sadd.s32 1, %s15
    %s25 = scalar_select %p22, %s24, %s15
    %p26 = scmp.ge.s32.totalorder %s25, 2
    %s27 = scalar_select %p26, 0, %s25
    %s28 = ssub.s32 %s15, %s27
    %s29 = ssub.s32 %s16, %s23
    %s30 = sor.u32 %s28, %s29
    %p31 = scmp.eq.s32.totalorder %s30, 0
    %s33 = sadd.s32 %s32, 1
    %s34 = scalar_select %p31, %s32, %s33
    %p37 = pneg %p31
    %p38 = scmp.eq.s32.totalorder %s8, 1
    %p39 = por %p37, %p38
    %p40 = scmp.ne.s32.totalorder %s32, %s35
    %p41 = scmp.eq.s32.totalorder %s8, 0
    %p42 = por %p40, %p41
    %p43 = scmp.ne.s32.totalorder %s32, %s35
    %p44 = scmp.eq.s32.totalorder %s13, 1
    %p45 = por %p43, %p44
    %p46 = scmp.ne.s32.totalorder %s35, %s36
    %p47 = scmp.eq.s32.totalorder %s13, 0
    %p48 = por %p46, %p47
    %p49 = scmp.ne.s32.totalorder %s35, %s36
    %p50 = scmp.eq.s32.totalorder %s14, 1
    %p51 = por %p49, %p50
    %p53 = scmp.ne.s32.totalorder %s36, %s52
    %p54 = scmp.eq.s32.totalorder %s14, 0
    %p55 = por %p53, %p54
    %s57 = sadd.s32 %s56, 1
    %p60 = scmp.eq.s32.totalorder %s8, 1
    %p61 = scmp.ne.s32.totalorder %s56, %s58
    %p62 = scmp.eq.s32.totalorder %s8, 0
    %p63 = por %p61, %p62
    %p64 = scmp.ne.s32.totalorder %s56, %s58
    %p65 = scmp.eq.s32.totalorder %s13, 1
    %p66 = por %p64, %p65
    %p67 = scmp.ne.s32.totalorder %s58, %s59
    %p68 = scmp.eq.s32.totalorder %s13, 0
    %p69 = por %p67, %p68
    %p70 = scmp.ne.s32.totalorder %s58, %s59
    %p71 = scmp.eq.s32.totalorder %s14, 1
    %p72 = por %p70, %p71
    %p74 = scmp.ne.s32.totalorder %s59, %s73
    %p75 = scmp.eq.s32.totalorder %s14, 0
    %p76 = por %p74, %p75
    %s77 = ssub.s32 %s15, %s27
    %s78 = ssub.s32 %s16, %s23
    %s79 = sor.u32 %s77, %s78
    %p80 = scmp.eq.s32.totalorder %s79, 0
    %s82 = sadd.s32 %s81, 1
    %s83 = scalar_select %p80, %s81, %s82
    %p86 = pneg %p80
    %p87 = scmp.eq.s32.totalorder %s8, 1
    %p88 = por %p86, %p87
    %p89 = scmp.ne.s32.totalorder %s81, %s84
    %p90 = scmp.eq.s32.totalorder %s8, 0
    %p91 = por %p89, %p90
    %p92 = scmp.ne.s32.totalorder %s81, %s84
    %p93 = scmp.eq.s32.totalorder %s13, 1
    %p94 = por %p92, %p93
    %p95 = scmp.ne.s32.totalorder %s84, %s85
    %p96 = scmp.eq.s32.totalorder %s13, 0
    %p97 = por %p95, %p96
    %p98 = scmp.ne.s32.totalorder %s84, %s85
    %p99 = scmp.eq.s32.totalorder %s14, 1
    %p100 = por %p98, %p99
    %p102 = scmp.ne.s32.totalorder %s85, %s101
    %p103 = scmp.eq.s32.totalorder %s14, 0
    %p104 = por %p102, %p103
    %p105 = scmp.le.s32.totalorder 1, %s8
    %p106 = scmp.lt.s32.totalorder %s8, 3
    %p107 = pnand %p105, %p106
    %p108 = pneg %p107
    // Predicated region
    $region9: #{decoder_block.7} parent=5 // pred_check
      _
    $region10: #{decoder_block.7} parent=5 // pred_check_branch
      %110 = sbr.rel (%p107) target = $region12
    $region11: #{decoder_block.7} parent=5 // pred_region
      %s111 = ssub.s32 %s8, 1
      // Predicated region
      $region13: #{decoder_block.7} parent=11 // pred_check
        %p112 = pneg %p69
      $region14: #{decoder_block.7} parent=11 // pred_check_branch
        %114 = sbr.rel (%p112) target = $region16
      $region15: #{decoder_block.7} parent=11 // pred_region
        _
      $region16: #{decoder_block.7} parent=11 // pred_fallthru
        _
    $region12: #{decoder_block.7} parent=5 // pred_fallthru
      _
    %p115 = scmp.lt.s32.totalorder %s8, 2
    // Predicated region
    $region17: #{decoder_block.7} parent=5 // pred_check
      %p116 = pneg %p115
    $region18: #{decoder_block.7} parent=5 // pred_check_branch
      %118 = sbr.rel (%p116) target = $region20
    $region19: #{decoder_block.7} parent=5 // pred_region
      // Predicated region
      $region21: #{decoder_block.7} parent=19 // pred_check
        %p119 = pneg %p42
      $region22: #{decoder_block.7} parent=19 // pred_check_branch
        %121 = sbr.rel (%p119) target = $region24
      $region23: #{decoder_block.7} parent=19 // pred_region
        %p122 = scmp.lt.s32.totalorder %s15, 1
        %s123 = scalar_select %p122, %s15, 1
        %p124 = scmp.lt.s32.totalorder %s16, 0
        %s125 = scalar_select %p124, %s16, 0
        %s126 = sadd.s32 %s125, %s123
        %s127 = smul.addr %s126, 8
        %s128 = scalar_lea.vmem %s0, %s127
      $region24: #{decoder_block.7} parent=19 // pred_fallthru
        _
    $region20: #{decoder_block.7} parent=5 // pred_fallthru
      _
    %p129 = scmp.le.s32.totalorder 1, %s8
    %p130 = scmp.lt.s32.totalorder %s8, 3
    %p131 = pnand %p129, %p130
    %p132 = pneg %p131
    // Predicated region
    $region25: #{decoder_block.7} parent=5 // pred_check
      _
    $region26: #{decoder_block.7} parent=5 // pred_check_branch
      %134 = sbr.rel (%p131) target = $region28
    $region27: #{decoder_block.7} parent=5 // pred_region
      %s135 = ssub.s32 %s8, 1
      %p136 = scmp.lt.s32.totalorder %s17, 1
      %s137 = scalar_select %p136, %s17, 1
      %p138 = scmp.lt.s32.totalorder %s18, 0
      %s139 = scalar_select %p138, %s18, 0
      %s140 = sadd.s32 %s139, %s137
      %s141 = smul.addr %s140, 8
      %s142 = scalar_lea.vmem %s0, %s141
      %p143 = pneg %p48
      %p144 = pneg %p45
      %p145 = pneg %p69
      %p146 = pneg %p66
      %p147 = pneg %p97
      %p148 = pneg %p94
      %p149 = scmp.lt.s32.totalorder %s17, 1
      %s150 = scalar_select %p149, %s17, 1
      %p151 = scmp.lt.s32.totalorder %s18, 0
      %s152 = scalar_select %p151, %s18, 0
      %s153 = smul.addr %s150, 4
      %s154 = sadd.s32 %s152, %s153
      %s155 = smul.addr %s154, 8
      %s156 = scalar_lea.vmem %s2, %s155
      %p157 = scmp.lt.s32.totalorder %s17, 1
      %s158 = scalar_select %p157, %s17, 1
      %p159 = scmp.lt.s32.totalorder %s18, 0
      %s160 = scalar_select %p159, %s18, 0
      %s161 = sadd.s32 %s160, %s158
      %s162 = smul.addr %s161, 8
      %s163 = scalar_lea.vmem %s0, %s162
      %p164 = scmp.lt.s32.totalorder %s17, 1
      %s165 = scalar_select %p164, %s17, 1
      %p166 = scmp.lt.s32.totalorder %s18, 0
      %s167 = scalar_select %p166, %s18, 0
      %s168 = smul.addr %s165, 4
      %s169 = sadd.s32 %s167, %s168
      %s170 = smul.addr %s169, 8
      %s171 = scalar_lea.vmem %s2, %s170
      %v172 = vld [vmem:[%s163] sm:$0xff]
      %v173 = vld [vmem:[%s1] sm:$0xff]
      %v174 = vld [vmem:[%s1 + $0x8] sm:$0xff]
      %v175 = vld [vmem:[%s1 + $0x10] sm:$0xff]
      %v176 = vld [vmem:[%s1 + $0x18] sm:$0xff]
      %vm177 = vcmask 261120
      %v179 = vsel %vm177, %v172, 0
      %181 = vmatprep.subr.mxu0 0.0
      %182 = vmatpush1.msra.mxu0 0.0
      %183 = vmatprep.subr.mxu0 0.0
      %184 = vmatpush1.msra.mxu0 0.0
      %185 = vmatprep.subr.mxu0 0.0
      %186 = vmatpush1.msra.mxu0 0.0
      %187 = vmatprep.subr.mxu0 0.0
      %188 = vmatpush1.msra.mxu0 0.0
      %189 = vmatprep.subr.mxu0 0.0
      %190 = vmatpush1.msra.mxu0 0.0
      %191 = vmatprep.subr.mxu0 0.0
      %192 = vmatpush1.msra.mxu0 0.0
      %193 = vmatprep.subr.mxu0 0.0
      %194 = vmatpush1.msra.mxu0 0.0
      %195 = vmatprep.subr.mxu0 0.0
      %196 = vmatpush1.msra.mxu0 0.0
      %197 = vmatprep.subr.mxu0 0.0
      %198 = vmatpush1.msra.mxu0 0.0
      %199 = vmatprep.subr.mxu0 0.0
      %200 = vmatpush1.msra.mxu0 0.0
      %201 = vmatprep.subr.mxu0 0.0
      %202 = vmatpush1.msra.mxu0 0.0
      %203 = vmatprep.subr.mxu0 0.0
      %204 = vmatpush1.msra.mxu0 0.0
      %205 = vmatprep.subr.mxu0 0.0
      %206 = vmatpush1.msra.mxu0 %v176
      %207 = vmatprep.subr.mxu0 0.0
      %208 = vmatpush1.msra.mxu0 %v175
      %209 = vmatprep.subr.mxu0 0.0
      %210 = vmatpush1.msra.mxu0 %v174
      %211 = vmatprep.subr.mxu0 0.0
      %212 = vmatpush1.msra.mxu0 %v173
      %213 = vmatprep.subr.mxu0 0.0
      %214 = vmatpush2.msra.mxu0 0.0
      %215 = vmatprep.subr.mxu0 0.0
      %216 = vmatpush2.msra.mxu0 0.0
      %217 = vmatprep.subr.mxu0 0.0
      %218 = vmatpush2.msra.mxu0 0.0
      %219 = vmatprep.subr.mxu0 0.0
      %220 = vmatpush2.msra.mxu0 0.0
      %221 = vmatprep.subr.mxu0 0.0
      %222 = vmatpush2.msra.mxu0 0.0
      %223 = vmatprep.subr.mxu0 0.0
      %224 = vmatpush2.msra.mxu0 0.0
      %225 = vmatprep.subr.mxu0 0.0
      %226 = vmatpush2.msra.mxu0 0.0
      %227 = vmatprep.subr.mxu0 0.0
      %228 = vmatpush2.msra.mxu0 0.0
      %229 = vmatprep.subr.mxu0 0.0
      %230 = vmatpush2.msra.mxu0 0.0
      %231 = vmatprep.subr.mxu0 0.0
      %232 = vmatpush2.msra.mxu0 0.0
      %233 = vmatprep.subr.mxu0 0.0
      %234 = vmatpush2.msra.mxu0 0.0
      %235 = vmatprep.subr.mxu0 0.0
      %236 = vmatpush2.msra.mxu0 0.0
      %237 = vmatprep.subr.mxu0 0.0
      %238 = vmatpush2.msra.mxu0 0.0
      %239 = vmatprep.subr.mxu0 0.0
      %240 = vmatpush2.msra.mxu0 0.0
      %241 = vmatprep.subr.mxu0 0.0
      %242 = vmatpush2.msra.mxu0 0.0
      %243 = vmatprep.subr.mxu0 0.0
      %244 = vmatpush2.msra.mxu0 0.0
      %245 = vmatprep.mubr.f32.mxu0 0.0
      %246 = vmatmul.mubr.f32.gmra.mxu0 %v179
      %v247 = vpop.f32.mrf.mxu0
      %v248 = vadd.f32 0.0, %v247
      %v249 = vpop.f32.mrf.mxu0
      %250 = vdwg.mxu0
      %vm251 = vcmask 130048
      %252 = vst.msk [vmem:[%s171] sm:$0xff] %vm251, %v248
      %254 = vrot.lane.b32.xlu0 %v248, 112
      %v255 = vpop.permute.xlu0 %254
      %s257 = scalar_lea.vmem %s171, 8
      %258 = vst.msk [vmem:[%s257] sm:$0xff] %vm251, %v255
      %259 = vrot.lane.b32.xlu0 %v248, 96
      %v260 = vpop.permute.xlu0 %259
      %s262 = scalar_lea.vmem %s171, 16
      %263 = vst.msk [vmem:[%s262] sm:$0xff] %vm251, %v260
      %264 = vrot.lane.b32.xlu0 %v248, 80
      %v265 = vpop.permute.xlu0 %264
      %s267 = scalar_lea.vmem %s171, 24
      %268 = vst.msk [vmem:[%s267] sm:$0xff] %vm251, %v265
      %p269 = scmp.lt.s32.totalorder %s17, 1
      %s270 = scalar_select %p269, %s17, 1
      %p271 = scmp.lt.s32.totalorder %s18, 0
      %s272 = scalar_select %p271, %s18, 0
      %s273 = smul.addr %s270, 4
      %s274 = sadd.s32 %s272, %s273
      %s275 = smul.addr %s274, 8
      %s276 = scalar_lea.vmem %s2, %s275
      // Predicated region
      $region29: #{decoder_block.7} parent=27 // pred_check
        %p277 = pneg %p94
      $region30: #{decoder_block.7} parent=27 // pred_check_branch
        %279 = sbr.rel (%p277) target = $region32
      $region31: #{decoder_block.7} parent=27 // pred_region
        _
      $region32: #{decoder_block.7} parent=27 // pred_fallthru
        _
    $region28: #{decoder_block.7} parent=5 // pred_fallthru
      _
    %p280 = scmp.le.s32.totalorder 2, %s8
    // Predicated region
    $region33: #{decoder_block.7} parent=5 // pred_check
      %p281 = pneg %p280
    $region34: #{decoder_block.7} parent=5 // pred_check_branch
      %283 = sbr.rel (%p281) target = $region36
    $region35: #{decoder_block.7} parent=5 // pred_region
      %s284 = ssub.s32 %s8, 2
      // Predicated region
      $region37: #{decoder_block.7} parent=35 // pred_check
        %p285 = pneg %p100
      $region38: #{decoder_block.7} parent=35 // pred_check_branch
        %287 = sbr.rel (%p285) target = $region40
      $region39: #{decoder_block.7} parent=35 // pred_region
        %p288 = scmp.lt.s32.totalorder %s19, 1
        %s289 = scalar_select %p288, %s19, 1
        %p290 = scmp.lt.s32.totalorder %s20, 0
        %s291 = scalar_select %p290, %s20, 0
        %s292 = smul.addr %s289, 4
        %s293 = sadd.s32 %s291, %s292
        %s294 = smul.addr %s293, 8
        %s295 = scalar_lea.vmem %s2, %s294
      $region40: #{decoder_block.7} parent=35 // pred_fallthru
        _
    $region36: #{decoder_block.7} parent=5 // pred_fallthru
      _
  $region6: #{decoder_block.7} parent=0 // loop_footer
    %s12 = sadd.s32 1, %s8
  $region7: #{decoder_block.7} parent=0 // loop_footer_branch
    %7 = sbr.rel target = $region3
  $region8: #{decoder_block.7} parent=0 // loop_exit
    _

// kernel: decoder_block.10
$region0: #{decoder_block.10}
  #allocation0 [shape = 'u32[]', space=smem, size = 0x4, offset = 0x4, fixed_abs, tag = 'smem constant byte address 0x4 - core index']
  #allocation1 [shape = 'u32[144,128]{1,0:T(1,128)}', space=vmem, size = 0x12000, scoped, tag = 'internal scratch']
  %s0 = inlined_call_operand.vmem [shape: f32[2,4,8,16], index: 0, kind: input, shape index: {}]
  %s1 = inlined_call_operand.vmem [shape: f32[64,128], index: 1, kind: input, shape index: {}]
  %s2 = inlined_call_operand.vmem [shape: f32[2,8,128], index: 2, kind: input, shape index: {}]
  %s3 = inlined_call_operand.vmem [shape: f32[1,128], index: 3, kind: input, shape index: {}]
  %s4 = inlined_call_operand.vmem [shape: f32[1,128], index: 4, kind: input, shape index: {}]
  %s5 = inlined_call_operand.vmem [shape: f32[2,8,128], index: 5, kind: output, shape index: {}]
  %s6 = sld [smem:[#allocation0]]
  $region53: #{decoder_block.10} parent=0
    _
  %s8 = ssub.s32 1, %s6
  %s9 = scalar_select 0, %s8, %s6
  loop: start=0, step=1, limit=4
  $region2: #{decoder_block.10} parent=0 // loop_pre_header
    _
  $region3: #{decoder_block.10} parent=0 // loop_header
    %s11 = sphi 0, %s15
    %p12 = scmp.ge.s32.totalorder %s11, 4
    %s18 = sphi 0, %s30
    %s19 = sphi 0, %s26
    %s20 = sphi 0, %s18
    %s21 = sphi 0, %s19
    %s22 = sphi 0, %s20
    %s23 = sphi 0, %s21
    %s35 = sphi 0, %s37
    %s38 = sphi 0, %s35
    %s39 = sphi 0, %s38
    %s55 = sphi 0, %s39
    %s59 = sphi 0, %s59
    %s61 = sphi 0, %s59
    %s62 = sphi 0, %s61
    %s76 = sphi 0, %s62
    %s84 = sphi 0, %s86
    %s87 = sphi 0, %s84
    %s88 = sphi 0, %s87
    %s104 = sphi 0, %s88
    %s108 = sphi 0, %s108
    %s110 = sphi 0, %s108
    %s111 = sphi 0, %s110
    %s125 = sphi 0, %s111
    %s129 = sphi 0, %s129
    %s131 = sphi 0, %s129
    %s132 = sphi 0, %s131
    %s146 = sphi 0, %s132
    %s154 = sphi 0, %s156
    %s157 = sphi 0, %s154
    %s158 = sphi 0, %s157
    %s174 = sphi 0, %s158
  $region4: #{decoder_block.10} parent=0 // loop_header_branch
    %14 = sbr.rel (%p12) target = $region8
  $region5: #{decoder_block.10} parent=0 // loop_body
    %s16 = ssub.s32 %s11, 1
    %s17 = ssub.s32 %s11, 2
    %s24 = sadd.s32 1, %s19
    %p25 = scmp.ge.s32.totalorder %s24, 1
    %s26 = scalar_select %p25, 0, %s24
    %s27 = sadd.s32 1, %s18
    %s28 = scalar_select %p25, %s27, %s18
    %p29 = scmp.ge.s32.totalorder %s28, 2
    %s30 = scalar_select %p29, 0, %s28
    %s31 = ssub.s32 %s18, %s30
    %s32 = ssub.s32 %s19, %s26
    %s33 = sor.u32 %s31, %s32
    %p34 = scmp.eq.s32.totalorder %s33, 0
    %s36 = sadd.s32 %s35, 1
    %s37 = scalar_select %p34, %s35, %s36
    %p40 = pneg %p34
    %p41 = scmp.eq.s32.totalorder %s11, 1
    %p42 = por %p40, %p41
    %p43 = scmp.ne.s32.totalorder %s35, %s38
    %p44 = scmp.eq.s32.totalorder %s11, 0
    %p45 = por %p43, %p44
    %p46 = scmp.ne.s32.totalorder %s35, %s38
    %p47 = scmp.eq.s32.totalorder %s16, 1
    %p48 = por %p46, %p47
    %p49 = scmp.ne.s32.totalorder %s38, %s39
    %p50 = scmp.eq.s32.totalorder %s16, 0
    %p51 = por %p49, %p50
    %p52 = scmp.ne.s32.totalorder %s38, %s39
    %p53 = scmp.eq.s32.totalorder %s17, 1
    %p54 = por %p52, %p53
    %p56 = scmp.ne.s32.totalorder %s39, %s55
    %p57 = scmp.eq.s32.totalorder %s17, 0
    %p58 = por %p56, %p57
    %s60 = sadd.s32 %s59, 1
    %p63 = scmp.eq.s32.totalorder %s11, 1
    %p64 = scmp.ne.s32.totalorder %s59, %s61
    %p65 = scmp.eq.s32.totalorder %s11, 0
    %p66 = por %p64, %p65
    %p67 = scmp.ne.s32.totalorder %s59, %s61
    %p68 = scmp.eq.s32.totalorder %s16, 1
    %p69 = por %p67, %p68
    %p70 = scmp.ne.s32.totalorder %s61, %s62
    %p71 = scmp.eq.s32.totalorder %s16, 0
    %p72 = por %p70, %p71
    %p73 = scmp.ne.s32.totalorder %s61, %s62
    %p74 = scmp.eq.s32.totalorder %s17, 1
    %p75 = por %p73, %p74
    %p77 = scmp.ne.s32.totalorder %s62, %s76
    %p78 = scmp.eq.s32.totalorder %s17, 0
    %p79 = por %p77, %p78
    %s80 = ssub.s32 %s18, %s30
    %s81 = ssub.s32 %s19, %s26
    %s82 = sor.u32 %s80, %s81
    %p83 = scmp.eq.s32.totalorder %s82, 0
    %s85 = sadd.s32 %s84, 1
    %s86 = scalar_select %p83, %s84, %s85
    %p89 = pneg %p83
    %p90 = scmp.eq.s32.totalorder %s11, 1
    %p91 = por %p89, %p90
    %p92 = scmp.ne.s32.totalorder %s84, %s87
    %p93 = scmp.eq.s32.totalorder %s11, 0
    %p94 = por %p92, %p93
    %p95 = scmp.ne.s32.totalorder %s84, %s87
    %p96 = scmp.eq.s32.totalorder %s16, 1
    %p97 = por %p95, %p96
    %p98 = scmp.ne.s32.totalorder %s87, %s88
    %p99 = scmp.eq.s32.totalorder %s16, 0
    %p100 = por %p98, %p99
    %p101 = scmp.ne.s32.totalorder %s87, %s88
    %p102 = scmp.eq.s32.totalorder %s17, 1
    %p103 = por %p101, %p102
    %p105 = scmp.ne.s32.totalorder %s88, %s104
    %p106 = scmp.eq.s32.totalorder %s17, 0
    %p107 = por %p105, %p106
    %s109 = sadd.s32 %s108, 1
    %p112 = scmp.eq.s32.totalorder %s11, 1
    %p113 = scmp.ne.s32.totalorder %s108, %s110
    %p114 = scmp.eq.s32.totalorder %s11, 0
    %p115 = por %p113, %p114
    %p116 = scmp.ne.s32.totalorder %s108, %s110
    %p117 = scmp.eq.s32.totalorder %s16, 1
    %p118 = por %p116, %p117
    %p119 = scmp.ne.s32.totalorder %s110, %s111
    %p120 = scmp.eq.s32.totalorder %s16, 0
    %p121 = por %p119, %p120
    %p122 = scmp.ne.s32.totalorder %s110, %s111
    %p123 = scmp.eq.s32.totalorder %s17, 1
    %p124 = por %p122, %p123
    %p126 = scmp.ne.s32.totalorder %s111, %s125
    %p127 = scmp.eq.s32.totalorder %s17, 0
    %p128 = por %p126, %p127
    %s130 = sadd.s32 %s129, 1
    %p133 = scmp.eq.s32.totalorder %s11, 1
    %p134 = scmp.ne.s32.totalorder %s129, %s131
    %p135 = scmp.eq.s32.totalorder %s11, 0
    %p136 = por %p134, %p135
    %p137 = scmp.ne.s32.totalorder %s129, %s131
    %p138 = scmp.eq.s32.totalorder %s16, 1
    %p139 = por %p137, %p138
    %p140 = scmp.ne.s32.totalorder %s131, %s132
    %p141 = scmp.eq.s32.totalorder %s16, 0
    %p142 = por %p140, %p141
    %p143 = scmp.ne.s32.totalorder %s131, %s132
    %p144 = scmp.eq.s32.totalorder %s17, 1
    %p145 = por %p143, %p144
    %p147 = scmp.ne.s32.totalorder %s132, %s146
    %p148 = scmp.eq.s32.totalorder %s17, 0
    %p149 = por %p147, %p148
    %s150 = ssub.s32 %s18, %s30
    %s151 = ssub.s32 %s19, %s26
    %s152 = sor.u32 %s150, %s151
    %p153 = scmp.eq.s32.totalorder %s152, 0
    %s155 = sadd.s32 %s154, 1
    %s156 = scalar_select %p153, %s154, %s155
    %p159 = pneg %p153
    %p160 = scmp.eq.s32.totalorder %s11, 1
    %p161 = por %p159, %p160
    %p162 = scmp.ne.s32.totalorder %s154, %s157
    %p163 = scmp.eq.s32.totalorder %s11, 0
    %p164 = por %p162, %p163
    %p165 = scmp.ne.s32.totalorder %s154, %s157
    %p166 = scmp.eq.s32.totalorder %s16, 1
    %p167 = por %p165, %p166
    %p168 = scmp.ne.s32.totalorder %s157, %s158
    %p169 = scmp.eq.s32.totalorder %s16, 0
    %p170 = por %p168, %p169
    %p171 = scmp.ne.s32.totalorder %s157, %s158
    %p172 = scmp.eq.s32.totalorder %s17, 1
    %p173 = por %p171, %p172
    %p175 = scmp.ne.s32.totalorder %s158, %s174
    %p176 = scmp.eq.s32.totalorder %s17, 0
    %p177 = por %p175, %p176
    %p178 = scmp.le.s32.totalorder 1, %s11
    %p179 = scmp.lt.s32.totalorder %s11, 3
    %p180 = pnand %p178, %p179
    %p181 = pneg %p180
    // Predicated region
    $region9: #{decoder_block.10} parent=5 // pred_check
      _
    $region10: #{decoder_block.10} parent=5 // pred_check_branch
      %183 = sbr.rel (%p180) target = $region12
    $region11: #{decoder_block.10} parent=5 // pred_region
      %s184 = ssub.s32 %s11, 1
      // Predicated region
      $region13: #{decoder_block.10} parent=11 // pred_check
        %p185 = pneg %p72
      $region14: #{decoder_block.10} parent=11 // pred_check_branch
        %187 = sbr.rel (%p185) target = $region16
      $region15: #{decoder_block.10} parent=11 // pred_region
        _
      $region16: #{decoder_block.10} parent=11 // pred_fallthru
        _
      // Predicated region
      $region17: #{decoder_block.10} parent=11 // pred_check
        %p188 = pneg %p121
      $region18: #{decoder_block.10} parent=11 // pred_check_branch
        %190 = sbr.rel (%p188) target = $region20
      $region19: #{decoder_block.10} parent=11 // pred_region
        _
      $region20: #{decoder_block.10} parent=11 // pred_fallthru
        _
      // Predicated region
      $region21: #{decoder_block.10} parent=11 // pred_check
        %p191 = pneg %p142
      $region22: #{decoder_block.10} parent=11 // pred_check_branch
        %193 = sbr.rel (%p191) target = $region24
      $region23: #{decoder_block.10} parent=11 // pred_region
        _
      $region24: #{decoder_block.10} parent=11 // pred_fallthru
        _
    $region12: #{decoder_block.10} parent=5 // pred_fallthru
      _
    %p194 = scmp.lt.s32.totalorder %s11, 2
    // Predicated region
    $region25: #{decoder_block.10} parent=5 // pred_check
      %p195 = pneg %p194
    $region26: #{decoder_block.10} parent=5 // pred_check_branch
      %197 = sbr.rel (%p195) target = $region28
    $region27: #{decoder_block.10} parent=5 // pred_region
      // Predicated region
      $region29: #{decoder_block.10} parent=27 // pred_check
        %p198 = pneg %p45
      $region30: #{decoder_block.10} parent=27 // pred_check_branch
        %200 = sbr.rel (%p198) target = $region32
      $region31: #{decoder_block.10} parent=27 // pred_region
        %p201 = scmp.lt.s32.totalorder %s18, 1
        %s202 = scalar_select %p201, %s18, 1
        %p203 = scmp.lt.s32.totalorder %s19, 0
        %s204 = scalar_select %p203, %s19, 0
        %s205 = smul.addr %s202, 4
        %s206 = sadd.s32 %s204, %s205
        %s207 = smul.addr %s206, 8
        %s208 = scalar_lea.vmem %s0, %s207
      $region32: #{decoder_block.10} parent=27 // pred_fallthru
        _
      // Predicated region
      $region33: #{decoder_block.10} parent=27 // pred_check
        %p209 = pneg %p94
      $region34: #{decoder_block.10} parent=27 // pred_check_branch
        %211 = sbr.rel (%p209) target = $region36
      $region35: #{decoder_block.10} parent=27 // pred_region
        %p212 = scmp.lt.s32.totalorder %s18, 1
        %s213 = scalar_select %p212, %s18, 1
        %p214 = scmp.lt.s32.totalorder %s19, 0
        %s215 = scalar_select %p214, %s19, 0
        %s216 = sadd.s32 %s215, %s213
        %s217 = smul.addr %s216, 8
        %s218 = scalar_lea.vmem %s2, %s217
      $region36: #{decoder_block.10} parent=27 // pred_fallthru
        _
    $region28: #{decoder_block.10} parent=5 // pred_fallthru
      _
    %p219 = scmp.le.s32.totalorder 1, %s11
    %p220 = scmp.lt.s32.totalorder %s11, 3
    %p221 = pnand %p219, %p220
    %p222 = pneg %p221
    // Predicated region
    $region37: #{decoder_block.10} parent=5 // pred_check
      _
    $region38: #{decoder_block.10} parent=5 // pred_check_branch
      %224 = sbr.rel (%p221) target = $region40
    $region39: #{decoder_block.10} parent=5 // pred_region
      %s225 = ssub.s32 %s11, 1
      %p226 = scmp.lt.s32.totalorder %s20, 1
      %s227 = scalar_select %p226, %s20, 1
      %p228 = scmp.lt.s32.totalorder %s21, 0
      %s229 = scalar_select %p228, %s21, 0
      %s230 = smul.addr %s227, 4
      %s231 = sadd.s32 %s229, %s230
      %s232 = smul.addr %s231, 8
      %s233 = scalar_lea.vmem %s0, %s232
      %p234 = pneg %p51
      %p235 = pneg %p48
      %p236 = pneg %p72
      %p237 = pneg %p69
      %p238 = scmp.lt.s32.totalorder %s20, 1
      %s239 = scalar_select %p238, %s20, 1
      %p240 = scmp.lt.s32.totalorder %s21, 0
      %s241 = scalar_select %p240, %s21, 0
      %s242 = sadd.s32 %s241, %s239
      %s243 = smul.addr %s242, 8
      %s244 = scalar_lea.vmem %s2, %s243
      %p245 = pneg %p100
      %p246 = pneg %p97
      %p247 = pneg %p121
      %p248 = pneg %p118
      %p249 = pneg %p142
      %p250 = pneg %p139
      %p251 = pneg %p170
      %p252 = pneg %p167
      %p253 = scmp.lt.s32.totalorder %s20, 1
      %s254 = scalar_select %p253, %s20, 1
      %p255 = scmp.lt.s32.totalorder %s21, 0
      %s256 = scalar_select %p255, %s21, 0
      %s257 = sadd.s32 %s256, %s254
      %s258 = smul.addr %s257, 8
      %s259 = scalar_lea.vmem %s5, %s258
      %p260 = scmp.lt.s32.totalorder %s20, 1
      %s261 = scalar_select %p260, %s20, 1
      %p262 = scmp.lt.s32.totalorder %s21, 0
      %s263 = scalar_select %p262, %s21, 0
      %s264 = smul.addr %s261, 4
      %s265 = sadd.s32 %s263, %s264
      %s266 = smul.addr %s265, 8
      %s267 = scalar_lea.vmem %s0, %s266
      %p268 = scmp.lt.s32.totalorder %s20, 1
      %s269 = scalar_select %p268, %s20, 1
      %p270 = scmp.lt.s32.totalorder %s21, 0
      %s271 = scalar_select %p270, %s21, 0
      %s272 = sadd.s32 %s271, %s269
      %s273 = smul.addr %s272, 8
      %s274 = scalar_lea.vmem %s2, %s273
      %p275 = scmp.lt.s32.totalorder %s20, 1
      %s276 = scalar_select %p275, %s20, 1
      %p277 = scmp.lt.s32.totalorder %s21, 0
      %s278 = scalar_select %p277, %s21, 0
      %s279 = sadd.s32 %s278, %s276
      %s280 = smul.addr %s279, 8
      %s281 = scalar_lea.vmem %s5, %s280
      %v282 = vld [vmem:[%s267] sm:$0xff]
      %s283 = scalar_lea.vmem %s267, 8
      %v284 = vld [vmem:[%s283] sm:$0xff]
      %s285 = scalar_lea.vmem %s267, 16
      %v286 = vld [vmem:[%s285] sm:$0xff]
      %s287 = scalar_lea.vmem %s267, 24
      %v288 = vld [vmem:[%s287] sm:$0xff]
      %290 = vrot.lane.b32.xlu0 %v284, 16
      %v291 = vpop.permute.xlu0 %290
      %294 = vrot.lane.b32.xlu0 %v286, 32
      %v295 = vpop.permute.xlu0 %294
      %298 = vrot.lane.b32.xlu0 %v288, 48
      %v299 = vpop.permute.xlu0 %298
      %vm301 = vcmask 130048
      %v302 = vsel %vm301, %v282, %v291
      %vm303 = vcmask 261120
      %v304 = vsel %vm303, %v302, %v295
      %vm305 = vcmask 392192
      %v306 = vsel %vm305, %v304, %v299
      %v307 = vld [vmem:[%s1] sm:$0xff]
      %v308 = vld [vmem:[%s1 + $0x8] sm:$0xff]
      %v309 = vld [vmem:[%s1 + $0x10] sm:$0xff]
      %v310 = vld [vmem:[%s1 + $0x18] sm:$0xff]
      %v311 = vld [vmem:[%s1 + $0x20] sm:$0xff]
      %v312 = vld [vmem:[%s1 + $0x28] sm:$0xff]
      %v313 = vld [vmem:[%s1 + $0x30] sm:$0xff]
      %v314 = vld [vmem:[%s1 + $0x38] sm:$0xff]
      %vm315 = vcmask 523264
      %v317 = vsel %vm315, %v306, 0
      %319 = vmatprep.subr.mxu0 0.0
      %320 = vmatpush1.msra.mxu0 0.0
      %321 = vmatprep.subr.mxu0 0.0
      %322 = vmatpush1.msra.mxu0 0.0
      %323 = vmatprep.subr.mxu0 0.0
      %324 = vmatpush1.msra.mxu0 0.0
      %325 = vmatprep.subr.mxu0 0.0
      %326 = vmatpush1.msra.mxu0 0.0
      %327 = vmatprep.subr.mxu0 0.0
      %328 = vmatpush1.msra.mxu0 0.0
      %329 = vmatprep.subr.mxu0 0.0
      %330 = vmatpush1.msra.mxu0 0.0
      %331 = vmatprep.subr.mxu0 0.0
      %332 = vmatpush1.msra.mxu0 0.0
      %333 = vmatprep.subr.mxu0 0.0
      %334 = vmatpush1.msra.mxu0 0.0
      %335 = vmatprep.subr.mxu0 0.0
      %336 = vmatpush1.msra.mxu0 %v314
      %337 = vmatprep.subr.mxu0 0.0
      %338 = vmatpush1.msra.mxu0 %v313
      %339 = vmatprep.subr.mxu0 0.0
      %340 = vmatpush1.msra.mxu0 %v312
      %341 = vmatprep.subr.mxu0 0.0
      %342 = vmatpush1.msra.mxu0 %v311
      %343 = vmatprep.subr.mxu0 0.0
      %344 = vmatpush1.msra.mxu0 %v310
      %345 = vmatprep.subr.mxu0 0.0
      %346 = vmatpush1.msra.mxu0 %v309
      %347 = vmatprep.subr.mxu0 0.0
      %348 = vmatpush1.msra.mxu0 %v308
      %349 = vmatprep.subr.mxu0 0.0
      %350 = vmatpush1.msra.mxu0 %v307
      %351 = vmatprep.subr.mxu0 0.0
      %352 = vmatpush2.msra.mxu0 0.0
      %353 = vmatprep.subr.mxu0 0.0
      %354 = vmatpush2.msra.mxu0 0.0
      %355 = vmatprep.subr.mxu0 0.0
      %356 = vmatpush2.msra.mxu0 0.0
      %357 = vmatprep.subr.mxu0 0.0
      %358 = vmatpush2.msra.mxu0 0.0
      %359 = vmatprep.subr.mxu0 0.0
      %360 = vmatpush2.msra.mxu0 0.0
      %361 = vmatprep.subr.mxu0 0.0
      %362 = vmatpush2.msra.mxu0 0.0
      %363 = vmatprep.subr.mxu0 0.0
      %364 = vmatpush2.msra.mxu0 0.0
      %365 = vmatprep.subr.mxu0 0.0
      %366 = vmatpush2.msra.mxu0 0.0
      %367 = vmatprep.subr.mxu0 0.0
      %368 = vmatpush2.msra.mxu0 0.0
      %369 = vmatprep.subr.mxu0 0.0
      %370 = vmatpush2.msra.mxu0 0.0
      %371 = vmatprep.subr.mxu0 0.0
      %372 = vmatpush2.msra.mxu0 0.0
      %373 = vmatprep.subr.mxu0 0.0
      %374 = vmatpush2.msra.mxu0 0.0
      %375 = vmatprep.subr.mxu0 0.0
      %376 = vmatpush2.msra.mxu0 0.0
      %377 = vmatprep.subr.mxu0 0.0
      %378 = vmatpush2.msra.mxu0 0.0
      %379 = vmatprep.subr.mxu0 0.0
      %380 = vmatpush2.msra.mxu0 0.0
      %381 = vmatprep.subr.mxu0 0.0
      %382 = vmatpush2.msra.mxu0 0.0
      %383 = vmatprep.mubr.f32.mxu0 0.0
      %384 = vmatmul.mubr.f32.gmra.mxu0 %v317
      %v385 = vpop.f32.mrf.mxu0
      %v386 = vadd.f32 0.0, %v385
      %v387 = vpop.f32.mrf.mxu0
      %388 = vdwg.mxu0
      %v389 = vld [vmem:[%s274] sm:$0xff]
      %v390 = vadd.f32 %v389, %v386
      %v391 = vld [vmem:[%s3] sm:$0x1]
      %v392 = vld [vmem:[%s4] sm:$0x1]
      %393 = vadd.xlane.f32.xlu0 %v390
      %v394 = vpop.xlane.xlu0 %393
      %v395 = vmul.f32 %v394, 0.03125
      %v396 = vsub.f32 %v390, %v395
      %v397 = vlaneseq
      %v398 = vand.u32 %v397, 127
      %vm399 = vcmp.lt.s32.totalorder %v398, 32
      %v400 = vsel %vm399, 1, 0
      %vm401 = vcmp.eq.s32.totalorder %v400, 1
      %v402 = vsel %vm401, %v396, 0.0
      %v403 = vmul.f32 %v402, %v402
      %404 = vadd.xlane.f32.xlu0 %v403
      %v405 = vpop.xlane.xlu0 %404
      %v406 = vmul.f32 %v405, 0.03125
      %v407 = vadd.f32 %v406, 1e-05
      %v408 = vrsqrt.pop %v407
      %v409 = vmul.f32 %v402, %v408
      %v411 = vlaneseq
      %v412 = vshrl.u32 %v411, 7
      %v413 = vsub.s32 0, %v412
      %v414 = vrot.slane %v391, %v413
      %v416 = vmul.f32 %v409, %v414
      %v418 = vlaneseq
      %v419 = vshrl.u32 %v418, 7
      %v420 = vsub.s32 0, %v419
      %v421 = vrot.slane %v392, %v420
      %v423 = vadd.f32 %v416, %v421
      %424 = vst [vmem:[%s281] sm:$0xff] %v423
      %p425 = scmp.lt.s32.totalorder %s20, 1
      %s426 = scalar_select %p425, %s20, 1
      %p427 = scmp.lt.s32.totalorder %s21, 0
      %s428 = scalar_select %p427, %s21, 0
      %s429 = sadd.s32 %s428, %s426
      %s430 = smul.addr %s429, 8
      %s431 = scalar_lea.vmem %s5, %s430
      // Predicated region
      $region41: #{decoder_block.10} parent=39 // pred_check
        %p432 = pneg %p167
      $region42: #{decoder_block.10} parent=39 // pred_check_branch
        %434 = sbr.rel (%p432) target = $region44
      $region43: #{decoder_block.10} parent=39 // pred_region
        _
      $region44: #{decoder_block.10} parent=39 // pred_fallthru
        _
    $region40: #{decoder_block.10} parent=5 // pred_fallthru
      _
    %p435 = scmp.le.s32.totalorder 2, %s11
    // Predicated region
    $region45: #{decoder_block.10} parent=5 // pred_check
      %p436 = pneg %p435
    $region46: #{decoder_block.10} parent=5 // pred_check_branch
      %438 = sbr.rel (%p436) target = $region48
    $region47: #{decoder_block.10} parent=5 // pred_region
      %s439 = ssub.s32 %s11, 2
      // Predicated region
      $region49: #{decoder_block.10} parent=47 // pred_check
        %p440 = pneg %p173
      $region50: #{decoder_block.10} parent=47 // pred_check_branch
        %442 = sbr.rel (%p440) target = $region52
      $region51: #{decoder_block.10} parent=47 // pred_region
        %p443 = scmp.lt.s32.totalorder %s22, 1
        %s444 = scalar_select %p443, %s22, 1
        %p445 = scmp.lt.s32.totalorder %s23, 0
        %s446 = scalar_select %p445, %s23, 0
        %s447 = sadd.s32 %s446, %s444
        %s448 = smul.addr %s447, 8
        %s449 = scalar_lea.vmem %s5, %s448
      $region52: #{decoder_block.10} parent=47 // pred_fallthru
        _
    $region48: #{decoder_block.10} parent=5 // pred_fallthru
      _
  $region6: #{decoder_block.10} parent=0 // loop_footer
    %s15 = sadd.s32 1, %s11
  $region7: #{decoder_block.10} parent=0 // loop_footer_branch
    %10 = sbr.rel target = $region3
  $region8: #{decoder_block.10} parent=0 // loop_exit
    _

// kernel: decoder_block.11
$region0: #{decoder_block.11}
  #allocation0 [shape = 'u32[]', space=smem, size = 0x4, offset = 0x4, fixed_abs, tag = 'smem constant byte address 0x4 - core index']
  #allocation1 [shape = 'u32[144,128]{1,0:T(1,128)}', space=vmem, size = 0x12000, scoped, tag = 'internal scratch']
  %s0 = inlined_call_operand.vmem [shape: f32[16,128], index: 0, kind: input, shape index: {}]
  %s1 = inlined_call_operand.vmem [shape: f32[128,128], index: 1, kind: input, shape index: {}]
  %s2 = inlined_call_operand.vmem [shape: f32[1,128], index: 2, kind: input, shape index: {}]
  %s3 = inlined_call_operand.vmem [shape: f32[128,128], index: 3, kind: input, shape index: {}]
  %s4 = inlined_call_operand.vmem [shape: f32[1,128], index: 4, kind: input, shape index: {}]
  %s5 = inlined_call_operand.vmem [shape: f32[1,128], index: 5, kind: input, shape index: {}]
  %s6 = inlined_call_operand.vmem [shape: f32[1,128], index: 6, kind: input, shape index: {}]
  %s7 = inlined_call_operand.vmem [shape: f32[16,128], index: 7, kind: output, shape index: {}]
  %s8 = sld [smem:[#allocation0]]
  $region38: #{decoder_block.11} parent=0
    _
  %s10 = ssub.s32 1, %s8
  %s11 = scalar_select 0, %s10, %s8
  // Predicated region
  $region2: #{decoder_block.11} parent=0 // pred_check
    _
  $region3: #{decoder_block.11} parent=0 // pred_check_branch
    %13 = sbr.rel (0) target = $region5
  $region4: #{decoder_block.11} parent=0 // pred_region
    _
  $region5: #{decoder_block.11} parent=0 // pred_fallthru
    _
  // Predicated region
  $region6: #{decoder_block.11} parent=0 // pred_check
    _
  $region7: #{decoder_block.11} parent=0 // pred_check_branch
    %15 = sbr.rel (0) target = $region9
  $region8: #{decoder_block.11} parent=0 // pred_region
    _
  $region9: #{decoder_block.11} parent=0 // pred_fallthru
    _
  // Predicated region
  $region10: #{decoder_block.11} parent=0 // pred_check
    _
  $region11: #{decoder_block.11} parent=0 // pred_check_branch
    %17 = sbr.rel (0) target = $region13
  $region12: #{decoder_block.11} parent=0 // pred_region
    _
  $region13: #{decoder_block.11} parent=0 // pred_fallthru
    _
  // Predicated region
  $region14: #{decoder_block.11} parent=0 // pred_check
    _
  $region15: #{decoder_block.11} parent=0 // pred_check_branch
    %19 = sbr.rel (0) target = $region17
  $region16: #{decoder_block.11} parent=0 // pred_region
    _
  $region17: #{decoder_block.11} parent=0 // pred_fallthru
    _
  // Predicated region
  $region18: #{decoder_block.11} parent=0 // pred_check
    _
  $region19: #{decoder_block.11} parent=0 // pred_check_branch
    %21 = sbr.rel (0) target = $region21
  $region20: #{decoder_block.11} parent=0 // pred_region
    _
  $region21: #{decoder_block.11} parent=0 // pred_fallthru
    _
  // Predicated region
  $region22: #{decoder_block.11} parent=0 // pred_check
    _
  $region23: #{decoder_block.11} parent=0 // pred_check_branch
    %23 = sbr.rel (0) target = $region25
  $region24: #{decoder_block.11} parent=0 // pred_region
    _
  $region25: #{decoder_block.11} parent=0 // pred_fallthru
    _
  // Predicated region
  $region26: #{decoder_block.11} parent=0 // pred_check
    _
  $region27: #{decoder_block.11} parent=0 // pred_check_branch
    %25 = sbr.rel (0) target = $region29
  $region28: #{decoder_block.11} parent=0 // pred_region
    _
  $region29: #{decoder_block.11} parent=0 // pred_fallthru
    _
  %v26 = vld [vmem:[%s0] sm:$0xff]
  %v27 = vld [vmem:[%s0 + $0x8] sm:$0xff]
  %v28 = vld [vmem:[%s1] sm:$0xff]
  %v29 = vld [vmem:[%s1 + $0x8] sm:$0xff]
  %v30 = vld [vmem:[%s1 + $0x10] sm:$0xff]
  %v31 = vld [vmem:[%s1 + $0x18] sm:$0xff]
  %v32 = vld [vmem:[%s1 + $0x20] sm:$0xff]
  %v33 = vld [vmem:[%s1 + $0x28] sm:$0xff]
  %v34 = vld [vmem:[%s1 + $0x30] sm:$0xff]
  %v35 = vld [vmem:[%s1 + $0x38] sm:$0xff]
  %v36 = vld [vmem:[%s1 + $0x40] sm:$0xff]
  %v37 = vld [vmem:[%s1 + $0x48] sm:$0xff]
  %v38 = vld [vmem:[%s1 + $0x50] sm:$0xff]
  %v39 = vld [vmem:[%s1 + $0x58] sm:$0xff]
  %v40 = vld [vmem:[%s1 + $0x60] sm:$0xff]
  %v41 = vld [vmem:[%s1 + $0x68] sm:$0xff]
  %v42 = vld [vmem:[%s1 + $0x70] sm:$0xff]
  %v43 = vld [vmem:[%s1 + $0x78] sm:$0xff]
  %v44 = vld [vmem:[%s2] sm:$0x1]
  %v46 = vlaneseq
  %v47 = vshrl.u32 %v46, 7
  %v48 = vsub.s32 0, %v47
  %v49 = vrot.slane %v44, %v48
  %51 = vmatprep.subr.mxu0 0.0
  %52 = vmatpush1.msra.mxu0 %v43
  %53 = vmatprep.subr.mxu0 0.0
  %54 = vmatpush1.msra.mxu0 %v42
  %55 = vmatprep.subr.mxu0 0.0
  %56 = vmatpush1.msra.mxu0 %v41
  %57 = vmatprep.subr.mxu0 0.0
  %58 = vmatpush1.msra.mxu0 %v40
  %59 = vmatprep.subr.mxu0 0.0
  %60 = vmatpush1.msra.mxu0 %v39
  %61 = vmatprep.subr.mxu0 0.0
  %62 = vmatpush1.msra.mxu0 %v38
  %63 = vmatprep.subr.mxu0 0.0
  %64 = vmatpush1.msra.mxu0 %v37
  %65 = vmatprep.subr.mxu0 0.0
  %66 = vmatpush1.msra.mxu0 %v36
  %67 = vmatprep.subr.mxu0 0.0
  %68 = vmatpush1.msra.mxu0 %v35
  %69 = vmatprep.subr.mxu0 0.0
  %70 = vmatpush1.msra.mxu0 %v34
  %71 = vmatprep.subr.mxu0 0.0
  %72 = vmatpush1.msra.mxu0 %v33
  %73 = vmatprep.subr.mxu0 0.0
  %74 = vmatpush1.msra.mxu0 %v32
  %75 = vmatprep.subr.mxu0 0.0
  %76 = vmatpush1.msra.mxu0 %v31
  %77 = vmatprep.subr.mxu0 0.0
  %78 = vmatpush1.msra.mxu0 %v30
  %79 = vmatprep.subr.mxu0 0.0
  %80 = vmatpush1.msra.mxu0 %v29
  %81 = vmatprep.subr.mxu0 0.0
  %82 = vmatpush1.msra.mxu0 %v28
  %83 = vmatprep.subr.mxu0 0.0
  %84 = vmatpush2.msra.mxu0 0.0
  %85 = vmatprep.subr.mxu0 0.0
  %86 = vmatpush2.msra.mxu0 0.0
  %87 = vmatprep.subr.mxu0 0.0
  %88 = vmatpush2.msra.mxu0 0.0
  %89 = vmatprep.subr.mxu0 0.0
  %90 = vmatpush2.msra.mxu0 0.0
  %91 = vmatprep.subr.mxu0 0.0
  %92 = vmatpush2.msra.mxu0 0.0
  %93 = vmatprep.subr.mxu0 0.0
  %94 = vmatpush2.msra.mxu0 0.0
  %95 = vmatprep.subr.mxu0 0.0
  %96 = vmatpush2.msra.mxu0 0.0
  %97 = vmatprep.subr.mxu0 0.0
  %98 = vmatpush2.msra.mxu0 0.0
  %99 = vmatprep.subr.mxu0 0.0
  %100 = vmatpush2.msra.mxu0 0.0
  %101 = vmatprep.subr.mxu0 0.0
  %102 = vmatpush2.msra.mxu0 0.0
  %103 = vmatprep.subr.mxu0 0.0
  %104 = vmatpush2.msra.mxu0 0.0
  %105 = vmatprep.subr.mxu0 0.0
  %106 = vmatpush2.msra.mxu0 0.0
  %107 = vmatprep.subr.mxu0 0.0
  %108 = vmatpush2.msra.mxu0 0.0
  %109 = vmatprep.subr.mxu0 0.0
  %110 = vmatpush2.msra.mxu0 0.0
  %111 = vmatprep.subr.mxu0 0.0
  %112 = vmatpush2.msra.mxu0 0.0
  %113 = vmatprep.subr.mxu0 0.0
  %114 = vmatpush2.msra.mxu0 0.0
  %115 = vmatprep.mubr.f32.mxu0 0.0
  %116 = vmatmul.mubr.f32.gmra.mxu0 %v26
  %v117 = vpop.f32.mrf.mxu0
  %v118 = vadd.f32 %v49, %v117
  %v119 = vpop.f32.mrf.mxu0
  %120 = vmatprep.mubr.f32.mxu0 0.0
  %121 = vmatmul.mubr.f32.gmra.mxu0 %v27
  %v122 = vpop.f32.mrf.mxu0
  %v123 = vadd.f32 %v49, %v122
  %v124 = vpop.f32.mrf.mxu0
  %125 = vdwg.mxu0
  %v126 = vmax.f32 %v118, 0.0
  %v127 = vmax.f32 %v123, 0.0
  %v128 = vld [vmem:[%s3] sm:$0xff]
  %v129 = vld [vmem:[%s3 + $0x8] sm:$0xff]
  %v130 = vld [vmem:[%s3 + $0x10] sm:$0xff]
  %v131 = vld [vmem:[%s3 + $0x18] sm:$0xff]
  %v132 = vld [vmem:[%s3 + $0x20] sm:$0xff]
  %v133 = vld [vmem:[%s3 + $0x28] sm:$0xff]
  %v134 = vld [vmem:[%s3 + $0x30] sm:$0xff]
  %v135 = vld [vmem:[%s3 + $0x38] sm:$0xff]
  %v136 = vld [vmem:[%s3 + $0x40] sm:$0xff]
  %v137 = vld [vmem:[%s3 + $0x48] sm:$0xff]
  %v138 = vld [vmem:[%s3 + $0x50] sm:$0xff]
  %v139 = vld [vmem:[%s3 + $0x58] sm:$0xff]
  %v140 = vld [vmem:[%s3 + $0x60] sm:$0xff]
  %v141 = vld [vmem:[%s3 + $0x68] sm:$0xff]
  %v142 = vld [vmem:[%s3 + $0x70] sm:$0xff]
  %v143 = vld [vmem:[%s3 + $0x78] sm:$0xff]
  %v144 = vld [vmem:[%s4] sm:$0x1]
  %v146 = vlaneseq
  %v147 = vshrl.u32 %v146, 7
  %v148 = vsub.s32 0, %v147
  %v149 = vrot.slane %v144, %v148
  %151 = vmatprep.subr.mxu0 0.0
  %152 = vmatpush1.msra.mxu0 %v143
  %153 = vmatprep.subr.mxu0 0.0
  %154 = vmatpush1.msra.mxu0 %v142
  %155 = vmatprep.subr.mxu0 0.0
  %156 = vmatpush1.msra.mxu0 %v141
  %157 = vmatprep.subr.mxu0 0.0
  %158 = vmatpush1.msra.mxu0 %v140
  %159 = vmatprep.subr.mxu0 0.0
  %160 = vmatpush1.msra.mxu0 %v139
  %161 = vmatprep.subr.mxu0 0.0
  %162 = vmatpush1.msra.mxu0 %v138
  %163 = vmatprep.subr.mxu0 0.0
  %164 = vmatpush1.msra.mxu0 %v137
  %165 = vmatprep.subr.mxu0 0.0
  %166 = vmatpush1.msra.mxu0 %v136
  %167 = vmatprep.subr.mxu0 0.0
  %168 = vmatpush1.msra.mxu0 %v135
  %169 = vmatprep.subr.mxu0 0.0
  %170 = vmatpush1.msra.mxu0 %v134
  %171 = vmatprep.subr.mxu0 0.0
  %172 = vmatpush1.msra.mxu0 %v133
  %173 = vmatprep.subr.mxu0 0.0
  %174 = vmatpush1.msra.mxu0 %v132
  %175 = vmatprep.subr.mxu0 0.0
  %176 = vmatpush1.msra.mxu0 %v131
  %177 = vmatprep.subr.mxu0 0.0
  %178 = vmatpush1.msra.mxu0 %v130
  %179 = vmatprep.subr.mxu0 0.0
  %180 = vmatpush1.msra.mxu0 %v129
  %181 = vmatprep.subr.mxu0 0.0
  %182 = vmatpush1.msra.mxu0 %v128
  %183 = vmatprep.subr.mxu0 0.0
  %184 = vmatpush2.msra.mxu0 0.0
  %185 = vmatprep.subr.mxu0 0.0
  %186 = vmatpush2.msra.mxu0 0.0
  %187 = vmatprep.subr.mxu0 0.0
  %188 = vmatpush2.msra.mxu0 0.0
  %189 = vmatprep.subr.mxu0 0.0
  %190 = vmatpush2.msra.mxu0 0.0
  %191 = vmatprep.subr.mxu0 0.0
  %192 = vmatpush2.msra.mxu0 0.0
  %193 = vmatprep.subr.mxu0 0.0
  %194 = vmatpush2.msra.mxu0 0.0
  %195 = vmatprep.subr.mxu0 0.0
  %196 = vmatpush2.msra.mxu0 0.0
  %197 = vmatprep.subr.mxu0 0.0
  %198 = vmatpush2.msra.mxu0 0.0
  %199 = vmatprep.subr.mxu0 0.0
  %200 = vmatpush2.msra.mxu0 0.0
  %201 = vmatprep.subr.mxu0 0.0
  %202 = vmatpush2.msra.mxu0 0.0
  %203 = vmatprep.subr.mxu0 0.0
  %204 = vmatpush2.msra.mxu0 0.0
  %205 = vmatprep.subr.mxu0 0.0
  %206 = vmatpush2.msra.mxu0 0.0
  %207 = vmatprep.subr.mxu0 0.0
  %208 = vmatpush2.msra.mxu0 0.0
  %209 = vmatprep.subr.mxu0 0.0
  %210 = vmatpush2.msra.mxu0 0.0
  %211 = vmatprep.subr.mxu0 0.0
  %212 = vmatpush2.msra.mxu0 0.0
  %213 = vmatprep.subr.mxu0 0.0
  %214 = vmatpush2.msra.mxu0 0.0
  %215 = vmatprep.mubr.f32.mxu0 0.0
  %216 = vmatmul.mubr.f32.gmra.mxu0 %v126
  %v217 = vpop.f32.mrf.mxu0
  %v218 = vadd.f32 %v149, %v217
  %v219 = vpop.f32.mrf.mxu0
  %220 = vmatprep.mubr.f32.mxu0 0.0
  %221 = vmatmul.mubr.f32.gmra.mxu0 %v127
  %v222 = vpop.f32.mrf.mxu0
  %v223 = vadd.f32 %v149, %v222
  %v224 = vpop.f32.mrf.mxu0
  %225 = vdwg.mxu0
  %v226 = vadd.f32 %v26, %v218
  %v227 = vadd.f32 %v27, %v223
  %v228 = vld [vmem:[%s5] sm:$0x1]
  %v229 = vld [vmem:[%s6] sm:$0x1]
  %230 = vadd.xlane.f32.xlu0 %v226
  %v231 = vpop.xlane.xlu0 %230
  %232 = vadd.xlane.f32.xlu0 %v227
  %v233 = vpop.xlane.xlu0 %232
  %v234 = vmul.f32 %v231, 0.03125
  %v235 = vmul.f32 %v233, 0.03125
  %v236 = vsub.f32 %v226, %v234
  %v237 = vsub.f32 %v227, %v235
  %v238 = vlaneseq
  %v239 = vand.u32 %v238, 127
  %vm240 = vcmp.lt.s32.totalorder %v239, 32
  %v241 = vsel %vm240, 1, 0
  %vm242 = vcmp.eq.s32.totalorder %v241, 1
  %v243 = vsel %vm242, %v236, 0.0
  %v244 = vsel %vm242, %v237, 0.0
  %v245 = vmul.f32 %v243, %v243
  %v246 = vmul.f32 %v244, %v244
  %247 = vadd.xlane.f32.xlu0 %v245
  %v248 = vpop.xlane.xlu0 %247
  %249 = vadd.xlane.f32.xlu0 %v246
  %v250 = vpop.xlane.xlu0 %249
  %v251 = vmul.f32 %v248, 0.03125
  %v252 = vmul.f32 %v250, 0.03125
  %v253 = vadd.f32 %v251, 1e-05
  %v254 = vadd.f32 %v252, 1e-05
  %v255 = vrsqrt.pop %v253
  %v256 = vrsqrt.pop %v254
  %v257 = vmul.f32 %v243, %v255
  %v258 = vmul.f32 %v244, %v256
  %v260 = vlaneseq
  %v261 = vshrl.u32 %v260, 7
  %v262 = vsub.s32 0, %v261
  %v263 = vrot.slane %v228, %v262
  %v265 = vmul.f32 %v257, %v263
  %v266 = vmul.f32 %v258, %v263
  %v268 = vlaneseq
  %v269 = vshrl.u32 %v268, 7
  %v270 = vsub.s32 0, %v269
  %v271 = vrot.slane %v229, %v270
  %v273 = vadd.f32 %v265, %v271
  %v274 = vadd.f32 %v266, %v271
  %275 = vst [vmem:[%s7] sm:$0xff] %v273
  %276 = vst [vmem:[%s7 + $0x8] sm:$0xff] %v274
  // Predicated region
  $region30: #{decoder_block.11} parent=0 // pred_check
    _
  $region31: #{decoder_block.11} parent=0 // pred_check_branch
    %278 = sbr.rel (0) target = $region33
  $region32: #{decoder_block.11} parent=0 // pred_region
    _
  $region33: #{decoder_block.11} parent=0 // pred_fallthru
    _
  // Predicated region
  $region34: #{decoder_block.11} parent=0 // pred_check
    _
  $region35: #{decoder_block.11} parent=0 // pred_check_branch
    %280 = sbr.rel (0) target = $region37
  $region36: #{decoder_block.11} parent=0 // pred_region
    _
  $region37: #{decoder_block.11} parent=0 // pred_fallthru
    _

</llo_original>
